<compile_context>
chip_gen: v7x
topology: tpu7x:2x2x1
jax: 0.10.0
libtpu: 0.0.40
codegen_flags: <defaults>
</compile_context>

<pallas_src>
import jax
import jax.numpy as jnp
from jax import lax
from jax.experimental import pallas as pl
from jax.experimental.pallas import tpu as pltpu

EPS = 1e-5
# Explicit scoped-VMEM budget: tiles are sized to stay far below this, which keeps the
# kernel safe on v7x's 64 MiB physical VMEM as well as v5e/v6e.
VMEM_LIMIT_BYTES = 32 * 1024 * 1024


# ----------------------------------------------------------------------------- kernels

def _colstats_kernel(x_ref, st_ref):
    """Accumulate per-channel [sum; sumsq] of a (rows, C) tile into a (2, C) output."""
    @pl.when(pl.program_id(0) == 0)
    def _():
        st_ref[...] = jnp.zeros_like(st_ref)
    x = x_ref[...]
    st_ref[...] += jnp.concatenate(
        [jnp.sum(x, axis=0, keepdims=True),
         jnp.sum(x * x, axis=0, keepdims=True)], axis=0)


def _bn1_relu_conv1x1_kernel(x_ref, s_ref, b_ref, w_ref, y_ref, st_ref):
    """a = relu(x*scale1 + shift1); y = a @ w1 (bf16 MXU, f32 acc).
    Also accumulates per-channel sum/sumsq of y so BN2 needs no extra pass over y."""
    @pl.when(pl.program_id(0) == 0)
    def _():
        st_ref[...] = jnp.zeros_like(st_ref)
    a = jnp.maximum(x_ref[...] * s_ref[...] + b_ref[...], 0.0)          # f32 VPU (folded BN)
    y = jnp.dot(a.astype(jnp.bfloat16), w_ref[...],                     # bf16 MXU operands
                preferred_element_type=jnp.float32)
    y_ref[...] = y
    st_ref[...] += jnp.concatenate(
        [jnp.sum(y, axis=0, keepdims=True),
         jnp.sum(y * y, axis=0, keepdims=True)], axis=0)


def _bn2_relu_conv3x3_concat_kernel(y_ref, s_ref, b_ref, w_ref, x_ref, o_ref, pad_ref):
    """One image per grid step: a = relu(y*scale2 + shift2); 3x3 conv (padding=1) as one
    im2col matmul with K = 9*Cmid; writes [conv_out, x] into the fused concat output."""
    _, H, W, Cmid = y_ref.shape
    Cout = w_ref.shape[-1]
    Ctot = o_ref.shape[-1]

    a = jnp.maximum(y_ref[0] * s_ref[...].reshape(1, 1, Cmid)
                    + b_ref[...].reshape(1, 1, Cmid), 0.0)               # (H, W, Cmid) f32

    # Zero-padded activation lives in a VMEM scratch (no concatenate-based pad copies).
    # The scratch is re-zeroed each step so the 1-pixel border stays correct even when
    # the batch axis is sharded across TensorCores (v7x megacore).
    pad_ref[...] = jnp.zeros_like(pad_ref)
    pad_ref[1:H + 1, 1:W + 1, :] = a

    # im2col: (H*W, 9*Cmid) patch matrix -> single MXU dot against w2 reshaped to (9*Cmid, Cout)
    patches = [pad_ref[ky:ky + H, kx:kx + W, :]
               for ky in range(3) for kx in range(3)]
    pm = jnp.concatenate(patches, axis=-1).reshape(H * W, 9 * Cmid)
    conv = jnp.dot(pm.astype(jnp.bfloat16), w_ref[...],
                   preferred_element_type=jnp.float32)                   # (H*W, Cout) f32

    # Fused torch.cat([out, x], dim=channel): no extra HBM round trip in the wrapper.
    o_ref[0, :, :, 0:Cout] = conv.reshape(H, W, Cout)
    o_ref[0, :, :, Cout:Ctot] = x_ref[0]


# ----------------------------------------------------------------------------- wrapper

def _pick_row_tile(rows, max_tile=1024):
    """Largest multiple-of-8 tile <= max_tile that divides `rows` and leaves >=2 grid
    steps when possible, so BlockSpec double-buffering has work to overlap."""
    for t in (1024, 512, 256, 128, 64, 32, 16, 8):
        if t <= max_tile and t < rows and rows % t == 0:
            return t
    return rows


def bottleneck_forward(x_nchw, params):
    """Pallas implementation of Bottleneck.forward. x_nchw: (N, Cin, H, W)."""
    g1, b1, w1, g2, b2, w2 = params
    N, Cin, H, W = x_nchw.shape
    Cmid = w1.shape[1]
    Cout = w2.shape[-1]
    Ctot = Cout + Cin
    R = N * H * W
    tr = _pick_row_tile(R)

    cparams_seq = pltpu.CompilerParams(
        dimension_semantics=("arbitrary",), vmem_limit_bytes=VMEM_LIMIT_BYTES)
    cparams_par = pltpu.CompilerParams(
        dimension_semantics=("parallel",), vmem_limit_bytes=VMEM_LIMIT_BYTES)

    # TODO(synk): keep the surrounding network in NHWC to drop these boundary transposes.
    x_nhwc = jnp.transpose(x_nchw, (0, 2, 3, 1)).astype(jnp.float32)     # NCHW -> NHWC
    x2d = x_nhwc.reshape(R, Cin)

    # ---- pass 1: BN1 batch statistics of x (streaming row tiles, accumulator output) ----
    xstats = pl.pallas_call(
        _colstats_kernel,
        out_shape=jax.ShapeDtypeStruct((2, Cin), jnp.float32),
        grid_spec=pltpu.PrefetchScalarGridSpec(
            num_scalar_prefetch=0, grid=(R // tr,),
            in_specs=[pl.BlockSpec((tr, Cin), lambda i: (i, 0))],
            out_specs=pl.BlockSpec((2, Cin), lambda i: (0, 0))),
        compiler_params=cparams_seq,
    )(x2d)

    mean1 = xstats[0] / R
    var1 = jnp.maximum(xstats[1] / R - mean1 * mean1, 0.0)   # biased variance (PyTorch BN)
    scale1 = g1 * lax.rsqrt(var1 + EPS)                      # BN folded into one FMA
    shift1 = b1 - mean1 * scale1

    # ---- pass 2: BN1 + ReLU + 1x1 conv, with fused BN2 statistics of y ----
    y2d, ystats = pl.pallas_call(
        _bn1_relu_conv1x1_kernel,
        out_shape=(jax.ShapeDtypeStruct((R, Cmid), jnp.float32),
                   jax.ShapeDtypeStruct((2, Cmid), jnp.float32)),
        grid_spec=pltpu.PrefetchScalarGridSpec(
            num_scalar_prefetch=0, grid=(R // tr,),
            in_specs=[pl.BlockSpec((tr, Cin), lambda i: (i, 0)),
                      pl.BlockSpec((1, Cin), lambda i: (0, 0)),
                      pl.BlockSpec((1, Cin), lambda i: (0, 0)),
                      pl.BlockSpec((Cin, Cmid), lambda i: (0, 0))],
            out_specs=[pl.BlockSpec((tr, Cmid), lambda i: (i, 0)),
                       pl.BlockSpec((2, Cmid), lambda i: (0, 0))]),
        compiler_params=cparams_seq,
    )(x2d, scale1.reshape(1, Cin), shift1.reshape(1, Cin), w1.astype(jnp.bfloat16))

    mean2 = ystats[0] / R
    var2 = jnp.maximum(ystats[1] / R - mean2 * mean2, 0.0)
    scale2 = g2 * lax.rsqrt(var2 + EPS)
    shift2 = b2 - mean2 * scale2

    # ---- pass 3: BN2 + ReLU + 3x3 conv (single im2col dot) + fused channel concat ----
    y4d = y2d.reshape(N, H, W, Cmid)
    w2f = w2.reshape(9 * Cmid, Cout).astype(jnp.bfloat16)

    out_nhwc = pl.pallas_call(
        _bn2_relu_conv3x3_concat_kernel,
        out_shape=jax.ShapeDtypeStruct((N, H, W, Ctot), jnp.float32),
        grid_spec=pltpu.PrefetchScalarGridSpec(
            num_scalar_prefetch=0, grid=(N,),
            in_specs=[pl.BlockSpec((1, H, W, Cmid), lambda n: (n, 0, 0, 0)),
                      pl.BlockSpec((1, Cmid), lambda n: (0, 0)),
                      pl.BlockSpec((1, Cmid), lambda n: (0, 0)),
                      pl.BlockSpec((9 * Cmid, Cout), lambda n: (0, 0)),
                      pl.BlockSpec((1, H, W, Cin), lambda n: (n, 0, 0, 0))],
            out_specs=pl.BlockSpec((1, H, W, Ctot), lambda n: (n, 0, 0, 0)),
            scratch_shapes=[pltpu.VMEM((H + 2, W + 2, Cmid), jnp.float32)]),
        compiler_params=cparams_par,
    )(y4d, scale2.reshape(1, Cmid), shift2.reshape(1, Cmid), w2f, x_nhwc)
    # TODO(synk): for very large H*W, tile spatial rows with an explicit 1-row halo instead
    # of one whole image per grid step.

    return jnp.transpose(out_nhwc, (0, 3, 1, 2))             # back to NCHW


# ----------------------------------------------------------------------------- reference

def bottleneck_reference(x_nchw, params, mxu_dtype=None):
    """Pure-JAX reference. mxu_dtype=None -> pure f32 (PyTorch semantics);
    mxu_dtype=bfloat16 -> models the kernel's bf16 MXU operands (f32 accumulation)."""
    g1, b1, w1, g2, b2, w2 = params
    cast = (lambda t: t.astype(mxu_dtype)) if mxu_dtype is not None else (lambda t: t)
    x = jnp.transpose(x_nchw, (0, 2, 3, 1)).astype(jnp.float32)

    def bn_relu(t, g, b):
        m = jnp.mean(t, axis=(0, 1, 2), keepdims=True)
        v = jnp.mean((t - m) ** 2, axis=(0, 1, 2), keepdims=True)
        return jnp.maximum((t - m) * lax.rsqrt(v + EPS) * g + b, 0.0)

    a1 = bn_relu(x, g1, b1)
    y = lax.conv_general_dilated(cast(a1), cast(w1.reshape(1, 1, *w1.shape)),
                                 window_strides=(1, 1), padding='VALID',
                                 dimension_numbers=('NHWC', 'HWIO', 'NHWC'),
                                 preferred_element_type=jnp.float32)
    a2 = bn_relu(y, g2, b2)
    out = lax.conv_general_dilated(cast(a2), cast(w2), window_strides=(1, 1),
                                   padding=((1, 1), (1, 1)),
                                   dimension_numbers=('NHWC', 'HWIO', 'NHWC'),
                                   preferred_element_type=jnp.float32)
    cat = jnp.concatenate([out, x], axis=-1)
    return jnp.transpose(cat, (0, 3, 1, 2))


def init_params(key, in_planes, growth_rate):
    cmid = 4 * growth_rate
    ks = jax.random.split(key, 6)
    g1 = jax.random.normal(ks[0], (in_planes,), jnp.float32) * 0.1 + 1.0
    b1 = jax.random.normal(ks[1], (in_planes,), jnp.float32) * 0.1
    w1 = jax.random.normal(ks[2], (in_planes, cmid), jnp.float32) * 0.1          # 1x1 conv (Cin, Cmid)
    g2 = jax.random.normal(ks[3], (cmid,), jnp.float32) * 0.1 + 1.0
    b2 = jax.random.normal(ks[4], (cmid,), jnp.float32) * 0.1
    w2 = jax.random.normal(ks[5], (3, 3, cmid, growth_rate), jnp.float32) * 0.1  # 3x3 conv HWIO
    return (g1, b1, w1, g2, b2, w2)


if __name__ == "__main__":
    key = jax.random.PRNGKey(0)
    kx, kp = jax.random.split(key)

    N, in_planes, growth_rate, H, W = 2, 4, 8, 16, 16
    x = jax.random.normal(kx, (N, in_planes, H, W), jnp.float32)
    params = init_params(kp, in_planes, growth_rate)

    fwd = jax.jit(bottleneck_forward)
    out = jax.block_until_ready(fwd(x, params))

    ref_bf16 = jax.block_until_ready(bottleneck_reference(x, params, mxu_dtype=jnp.bfloat16))
    ref_f32 = jax.block_until_ready(bottleneck_reference(x, params, mxu_dtype=None))

    assert out.shape == (N, growth_rate + in_planes, H, W), out.shape
    # Tight check vs a reference that models the kernel's bf16 MXU operands.
    assert jnp.allclose(out, ref_bf16, atol=1e-2, rtol=1e-2), \
        float(jnp.max(jnp.abs(out - ref_bf16)))
    # Loose check vs the pure-f32 (PyTorch-equivalent) reference.
    assert jnp.allclose(out, ref_f32, atol=1e-1, rtol=1e-1), \
        float(jnp.max(jnp.abs(out - ref_f32)))
    print("KERNEL_OK")
</pallas_src>

<mosaic_0001>
module attributes {stable_mosaic.version = 11 : i64} {
  func.func @_colstats_kernel(%arg0: i32, %arg1: memref<256x4xf32, #tpu.memory_space<vmem>>, %arg2: memref<2x4xf32, #tpu.memory_space<vmem>>) attributes {dimension_semantics = [#tpu.dimension_semantics<arbitrary>], iteration_bounds = array<i64: 2>, scalar_prefetch = 0 : i64, scratch_operands = 0 : i64, tpu.core_type = #tpu.core_type<tc>, window_params = [{transform_indices = @transform_0, window_bounds = array<i64: 256, 4>}, {pipeline_mode = #tpu.pipeline_mode<synchronous>, transform_indices = @transform_1, window_bounds = array<i64: 2, 4>}]} {
    %c0_i32 = arith.constant 0 : i32
    %0 = arith.cmpi eq, %arg0, %c0_i32 : i32
    %1 = arith.extui %0 : i1 to i32
    %c0_i32_0 = arith.constant 0 : i32
    %2 = arith.cmpi ne, %1, %c0_i32_0 : i32
    scf.if %2 {
      %cst_7 = arith.constant 0.000000e+00 : f32
      %13 = vector.broadcast %cst_7 : f32 to vector<2x4xf32>
      %c0_8 = arith.constant 0 : index
      %c0_9 = arith.constant 0 : index
      %14 = vector.load %arg2[%c0_8, %c0_9] : memref<2x4xf32, #tpu.memory_space<vmem>>, vector<2x4xf32>
      tpu.vector_store %arg2[%c0_8, %c0_9], %13 {strides = array<i32>} : memref<2x4xf32, #tpu.memory_space<vmem>>, vector<2x4xf32>,
    } else {
    }
    %c0 = arith.constant 0 : index
    %c0_1 = arith.constant 0 : index
    %3 = vector.load %arg1[%c0, %c0_1] : memref<256x4xf32, #tpu.memory_space<vmem>>, vector<256x4xf32>
    %c0_2 = arith.constant 0 : index
    %c0_3 = arith.constant 0 : index
    %4 = vector.load %arg2[%c0_2, %c0_3] : memref<2x4xf32, #tpu.memory_space<vmem>>, vector<2x4xf32>
    %cst = arith.constant dense<0.000000e+00> : vector<4xf32>
    %5 = vector.multi_reduction <add>, %3, %cst [0] : vector<256x4xf32> to vector<4xf32>
    %6 = vector.shape_cast %5 : vector<4xf32> to vector<1x4xf32>
    %7 = arith.mulf %3, %3 : vector<256x4xf32>
    %cst_4 = arith.constant dense<0.000000e+00> : vector<4xf32>
    %8 = vector.multi_reduction <add>, %7, %cst_4 [0] : vector<256x4xf32> to vector<4xf32>
    %9 = vector.shape_cast %8 : vector<4xf32> to vector<1x4xf32>
    %10 = tpu.concatenate %6, %9 in 0 : vector<1x4xf32>, vector<1x4xf32> -> vector<2x4xf32>
    %11 = arith.addf %4, %10 : vector<2x4xf32>
    %c0_5 = arith.constant 0 : index
    %c0_6 = arith.constant 0 : index
    %12 = vector.load %arg2[%c0_5, %c0_6] : memref<2x4xf32, #tpu.memory_space<vmem>>, vector<2x4xf32>
    tpu.vector_store %arg2[%c0_5, %c0_6], %11 {strides = array<i32>} : memref<2x4xf32, #tpu.memory_space<vmem>>, vector<2x4xf32>,
    return
  }
  func.func @transform_0(%arg0: i32) -> (i32, i32) {
    %c0_i32 = arith.constant 0 : i32
    %c0_i32_0 = arith.constant 0 : i32
    return %arg0, %c0_i32 : i32, i32
  }
  func.func @transform_1(%arg0: i32) -> (i32, i32) {
    %c0_i32 = arith.constant 0 : i32
    %c0_i32_0 = arith.constant 0 : i32
    %c0_i32_1 = arith.constant 0 : i32
    return %c0_i32, %c0_i32_0 : i32, i32
  }
}

module attributes {stable_mosaic.version = 11 : i64} {
  func.func @_bn1_relu_conv1x1_kernel(%arg0: i32, %arg1: memref<256x4xf32, #tpu.memory_space<vmem>>, %arg2: memref<1x4xf32, #tpu.memory_space<vmem>>, %arg3: memref<1x4xf32, #tpu.memory_space<vmem>>, %arg4: memref<4x32xbf16, #tpu.memory_space<vmem>>, %arg5: memref<256x32xf32, #tpu.memory_space<vmem>>, %arg6: memref<2x32xf32, #tpu.memory_space<vmem>>) attributes {dimension_semantics = [#tpu.dimension_semantics<arbitrary>], iteration_bounds = array<i64: 2>, scalar_prefetch = 0 : i64, scratch_operands = 0 : i64, tpu.core_type = #tpu.core_type<tc>, window_params = [{transform_indices = @transform_0, window_bounds = array<i64: 256, 4>}, {pipeline_mode = #tpu.pipeline_mode<synchronous>, transform_indices = @transform_1, window_bounds = array<i64: 1, 4>}, {pipeline_mode = #tpu.pipeline_mode<synchronous>, transform_indices = @transform_2, window_bounds = array<i64: 1, 4>}, {pipeline_mode = #tpu.pipeline_mode<synchronous>, transform_indices = @transform_3, window_bounds = array<i64: 4, 32>}, {transform_indices = @transform_4, window_bounds = array<i64: 256, 32>}, {pipeline_mode = #tpu.pipeline_mode<synchronous>, transform_indices = @transform_5, window_bounds = array<i64: 2, 32>}]} {
    %c0_i32 = arith.constant 0 : i32
    %0 = arith.cmpi eq, %arg0, %c0_i32 : i32
    %1 = arith.extui %0 : i1 to i32
    %c0_i32_0 = arith.constant 0 : i32
    %2 = arith.cmpi ne, %1, %c0_i32_0 : i32
    scf.if %2 {
      %cst_17 = arith.constant 0.000000e+00 : f32
      %25 = vector.broadcast %cst_17 : f32 to vector<2x32xf32>
      %c0_18 = arith.constant 0 : index
      %c0_19 = arith.constant 0 : index
      %26 = vector.load %arg6[%c0_18, %c0_19] : memref<2x32xf32, #tpu.memory_space<vmem>>, vector<2x32xf32>
      tpu.vector_store %arg6[%c0_18, %c0_19], %25 {strides = array<i32>} : memref<2x32xf32, #tpu.memory_space<vmem>>, vector<2x32xf32>,
    } else {
    }
    %c0 = arith.constant 0 : index
    %c0_1 = arith.constant 0 : index
    %3 = vector.load %arg1[%c0, %c0_1] : memref<256x4xf32, #tpu.memory_space<vmem>>, vector<256x4xf32>
    %c0_2 = arith.constant 0 : index
    %c0_3 = arith.constant 0 : index
    %4 = vector.load %arg2[%c0_2, %c0_3] : memref<1x4xf32, #tpu.memory_space<vmem>>, vector<1x4xf32>
    %5 = vector.broadcast %4 : vector<1x4xf32> to vector<256x4xf32>
    %6 = arith.mulf %3, %5 : vector<256x4xf32>
    %c0_4 = arith.constant 0 : index
    %c0_5 = arith.constant 0 : index
    %7 = vector.load %arg3[%c0_4, %c0_5] : memref<1x4xf32, #tpu.memory_space<vmem>>, vector<1x4xf32>
    %8 = vector.broadcast %7 : vector<1x4xf32> to vector<256x4xf32>
    %9 = arith.addf %6, %8 : vector<256x4xf32>
    %cst = arith.constant 0.000000e+00 : f32
    %10 = vector.broadcast %cst : f32 to vector<256x4xf32>
    %11 = arith.maximumf %9, %10 : vector<256x4xf32>
    %12 = arith.truncf %11 : vector<256x4xf32> to vector<256x4xbf16>
    %c0_6 = arith.constant 0 : index
    %c0_7 = arith.constant 0 : index
    %13 = vector.load %arg4[%c0_6, %c0_7] : memref<4x32xbf16, #tpu.memory_space<vmem>>, vector<4x32xbf16>
    %cst_8 = arith.constant dense<0.000000e+00> : vector<256x32xf32>
    %14 = tpu.matmul %12, %13, %cst_8 {dimension_numbers = #tpu.dot_dimension_numbers<[1], [0], [0], [1], [0, 0, 1, 1], [], []>} : vector<256x4xbf16>, vector<4x32xbf16>, vector<256x32xf32> -> vector<256x32xf32>
    %c0_9 = arith.constant 0 : index
    %c0_10 = arith.constant 0 : index
    %15 = vector.load %arg5[%c0_9, %c0_10] : memref<256x32xf32, #tpu.memory_space<vmem>>, vector<256x32xf32>
    tpu.vector_store %arg5[%c0_9, %c0_10], %14 {strides = array<i32>} : memref<256x32xf32, #tpu.memory_space<vmem>>, vector<256x32xf32>,
    %c0_11 = arith.constant 0 : index
    %c0_12 = arith.constant 0 : index
    %16 = vector.load %arg6[%c0_11, %c0_12] : memref<2x32xf32, #tpu.memory_space<vmem>>, vector<2x32xf32>
    %cst_13 = arith.constant dense<0.000000e+00> : vector<32xf32>
    %17 = vector.multi_reduction <add>, %14, %cst_13 [0] : vector<256x32xf32> to vector<32xf32>
    %18 = vector.shape_cast %17 : vector<32xf32> to vector<1x32xf32>
    %19 = arith.mulf %14, %14 : vector<256x32xf32>
    %cst_14 = arith.constant dense<0.000000e+00> : vector<32xf32>
    %20 = vector.multi_reduction <add>, %19, %cst_14 [0] : vector<256x32xf32> to vector<32xf32>
    %21 = vector.shape_cast %20 : vector<32xf32> to vector<1x32xf32>
    %22 = tpu.concatenate %18, %21 in 0 : vector<1x32xf32>, vector<1x32xf32> -> vector<2x32xf32>
    %23 = arith.addf %16, %22 : vector<2x32xf32>
    %c0_15 = arith.constant 0 : index
    %c0_16 = arith.constant 0 : index
    %24 = vector.load %arg6[%c0_15, %c0_16] : memref<2x32xf32, #tpu.memory_space<vmem>>, vector<2x32xf32>
    tpu.vector_store %arg6[%c0_15, %c0_16], %23 {strides = array<i32>} : memref<2x32xf32, #tpu.memory_space<vmem>>, vector<2x32xf32>,
    return
  }
  func.func @transform_0(%arg0: i32) -> (i32, i32) {
    %c0_i32 = arith.constant 0 : i32
    %c0_i32_0 = arith.constant 0 : i32
    return %arg0, %c0_i32 : i32, i32
  }
  func.func @transform_1(%arg0: i32) -> (i32, i32) {
    %c0_i32 = arith.constant 0 : i32
    %c0_i32_0 = arith.constant 0 : i32
    %c0_i32_1 = arith.constant 0 : i32
    return %c0_i32, %c0_i32_0 : i32, i32
  }
  func.func @transform_2(%arg0: i32) -> (i32, i32) {
    %c0_i32 = arith.constant 0 : i32
    %c0_i32_0 = arith.constant 0 : i32
    %c0_i32_1 = arith.constant 0 : i32
    return %c0_i32, %c0_i32_0 : i32, i32
  }
  func.func @transform_3(%arg0: i32) -> (i32, i32) {
    %c0_i32 = arith.constant 0 : i32
    %c0_i32_0 = arith.constant 0 : i32
    %c0_i32_1 = arith.constant 0 : i32
    return %c0_i32, %c0_i32_0 : i32, i32
  }
  func.func @transform_4(%arg0: i32) -> (i32, i32) {
    %c0_i32 = arith.constant 0 : i32
    %c0_i32_0 = arith.constant 0 : i32
    return %arg0, %c0_i32 : i32, i32
  }
  func.func @transform_5(%arg0: i32) -> (i32, i32) {
    %c0_i32 = arith.constant 0 : i32
    %c0_i32_0 = arith.constant 0 : i32
    %c0_i32_1 = arith.constant 0 : i32
    return %c0_i32, %c0_i32_0 : i32, i32
  }
}

module attributes {stable_mosaic.version = 11 : i64} {
  func.func @_bn2_relu_conv3x3_concat_kernel(%arg0: i32, %arg1: memref<1x16x16x32xf32, #tpu.memory_space<vmem>>, %arg2: memref<1x32xf32, #tpu.memory_space<vmem>>, %arg3: memref<1x32xf32, #tpu.memory_space<vmem>>, %arg4: memref<288x8xbf16, #tpu.memory_space<vmem>>, %arg5: memref<1x16x16x4xf32, #tpu.memory_space<vmem>>, %arg6: memref<1x16x16x12xf32, #tpu.memory_space<vmem>>, %arg7: memref<18x18x32xf32, #tpu.memory_space<vmem>>) attributes {dimension_semantics = [#tpu.dimension_semantics<parallel>], iteration_bounds = array<i64: 2>, scalar_prefetch = 0 : i64, scratch_operands = 1 : i64, tpu.core_type = #tpu.core_type<tc>, window_params = [{transform_indices = @transform_0, window_bounds = array<i64: 1, 16, 16, 32>}, {pipeline_mode = #tpu.pipeline_mode<synchronous>, transform_indices = @transform_1, window_bounds = array<i64: 1, 32>}, {pipeline_mode = #tpu.pipeline_mode<synchronous>, transform_indices = @transform_2, window_bounds = array<i64: 1, 32>}, {pipeline_mode = #tpu.pipeline_mode<synchronous>, transform_indices = @transform_3, window_bounds = array<i64: 288, 8>}, {transform_indices = @transform_4, window_bounds = array<i64: 1, 16, 16, 4>}, {transform_indices = @transform_5, window_bounds = array<i64: 1, 16, 16, 12>}]} {
    %c0 = arith.constant 0 : index
    %c0_0 = arith.constant 0 : index
    %c0_1 = arith.constant 0 : index
    %c0_2 = arith.constant 0 : index
    %0 = vector.load %arg1[%c0, %c0_0, %c0_1, %c0_2] : memref<1x16x16x32xf32, #tpu.memory_space<vmem>>, vector<1x16x16x32xf32>
    %1 = vector.shape_cast %0 : vector<1x16x16x32xf32> to vector<16x16x32xf32>
    %c0_3 = arith.constant 0 : index
    %c0_4 = arith.constant 0 : index
    %2 = vector.load %arg2[%c0_3, %c0_4] : memref<1x32xf32, #tpu.memory_space<vmem>>, vector<1x32xf32>
    %3 = vector.shape_cast %2 : vector<1x32xf32> to vector<1x1x32xf32>
    %4 = vector.broadcast %3 : vector<1x1x32xf32> to vector<16x16x32xf32>
    %5 = arith.mulf %1, %4 : vector<16x16x32xf32>
    %c0_5 = arith.constant 0 : index
    %c0_6 = arith.constant 0 : index
    %6 = vector.load %arg3[%c0_5, %c0_6] : memref<1x32xf32, #tpu.memory_space<vmem>>, vector<1x32xf32>
    %7 = vector.shape_cast %6 : vector<1x32xf32> to vector<1x1x32xf32>
    %8 = vector.broadcast %7 : vector<1x1x32xf32> to vector<16x16x32xf32>
    %9 = arith.addf %5, %8 : vector<16x16x32xf32>
    %cst = arith.constant 0.000000e+00 : f32
    %10 = vector.broadcast %cst : f32 to vector<16x16x32xf32>
    %11 = arith.maximumf %9, %10 : vector<16x16x32xf32>
    %cst_7 = arith.constant 0.000000e+00 : f32
    %12 = vector.broadcast %cst_7 : f32 to vector<18x18x32xf32>
    %c0_8 = arith.constant 0 : index
    %c0_9 = arith.constant 0 : index
    %c0_10 = arith.constant 0 : index
    %13 = vector.load %arg7[%c0_8, %c0_9, %c0_10] : memref<18x18x32xf32, #tpu.memory_space<vmem>>, vector<18x18x32xf32>
    tpu.vector_store %arg7[%c0_8, %c0_9, %c0_10], %12 {strides = array<i32>} : memref<18x18x32xf32, #tpu.memory_space<vmem>>, vector<18x18x32xf32>,
    %c1 = arith.constant 1 : index
    %c1_11 = arith.constant 1 : index
    %c0_12 = arith.constant 0 : index
    %14 = vector.load %arg7[%c1, %c1_11, %c0_12] : memref<18x18x32xf32, #tpu.memory_space<vmem>>, vector<16x16x32xf32>
    tpu.vector_store %arg7[%c1, %c1_11, %c0_12], %11 {strides = array<i32>} : memref<18x18x32xf32, #tpu.memory_space<vmem>>, vector<16x16x32xf32>,
    %c0_13 = arith.constant 0 : index
    %c0_14 = arith.constant 0 : index
    %c0_15 = arith.constant 0 : index
    %15 = vector.load %arg7[%c0_13, %c0_14, %c0_15] : memref<18x18x32xf32, #tpu.memory_space<vmem>>, vector<16x16x32xf32>
    %c0_16 = arith.constant 0 : index
    %c1_17 = arith.constant 1 : index
    %c0_18 = arith.constant 0 : index
    %16 = vector.load %arg7[%c0_16, %c1_17, %c0_18] : memref<18x18x32xf32, #tpu.memory_space<vmem>>, vector<16x16x32xf32>
    %c0_19 = arith.constant 0 : index
    %c2 = arith.constant 2 : index
    %c0_20 = arith.constant 0 : index
    %17 = vector.load %arg7[%c0_19, %c2, %c0_20] : memref<18x18x32xf32, #tpu.memory_space<vmem>>, vector<16x16x32xf32>
    %c1_21 = arith.constant 1 : index
    %c0_22 = arith.constant 0 : index
    %c0_23 = arith.constant 0 : index
    %18 = vector.load %arg7[%c1_21, %c0_22, %c0_23] : memref<18x18x32xf32, #tpu.memory_space<vmem>>, vector<16x16x32xf32>
    %c1_24 = arith.constant 1 : index
    %c1_25 = arith.constant 1 : index
    %c0_26 = arith.constant 0 : index
    %19 = vector.load %arg7[%c1_24, %c1_25, %c0_26] : memref<18x18x32xf32, #tpu.memory_space<vmem>>, vector<16x16x32xf32>
    %c1_27 = arith.constant 1 : index
    %c2_28 = arith.constant 2 : index
    %c0_29 = arith.constant 0 : index
    %20 = vector.load %arg7[%c1_27, %c2_28, %c0_29] : memref<18x18x32xf32, #tpu.memory_space<vmem>>, vector<16x16x32xf32>
    %c2_30 = arith.constant 2 : index
    %c0_31 = arith.constant 0 : index
    %c0_32 = arith.constant 0 : index
    %21 = vector.load %arg7[%c2_30, %c0_31, %c0_32] : memref<18x18x32xf32, #tpu.memory_space<vmem>>, vector<16x16x32xf32>
    %c2_33 = arith.constant 2 : index
    %c1_34 = arith.constant 1 : index
    %c0_35 = arith.constant 0 : index
    %22 = vector.load %arg7[%c2_33, %c1_34, %c0_35] : memref<18x18x32xf32, #tpu.memory_space<vmem>>, vector<16x16x32xf32>
    %c2_36 = arith.constant 2 : index
    %c2_37 = arith.constant 2 : index
    %c0_38 = arith.constant 0 : index
    %23 = vector.load %arg7[%c2_36, %c2_37, %c0_38] : memref<18x18x32xf32, #tpu.memory_space<vmem>>, vector<16x16x32xf32>
    %24 = tpu.concatenate %15, %16, %17, %18, %19, %20, %21, %22, %23 in 2 : vector<16x16x32xf32>, vector<16x16x32xf32>, vector<16x16x32xf32>, vector<16x16x32xf32>, vector<16x16x32xf32>, vector<16x16x32xf32>, vector<16x16x32xf32>, vector<16x16x32xf32>, vector<16x16x32xf32> -> vector<16x16x288xf32>
    %25 = vector.shape_cast %24 : vector<16x16x288xf32> to vector<256x288xf32>
    %26 = arith.truncf %25 : vector<256x288xf32> to vector<256x288xbf16>
    %c0_39 = arith.constant 0 : index
    %c0_40 = arith.constant 0 : index
    %27 = vector.load %arg4[%c0_39, %c0_40] : memref<288x8xbf16, #tpu.memory_space<vmem>>, vector<288x8xbf16>
    %cst_41 = arith.constant dense<0.000000e+00> : vector<256x8xf32>
    %28 = tpu.matmul %26, %27, %cst_41 {dimension_numbers = #tpu.dot_dimension_numbers<[1], [0], [0], [1], [0, 0, 1, 1], [], []>} : vector<256x288xbf16>, vector<288x8xbf16>, vector<256x8xf32> -> vector<256x8xf32>
    %29 = vector.shape_cast %28 : vector<256x8xf32> to vector<16x16x8xf32>
    %c0_42 = arith.constant 0 : index
    %c0_43 = arith.constant 0 : index
    %c0_44 = arith.constant 0 : index
    %c0_45 = arith.constant 0 : index
    %30 = vector.load %arg6[%c0_42, %c0_43, %c0_44, %c0_45] : memref<1x16x16x12xf32, #tpu.memory_space<vmem>>, vector<1x16x16x8xf32>
    %31 = vector.shape_cast %30 : vector<1x16x16x8xf32> to vector<16x16x8xf32>
    %32 = vector.shape_cast %29 : vector<16x16x8xf32> to vector<1x16x16x8xf32>
    tpu.vector_store %arg6[%c0_42, %c0_43, %c0_44, %c0_45], %32 {strides = array<i32>} : memref<1x16x16x12xf32, #tpu.memory_space<vmem>>, vector<1x16x16x8xf32>,
    %c0_46 = arith.constant 0 : index
    %c0_47 = arith.constant 0 : index
    %c0_48 = arith.constant 0 : index
    %c0_49 = arith.constant 0 : index
    %33 = vector.load %arg5[%c0_46, %c0_47, %c0_48, %c0_49] : memref<1x16x16x4xf32, #tpu.memory_space<vmem>>, vector<1x16x16x4xf32>
    %34 = vector.shape_cast %33 : vector<1x16x16x4xf32> to vector<16x16x4xf32>
    %c0_50 = arith.constant 0 : index
    %c0_51 = arith.constant 0 : index
    %c0_52 = arith.constant 0 : index
    %c8 = arith.constant 8 : index
    %35 = vector.load %arg6[%c0_50, %c0_51, %c0_52, %c8] : memref<1x16x16x12xf32, #tpu.memory_space<vmem>>, vector<1x16x16x4xf32>
    %36 = vector.shape_cast %35 : vector<1x16x16x4xf32> to vector<16x16x4xf32>
    %37 = vector.shape_cast %34 : vector<16x16x4xf32> to vector<1x16x16x4xf32>
    tpu.vector_store %arg6[%c0_50, %c0_51, %c0_52, %c8], %37 {strides = array<i32>} : memref<1x16x16x12xf32, #tpu.memory_space<vmem>>, vector<1x16x16x4xf32>,
    return
  }
  func.func @transform_0(%arg0: i32) -> (i32, i32, i32, i32) {
    %c0_i32 = arith.constant 0 : i32
    %c0_i32_0 = arith.constant 0 : i32
    %c0_i32_1 = arith.constant 0 : i32
    %c0_i32_2 = arith.constant 0 : i32
    return %arg0, %c0_i32, %c0_i32_0, %c0_i32_1 : i32, i32, i32, i32
  }
  func.func @transform_1(%arg0: i32) -> (i32, i32) {
    %c0_i32 = arith.constant 0 : i32
    %c0_i32_0 = arith.constant 0 : i32
    %c0_i32_1 = arith.constant 0 : i32
    return %c0_i32, %c0_i32_0 : i32, i32
  }
  func.func @transform_2(%arg0: i32) -> (i32, i32) {
    %c0_i32 = arith.constant 0 : i32
    %c0_i32_0 = arith.constant 0 : i32
    %c0_i32_1 = arith.constant 0 : i32
    return %c0_i32, %c0_i32_0 : i32, i32
  }
  func.func @transform_3(%arg0: i32) -> (i32, i32) {
    %c0_i32 = arith.constant 0 : i32
    %c0_i32_0 = arith.constant 0 : i32
    %c0_i32_1 = arith.constant 0 : i32
    return %c0_i32, %c0_i32_0 : i32, i32
  }
  func.func @transform_4(%arg0: i32) -> (i32, i32, i32, i32) {
    %c0_i32 = arith.constant 0 : i32
    %c0_i32_0 = arith.constant 0 : i32
    %c0_i32_1 = arith.constant 0 : i32
    %c0_i32_2 = arith.constant 0 : i32
    return %arg0, %c0_i32, %c0_i32_0, %c0_i32_1 : i32, i32, i32, i32
  }
  func.func @transform_5(%arg0: i32) -> (i32, i32, i32, i32) {
    %c0_i32 = arith.constant 0 : i32
    %c0_i32_0 = arith.constant 0 : i32
    %c0_i32_1 = arith.constant 0 : i32
    %c0_i32_2 = arith.constant 0 : i32
    return %arg0, %c0_i32, %c0_i32_0, %c0_i32_1 : i32, i32, i32, i32
  }
}

</mosaic_0001>

<llo_original>
// kernel: bottleneck_forward.3
$region0: #{bottleneck_forward.3}
  #allocation0 [shape = 'u32[]', space=smem, size = 0x4, offset = 0x4, fixed_abs, tag = 'smem constant byte address 0x4 - core index']
  #allocation1 [shape = 'u32[144,128]{1,0:T(1,128)}', space=vmem, size = 0x12000, scoped, tag = 'internal scratch']
  %s0 = inlined_call_operand.vmem [shape: f32[512,4], index: 0, kind: input, shape index: {}]
  %s1 = inlined_call_operand.vmem [shape: f32[2,4], index: 1, kind: output, shape index: {}]
  %s2 = sld [smem:[#allocation0]]
  $region41: #{bottleneck_forward.3} parent=0
    _
  %s4 = ssub.s32 1, %s2
  %s5 = scalar_select 0, %s4, %s2
  loop: start=0, step=1, limit=4
  $region2: #{bottleneck_forward.3} parent=0 // loop_pre_header
    _
  $region3: #{bottleneck_forward.3} parent=0 // loop_header
    %s7 = sphi 0, %s11
    %p8 = scmp.ge.s32.totalorder %s7, 4
    %s17 = sphi 0, %s19
    %s20 = sphi 0, %s17
    %s21 = sphi 0, %s20
    %s37 = sphi 0, %s21
    %s41 = sphi 0, %s41
    %s43 = sphi 0, %s41
    %s44 = sphi 0, %s43
    %s58 = sphi 0, %s44
  $region4: #{bottleneck_forward.3} parent=0 // loop_header_branch
    %10 = sbr.rel (%p8) target = $region8
  $region5: #{bottleneck_forward.3} parent=0 // loop_body
    %s12 = ssub.s32 %s7, 1
    %s13 = ssub.s32 %s7, 2
    %s14 = sadd.s32 %s7, 1
    %s15 = ssub.s32 %s7, %s14
    %p16 = scmp.eq.s32.totalorder %s15, 0
    %s18 = sadd.s32 %s17, 1
    %s19 = scalar_select %p16, %s17, %s18
    %p22 = pneg %p16
    %p23 = scmp.eq.s32.totalorder %s7, 1
    %p24 = por %p22, %p23
    %p25 = scmp.ne.s32.totalorder %s17, %s20
    %p26 = scmp.eq.s32.totalorder %s7, 0
    %p27 = por %p25, %p26
    %p28 = scmp.ne.s32.totalorder %s17, %s20
    %p29 = scmp.eq.s32.totalorder %s12, 1
    %p30 = por %p28, %p29
    %p31 = scmp.ne.s32.totalorder %s20, %s21
    %p32 = scmp.eq.s32.totalorder %s12, 0
    %p33 = por %p31, %p32
    %p34 = scmp.ne.s32.totalorder %s20, %s21
    %p35 = scmp.eq.s32.totalorder %s13, 1
    %p36 = por %p34, %p35
    %p38 = scmp.ne.s32.totalorder %s21, %s37
    %p39 = scmp.eq.s32.totalorder %s13, 0
    %p40 = por %p38, %p39
    %s42 = sadd.s32 %s41, 1
    %p45 = scmp.eq.s32.totalorder %s7, 1
    %p46 = scmp.ne.s32.totalorder %s41, %s43
    %p47 = scmp.eq.s32.totalorder %s7, 0
    %p48 = por %p46, %p47
    %p49 = scmp.ne.s32.totalorder %s41, %s43
    %p50 = scmp.eq.s32.totalorder %s12, 1
    %p51 = por %p49, %p50
    %p52 = scmp.ne.s32.totalorder %s43, %s44
    %p53 = scmp.eq.s32.totalorder %s12, 0
    %p54 = por %p52, %p53
    %p55 = scmp.ne.s32.totalorder %s43, %s44
    %p56 = scmp.eq.s32.totalorder %s13, 1
    %p57 = por %p55, %p56
    %p59 = scmp.ne.s32.totalorder %s44, %s58
    %p60 = scmp.eq.s32.totalorder %s13, 0
    %p61 = por %p59, %p60
    %p62 = scmp.le.s32.totalorder 1, %s7
    %p63 = scmp.lt.s32.totalorder %s7, 3
    %p64 = pnand %p62, %p63
    %p65 = pneg %p64
    // Predicated region
    $region9: #{bottleneck_forward.3} parent=5 // pred_check
      _
    $region10: #{bottleneck_forward.3} parent=5 // pred_check_branch
      %67 = sbr.rel (%p64) target = $region12
    $region11: #{bottleneck_forward.3} parent=5 // pred_region
      %s68 = ssub.s32 %s7, 1
    $region12: #{bottleneck_forward.3} parent=5 // pred_fallthru
      _
    %p69 = scmp.lt.s32.totalorder %s7, 2
    // Predicated region
    $region13: #{bottleneck_forward.3} parent=5 // pred_check
      %p70 = pneg %p69
    $region14: #{bottleneck_forward.3} parent=5 // pred_check_branch
      %72 = sbr.rel (%p70) target = $region16
    $region15: #{bottleneck_forward.3} parent=5 // pred_region
      // Predicated region
      $region17: #{bottleneck_forward.3} parent=15 // pred_check
        %p73 = pneg %p27
      $region18: #{bottleneck_forward.3} parent=15 // pred_check_branch
        %75 = sbr.rel (%p73) target = $region20
      $region19: #{bottleneck_forward.3} parent=15 // pred_region
        %s76 = smul.u32 32, %s7
        %p77 = scmp.lt.s32.totalorder %s76, 63
        %s78 = scalar_select %p77, %s76, 63
        %s79 = smul.addr %s78, 8
        %s80 = scalar_lea.vmem %s0, %s79
        %s81 = smul.u32 32, %s7
      $region20: #{bottleneck_forward.3} parent=15 // pred_fallthru
        _
    $region16: #{bottleneck_forward.3} parent=5 // pred_fallthru
      _
    %p82 = scmp.le.s32.totalorder 1, %s7
    %p83 = scmp.lt.s32.totalorder %s7, 3
    %p84 = pnand %p82, %p83
    %p85 = pneg %p84
    // Predicated region
    $region21: #{bottleneck_forward.3} parent=5 // pred_check
      _
    $region22: #{bottleneck_forward.3} parent=5 // pred_check_branch
      %87 = sbr.rel (%p84) target = $region24
    $region23: #{bottleneck_forward.3} parent=5 // pred_region
      %s88 = ssub.s32 %s7, 1
      %s89 = smul.u32 32, %s12
      %p90 = scmp.lt.s32.totalorder %s89, 63
      %s91 = scalar_select %p90, %s89, 63
      %s92 = smul.addr %s91, 8
      %s93 = scalar_lea.vmem %s0, %s92
      %p94 = pneg %p33
      %p95 = pneg %p30
      %p96 = pneg %p54
      %p97 = pneg %p51
      %s98 = smul.u32 32, %s12
      %p99 = scmp.lt.s32.totalorder %s98, 63
      %s100 = scalar_select %p99, %s98, 63
      %s101 = smul.addr %s100, 8
      %s102 = scalar_lea.vmem %s0, %s101
      %s103 = smul.u32 32, %s12
      %p104 = scmp.eq.s32.totalorder %s12, 0
      // Predicated region
      $region25: #{bottleneck_forward.3} parent=23 // pred_check
        %p105 = pneg %p104
      $region26: #{bottleneck_forward.3} parent=23 // pred_check_branch
        %107 = sbr.rel (%p105) target = $region28
      $region27: #{bottleneck_forward.3} parent=23 // pred_region
        %vm108 = vcmask 25600
        %109 = vst.msk [vmem:[%s1] sm:$0x3] %vm108, 0.0
      $region28: #{bottleneck_forward.3} parent=23 // pred_fallthru
        _
      %v110 = vld [vmem:[%s102] sm:$0xff]
      %v111 = vld [vmem:[%s102 + $0x8] sm:$0xff]
      %v112 = vld [vmem:[%s102 + $0x10] sm:$0xff]
      %v113 = vld [vmem:[%s102 + $0x18] sm:$0xff]
      %v114 = vld [vmem:[%s102 + $0x20] sm:$0xff]
      %v115 = vld [vmem:[%s102 + $0x28] sm:$0xff]
      %v116 = vld [vmem:[%s102 + $0x30] sm:$0xff]
      %v117 = vld [vmem:[%s102 + $0x38] sm:$0xff]
      %v118 = vld [vmem:[%s102 + $0x40] sm:$0xff]
      %v119 = vld [vmem:[%s102 + $0x48] sm:$0xff]
      %v120 = vld [vmem:[%s102 + $0x50] sm:$0xff]
      %v121 = vld [vmem:[%s102 + $0x58] sm:$0xff]
      %v122 = vld [vmem:[%s102 + $0x60] sm:$0xff]
      %v123 = vld [vmem:[%s102 + $0x68] sm:$0xff]
      %v124 = vld [vmem:[%s102 + $0x70] sm:$0xff]
      %v125 = vld [vmem:[%s102 + $0x78] sm:$0xff]
      %v126 = vld [vmem:[%s102 + $0x80] sm:$0xff]
      %v127 = vld [vmem:[%s102 + $0x88] sm:$0xff]
      %v128 = vld [vmem:[%s102 + $0x90] sm:$0xff]
      %v129 = vld [vmem:[%s102 + $0x98] sm:$0xff]
      %v130 = vld [vmem:[%s102 + $0xa0] sm:$0xff]
      %v131 = vld [vmem:[%s102 + $0xa8] sm:$0xff]
      %v132 = vld [vmem:[%s102 + $0xb0] sm:$0xff]
      %v133 = vld [vmem:[%s102 + $0xb8] sm:$0xff]
      %v134 = vld [vmem:[%s102 + $0xc0] sm:$0xff]
      %v135 = vld [vmem:[%s102 + $0xc8] sm:$0xff]
      %v136 = vld [vmem:[%s102 + $0xd0] sm:$0xff]
      %v137 = vld [vmem:[%s102 + $0xd8] sm:$0xff]
      %v138 = vld [vmem:[%s102 + $0xe0] sm:$0xff]
      %v139 = vld [vmem:[%s102 + $0xe8] sm:$0xff]
      %v140 = vld [vmem:[%s102 + $0xf0] sm:$0xff]
      %v141 = vld [vmem:[%s102 + $0xf8] sm:$0xff]
      %v142 = vld [vmem:[%s1] sm:$0x3]
      %vm143 = vcmask 31744
      %v144 = vsel %vm143, %v110, 0.0
      %v145 = vsel %vm143, %v111, 0.0
      %v146 = vadd.f32 %v144, %v145
      %v147 = vsel %vm143, %v112, 0.0
      %v148 = vadd.f32 %v146, %v147
      %v149 = vsel %vm143, %v113, 0.0
      %v150 = vadd.f32 %v148, %v149
      %v151 = vsel %vm143, %v114, 0.0
      %v152 = vadd.f32 %v150, %v151
      %v153 = vsel %vm143, %v115, 0.0
      %v154 = vadd.f32 %v152, %v153
      %v155 = vsel %vm143, %v116, 0.0
      %v156 = vadd.f32 %v154, %v155
      %v157 = vsel %vm143, %v117, 0.0
      %v158 = vadd.f32 %v156, %v157
      %v159 = vsel %vm143, %v118, 0.0
      %v160 = vadd.f32 %v158, %v159
      %v161 = vsel %vm143, %v119, 0.0
      %v162 = vadd.f32 %v160, %v161
      %v163 = vsel %vm143, %v120, 0.0
      %v164 = vadd.f32 %v162, %v163
      %v165 = vsel %vm143, %v121, 0.0
      %v166 = vadd.f32 %v164, %v165
      %v167 = vsel %vm143, %v122, 0.0
      %v168 = vadd.f32 %v166, %v167
      %v169 = vsel %vm143, %v123, 0.0
      %v170 = vadd.f32 %v168, %v169
      %v171 = vsel %vm143, %v124, 0.0
      %v172 = vadd.f32 %v170, %v171
      %v173 = vsel %vm143, %v125, 0.0
      %v174 = vadd.f32 %v172, %v173
      %v175 = vsel %vm143, %v126, 0.0
      %v176 = vadd.f32 %v174, %v175
      %v177 = vsel %vm143, %v127, 0.0
      %v178 = vadd.f32 %v176, %v177
      %v179 = vsel %vm143, %v128, 0.0
      %v180 = vadd.f32 %v178, %v179
      %v181 = vsel %vm143, %v129, 0.0
      %v182 = vadd.f32 %v180, %v181
      %v183 = vsel %vm143, %v130, 0.0
      %v184 = vadd.f32 %v182, %v183
      %v185 = vsel %vm143, %v131, 0.0
      %v186 = vadd.f32 %v184, %v185
      %v187 = vsel %vm143, %v132, 0.0
      %v188 = vadd.f32 %v186, %v187
      %v189 = vsel %vm143, %v133, 0.0
      %v190 = vadd.f32 %v188, %v189
      %v191 = vsel %vm143, %v134, 0.0
      %v192 = vadd.f32 %v190, %v191
      %v193 = vsel %vm143, %v135, 0.0
      %v194 = vadd.f32 %v192, %v193
      %v195 = vsel %vm143, %v136, 0.0
      %v196 = vadd.f32 %v194, %v195
      %v197 = vsel %vm143, %v137, 0.0
      %v198 = vadd.f32 %v196, %v197
      %v199 = vsel %vm143, %v138, 0.0
      %v200 = vadd.f32 %v198, %v199
      %v201 = vsel %vm143, %v139, 0.0
      %v202 = vadd.f32 %v200, %v201
      %v203 = vsel %vm143, %v140, 0.0
      %v204 = vadd.f32 %v202, %v203
      %v205 = vsel %vm143, %v141, 0.0
      %v206 = vadd.f32 %v204, %v205
      %v207 = vrot.slane %v206, 4
      %v208 = vadd.f32 %v206, %v207
      %v209 = vrot.slane %v208, 2
      %v210 = vadd.f32 %v208, %v209
      %v211 = vrot.slane %v210, 1
      %v212 = vadd.f32 %v210, %v211
      %v213 = vmul.f32 %v110, %v110
      %v214 = vmul.f32 %v111, %v111
      %v215 = vmul.f32 %v112, %v112
      %v216 = vmul.f32 %v113, %v113
      %v217 = vmul.f32 %v114, %v114
      %v218 = vmul.f32 %v115, %v115
      %v219 = vmul.f32 %v116, %v116
      %v220 = vmul.f32 %v117, %v117
      %v221 = vmul.f32 %v118, %v118
      %v222 = vmul.f32 %v119, %v119
      %v223 = vmul.f32 %v120, %v120
      %v224 = vmul.f32 %v121, %v121
      %v225 = vmul.f32 %v122, %v122
      %v226 = vmul.f32 %v123, %v123
      %v227 = vmul.f32 %v124, %v124
      %v228 = vmul.f32 %v125, %v125
      %v229 = vmul.f32 %v126, %v126
      %v230 = vmul.f32 %v127, %v127
      %v231 = vmul.f32 %v128, %v128
      %v232 = vmul.f32 %v129, %v129
      %v233 = vmul.f32 %v130, %v130
      %v234 = vmul.f32 %v131, %v131
      %v235 = vmul.f32 %v132, %v132
      %v236 = vmul.f32 %v133, %v133
      %v237 = vmul.f32 %v134, %v134
      %v238 = vmul.f32 %v135, %v135
      %v239 = vmul.f32 %v136, %v136
      %v240 = vmul.f32 %v137, %v137
      %v241 = vmul.f32 %v138, %v138
      %v242 = vmul.f32 %v139, %v139
      %v243 = vmul.f32 %v140, %v140
      %v244 = vmul.f32 %v141, %v141
      %v245 = vsel %vm143, %v213, 0.0
      %v246 = vsel %vm143, %v214, 0.0
      %v247 = vadd.f32 %v245, %v246
      %v248 = vsel %vm143, %v215, 0.0
      %v249 = vadd.f32 %v247, %v248
      %v250 = vsel %vm143, %v216, 0.0
      %v251 = vadd.f32 %v249, %v250
      %v252 = vsel %vm143, %v217, 0.0
      %v253 = vadd.f32 %v251, %v252
      %v254 = vsel %vm143, %v218, 0.0
      %v255 = vadd.f32 %v253, %v254
      %v256 = vsel %vm143, %v219, 0.0
      %v257 = vadd.f32 %v255, %v256
      %v258 = vsel %vm143, %v220, 0.0
      %v259 = vadd.f32 %v257, %v258
      %v260 = vsel %vm143, %v221, 0.0
      %v261 = vadd.f32 %v259, %v260
      %v262 = vsel %vm143, %v222, 0.0
      %v263 = vadd.f32 %v261, %v262
      %v264 = vsel %vm143, %v223, 0.0
      %v265 = vadd.f32 %v263, %v264
      %v266 = vsel %vm143, %v224, 0.0
      %v267 = vadd.f32 %v265, %v266
      %v268 = vsel %vm143, %v225, 0.0
      %v269 = vadd.f32 %v267, %v268
      %v270 = vsel %vm143, %v226, 0.0
      %v271 = vadd.f32 %v269, %v270
      %v272 = vsel %vm143, %v227, 0.0
      %v273 = vadd.f32 %v271, %v272
      %v274 = vsel %vm143, %v228, 0.0
      %v275 = vadd.f32 %v273, %v274
      %v276 = vsel %vm143, %v229, 0.0
      %v277 = vadd.f32 %v275, %v276
      %v278 = vsel %vm143, %v230, 0.0
      %v279 = vadd.f32 %v277, %v278
      %v280 = vsel %vm143, %v231, 0.0
      %v281 = vadd.f32 %v279, %v280
      %v282 = vsel %vm143, %v232, 0.0
      %v283 = vadd.f32 %v281, %v282
      %v284 = vsel %vm143, %v233, 0.0
      %v285 = vadd.f32 %v283, %v284
      %v286 = vsel %vm143, %v234, 0.0
      %v287 = vadd.f32 %v285, %v286
      %v288 = vsel %vm143, %v235, 0.0
      %v289 = vadd.f32 %v287, %v288
      %v290 = vsel %vm143, %v236, 0.0
      %v291 = vadd.f32 %v289, %v290
      %v292 = vsel %vm143, %v237, 0.0
      %v293 = vadd.f32 %v291, %v292
      %v294 = vsel %vm143, %v238, 0.0
      %v295 = vadd.f32 %v293, %v294
      %v296 = vsel %vm143, %v239, 0.0
      %v297 = vadd.f32 %v295, %v296
      %v298 = vsel %vm143, %v240, 0.0
      %v299 = vadd.f32 %v297, %v298
      %v300 = vsel %vm143, %v241, 0.0
      %v301 = vadd.f32 %v299, %v300
      %v302 = vsel %vm143, %v242, 0.0
      %v303 = vadd.f32 %v301, %v302
      %v304 = vsel %vm143, %v243, 0.0
      %v305 = vadd.f32 %v303, %v304
      %v306 = vsel %vm143, %v244, 0.0
      %v307 = vadd.f32 %v305, %v306
      %v308 = vrot.slane %v307, 4
      %v309 = vadd.f32 %v307, %v308
      %v310 = vrot.slane %v309, 2
      %v311 = vadd.f32 %v309, %v310
      %v312 = vrot.slane %v311, 1
      %v313 = vadd.f32 %v311, %v312
      %vm314 = vcmask 1040384
      %v315 = vsel %vm314, %v212, %v313
      %v316 = vadd.f32 %v142, %v315
      %vm317 = vcmask 25600
      %318 = vst.msk [vmem:[%s1] sm:$0x3] %vm317, %v316
      // Predicated region
      $region29: #{bottleneck_forward.3} parent=23 // pred_check
        %p319 = pneg %p51
      $region30: #{bottleneck_forward.3} parent=23 // pred_check_branch
        %321 = sbr.rel (%p319) target = $region32
      $region31: #{bottleneck_forward.3} parent=23 // pred_region
        _
      $region32: #{bottleneck_forward.3} parent=23 // pred_fallthru
        _
      // Predicated region
      $region33: #{bottleneck_forward.3} parent=23 // pred_check
        %p322 = pneg %p51
      $region34: #{bottleneck_forward.3} parent=23 // pred_check_branch
        %324 = sbr.rel (%p322) target = $region36
      $region35: #{bottleneck_forward.3} parent=23 // pred_region
        _
      $region36: #{bottleneck_forward.3} parent=23 // pred_fallthru
        _
    $region24: #{bottleneck_forward.3} parent=5 // pred_fallthru
      _
    %p325 = scmp.le.s32.totalorder 2, %s7
    // Predicated region
    $region37: #{bottleneck_forward.3} parent=5 // pred_check
      %p326 = pneg %p325
    $region38: #{bottleneck_forward.3} parent=5 // pred_check_branch
      %328 = sbr.rel (%p326) target = $region40
    $region39: #{bottleneck_forward.3} parent=5 // pred_region
      %s329 = ssub.s32 %s7, 2
    $region40: #{bottleneck_forward.3} parent=5 // pred_fallthru
      _
  $region6: #{bottleneck_forward.3} parent=0 // loop_footer
    %s11 = sadd.s32 1, %s7
  $region7: #{bottleneck_forward.3} parent=0 // loop_footer_branch
    %6 = sbr.rel target = $region3
  $region8: #{bottleneck_forward.3} parent=0 // loop_exit
    _

// kernel: bottleneck_forward.4
$region0: #{bottleneck_forward.4}
  #allocation0 [shape = 'u32[]', space=smem, size = 0x4, offset = 0x4, fixed_abs, tag = 'smem constant byte address 0x4 - core index']
  #allocation1 [shape = 'u32[144,128]{1,0:T(1,128)}', space=vmem, size = 0x12000, scoped, tag = 'internal scratch']
  %s0 = inlined_call_operand.vmem [shape: f32[512,4], index: 0, kind: input, shape index: {}]
  %s1 = inlined_call_operand.vmem [shape: f32[1,4], index: 1, kind: input, shape index: {}]
  %s2 = inlined_call_operand.vmem [shape: f32[1,4], index: 2, kind: input, shape index: {}]
  %s3 = inlined_call_operand.vmem [shape: bf16[4,32], index: 3, kind: input, shape index: {}]
  %s4 = inlined_call_operand.vmem [shape: f32[512,32], index: 4, kind: output, shape index: {0}]
  %s5 = inlined_call_operand.vmem [shape: f32[2,32], index: 5, kind: output, shape index: {1}]
  %6 = xla_tuple %s4, %s5
  %s7 = sld [smem:[#allocation0]]
  $region61: #{bottleneck_forward.4} parent=0
    _
  %s9 = ssub.s32 1, %s7
  %s10 = scalar_select 0, %s9, %s7
  loop: start=0, step=1, limit=4
  $region2: #{bottleneck_forward.4} parent=0 // loop_pre_header
    _
  $region3: #{bottleneck_forward.4} parent=0 // loop_header
    %s12 = sphi 0, %s16
    %p13 = scmp.ge.s32.totalorder %s12, 4
    %s22 = sphi 0, %s24
    %s25 = sphi 0, %s22
    %s26 = sphi 0, %s25
    %s42 = sphi 0, %s26
    %s46 = sphi 0, %s46
    %s48 = sphi 0, %s46
    %s49 = sphi 0, %s48
    %s63 = sphi 0, %s49
    %s67 = sphi 0, %s67
    %s69 = sphi 0, %s67
    %s70 = sphi 0, %s69
    %s84 = sphi 0, %s70
    %s88 = sphi 0, %s88
    %s90 = sphi 0, %s88
    %s91 = sphi 0, %s90
    %s105 = sphi 0, %s91
    %s111 = sphi 0, %s113
    %s114 = sphi 0, %s111
    %s115 = sphi 0, %s114
    %s131 = sphi 0, %s115
    %s135 = sphi 0, %s135
    %s137 = sphi 0, %s135
    %s138 = sphi 0, %s137
    %s152 = sphi 0, %s138
  $region4: #{bottleneck_forward.4} parent=0 // loop_header_branch
    %15 = sbr.rel (%p13) target = $region8
  $region5: #{bottleneck_forward.4} parent=0 // loop_body
    %s17 = ssub.s32 %s12, 1
    %s18 = ssub.s32 %s12, 2
    %s19 = sadd.s32 %s12, 1
    %s20 = ssub.s32 %s12, %s19
    %p21 = scmp.eq.s32.totalorder %s20, 0
    %s23 = sadd.s32 %s22, 1
    %s24 = scalar_select %p21, %s22, %s23
    %p27 = pneg %p21
    %p28 = scmp.eq.s32.totalorder %s12, 1
    %p29 = por %p27, %p28
    %p30 = scmp.ne.s32.totalorder %s22, %s25
    %p31 = scmp.eq.s32.totalorder %s12, 0
    %p32 = por %p30, %p31
    %p33 = scmp.ne.s32.totalorder %s22, %s25
    %p34 = scmp.eq.s32.totalorder %s17, 1
    %p35 = por %p33, %p34
    %p36 = scmp.ne.s32.totalorder %s25, %s26
    %p37 = scmp.eq.s32.totalorder %s17, 0
    %p38 = por %p36, %p37
    %p39 = scmp.ne.s32.totalorder %s25, %s26
    %p40 = scmp.eq.s32.totalorder %s18, 1
    %p41 = por %p39, %p40
    %p43 = scmp.ne.s32.totalorder %s26, %s42
    %p44 = scmp.eq.s32.totalorder %s18, 0
    %p45 = por %p43, %p44
    %s47 = sadd.s32 %s46, 1
    %p50 = scmp.eq.s32.totalorder %s12, 1
    %p51 = scmp.ne.s32.totalorder %s46, %s48
    %p52 = scmp.eq.s32.totalorder %s12, 0
    %p53 = por %p51, %p52
    %p54 = scmp.ne.s32.totalorder %s46, %s48
    %p55 = scmp.eq.s32.totalorder %s17, 1
    %p56 = por %p54, %p55
    %p57 = scmp.ne.s32.totalorder %s48, %s49
    %p58 = scmp.eq.s32.totalorder %s17, 0
    %p59 = por %p57, %p58
    %p60 = scmp.ne.s32.totalorder %s48, %s49
    %p61 = scmp.eq.s32.totalorder %s18, 1
    %p62 = por %p60, %p61
    %p64 = scmp.ne.s32.totalorder %s49, %s63
    %p65 = scmp.eq.s32.totalorder %s18, 0
    %p66 = por %p64, %p65
    %s68 = sadd.s32 %s67, 1
    %p71 = scmp.eq.s32.totalorder %s12, 1
    %p72 = scmp.ne.s32.totalorder %s67, %s69
    %p73 = scmp.eq.s32.totalorder %s12, 0
    %p74 = por %p72, %p73
    %p75 = scmp.ne.s32.totalorder %s67, %s69
    %p76 = scmp.eq.s32.totalorder %s17, 1
    %p77 = por %p75, %p76
    %p78 = scmp.ne.s32.totalorder %s69, %s70
    %p79 = scmp.eq.s32.totalorder %s17, 0
    %p80 = por %p78, %p79
    %p81 = scmp.ne.s32.totalorder %s69, %s70
    %p82 = scmp.eq.s32.totalorder %s18, 1
    %p83 = por %p81, %p82
    %p85 = scmp.ne.s32.totalorder %s70, %s84
    %p86 = scmp.eq.s32.totalorder %s18, 0
    %p87 = por %p85, %p86
    %s89 = sadd.s32 %s88, 1
    %p92 = scmp.eq.s32.totalorder %s12, 1
    %p93 = scmp.ne.s32.totalorder %s88, %s90
    %p94 = scmp.eq.s32.totalorder %s12, 0
    %p95 = por %p93, %p94
    %p96 = scmp.ne.s32.totalorder %s88, %s90
    %p97 = scmp.eq.s32.totalorder %s17, 1
    %p98 = por %p96, %p97
    %p99 = scmp.ne.s32.totalorder %s90, %s91
    %p100 = scmp.eq.s32.totalorder %s17, 0
    %p101 = por %p99, %p100
    %p102 = scmp.ne.s32.totalorder %s90, %s91
    %p103 = scmp.eq.s32.totalorder %s18, 1
    %p104 = por %p102, %p103
    %p106 = scmp.ne.s32.totalorder %s91, %s105
    %p107 = scmp.eq.s32.totalorder %s18, 0
    %p108 = por %p106, %p107
    %s109 = ssub.s32 %s12, %s19
    %p110 = scmp.eq.s32.totalorder %s109, 0
    %s112 = sadd.s32 %s111, 1
    %s113 = scalar_select %p110, %s111, %s112
    %p116 = pneg %p110
    %p117 = scmp.eq.s32.totalorder %s12, 1
    %p118 = por %p116, %p117
    %p119 = scmp.ne.s32.totalorder %s111, %s114
    %p120 = scmp.eq.s32.totalorder %s12, 0
    %p121 = por %p119, %p120
    %p122 = scmp.ne.s32.totalorder %s111, %s114
    %p123 = scmp.eq.s32.totalorder %s17, 1
    %p124 = por %p122, %p123
    %p125 = scmp.ne.s32.totalorder %s114, %s115
    %p126 = scmp.eq.s32.totalorder %s17, 0
    %p127 = por %p125, %p126
    %p128 = scmp.ne.s32.totalorder %s114, %s115
    %p129 = scmp.eq.s32.totalorder %s18, 1
    %p130 = por %p128, %p129
    %p132 = scmp.ne.s32.totalorder %s115, %s131
    %p133 = scmp.eq.s32.totalorder %s18, 0
    %p134 = por %p132, %p133
    %s136 = sadd.s32 %s135, 1
    %p139 = scmp.eq.s32.totalorder %s12, 1
    %p140 = scmp.ne.s32.totalorder %s135, %s137
    %p141 = scmp.eq.s32.totalorder %s12, 0
    %p142 = por %p140, %p141
    %p143 = scmp.ne.s32.totalorder %s135, %s137
    %p144 = scmp.eq.s32.totalorder %s17, 1
    %p145 = por %p143, %p144
    %p146 = scmp.ne.s32.totalorder %s137, %s138
    %p147 = scmp.eq.s32.totalorder %s17, 0
    %p148 = por %p146, %p147
    %p149 = scmp.ne.s32.totalorder %s137, %s138
    %p150 = scmp.eq.s32.totalorder %s18, 1
    %p151 = por %p149, %p150
    %p153 = scmp.ne.s32.totalorder %s138, %s152
    %p154 = scmp.eq.s32.totalorder %s18, 0
    %p155 = por %p153, %p154
    %p156 = scmp.le.s32.totalorder 1, %s12
    %p157 = scmp.lt.s32.totalorder %s12, 3
    %p158 = pnand %p156, %p157
    %p159 = pneg %p158
    // Predicated region
    $region9: #{bottleneck_forward.4} parent=5 // pred_check
      _
    $region10: #{bottleneck_forward.4} parent=5 // pred_check_branch
      %161 = sbr.rel (%p158) target = $region12
    $region11: #{bottleneck_forward.4} parent=5 // pred_region
      %s162 = ssub.s32 %s12, 1
      // Predicated region
      $region13: #{bottleneck_forward.4} parent=11 // pred_check
        %p163 = pneg %p59
      $region14: #{bottleneck_forward.4} parent=11 // pred_check_branch
        %165 = sbr.rel (%p163) target = $region16
      $region15: #{bottleneck_forward.4} parent=11 // pred_region
        _
      $region16: #{bottleneck_forward.4} parent=11 // pred_fallthru
        _
      // Predicated region
      $region17: #{bottleneck_forward.4} parent=11 // pred_check
        %p166 = pneg %p80
      $region18: #{bottleneck_forward.4} parent=11 // pred_check_branch
        %168 = sbr.rel (%p166) target = $region20
      $region19: #{bottleneck_forward.4} parent=11 // pred_region
        _
      $region20: #{bottleneck_forward.4} parent=11 // pred_fallthru
        _
      // Predicated region
      $region21: #{bottleneck_forward.4} parent=11 // pred_check
        %p169 = pneg %p101
      $region22: #{bottleneck_forward.4} parent=11 // pred_check_branch
        %171 = sbr.rel (%p169) target = $region24
      $region23: #{bottleneck_forward.4} parent=11 // pred_region
        _
      $region24: #{bottleneck_forward.4} parent=11 // pred_fallthru
        _
    $region12: #{bottleneck_forward.4} parent=5 // pred_fallthru
      _
    %p172 = scmp.lt.s32.totalorder %s12, 2
    // Predicated region
    $region25: #{bottleneck_forward.4} parent=5 // pred_check
      %p173 = pneg %p172
    $region26: #{bottleneck_forward.4} parent=5 // pred_check_branch
      %175 = sbr.rel (%p173) target = $region28
    $region27: #{bottleneck_forward.4} parent=5 // pred_region
      // Predicated region
      $region29: #{bottleneck_forward.4} parent=27 // pred_check
        %p176 = pneg %p32
      $region30: #{bottleneck_forward.4} parent=27 // pred_check_branch
        %178 = sbr.rel (%p176) target = $region32
      $region31: #{bottleneck_forward.4} parent=27 // pred_region
        %s179 = smul.u32 32, %s12
        %p180 = scmp.lt.s32.totalorder %s179, 63
        %s181 = scalar_select %p180, %s179, 63
        %s182 = smul.addr %s181, 8
        %s183 = scalar_lea.vmem %s0, %s182
        %s184 = smul.u32 32, %s12
      $region32: #{bottleneck_forward.4} parent=27 // pred_fallthru
        _
    $region28: #{bottleneck_forward.4} parent=5 // pred_fallthru
      _
    %p185 = scmp.le.s32.totalorder 1, %s12
    %p186 = scmp.lt.s32.totalorder %s12, 3
    %p187 = pnand %p185, %p186
    %p188 = pneg %p187
    // Predicated region
    $region33: #{bottleneck_forward.4} parent=5 // pred_check
      _
    $region34: #{bottleneck_forward.4} parent=5 // pred_check_branch
      %190 = sbr.rel (%p187) target = $region36
    $region35: #{bottleneck_forward.4} parent=5 // pred_region
      %s191 = ssub.s32 %s12, 1
      %s192 = smul.u32 32, %s17
      %p193 = scmp.lt.s32.totalorder %s192, 63
      %s194 = scalar_select %p193, %s192, 63
      %s195 = smul.addr %s194, 8
      %s196 = scalar_lea.vmem %s0, %s195
      %p197 = pneg %p38
      %p198 = pneg %p35
      %p199 = pneg %p59
      %p200 = pneg %p56
      %p201 = pneg %p80
      %p202 = pneg %p77
      %p203 = pneg %p101
      %p204 = pneg %p98
      %p205 = pneg %p127
      %p206 = pneg %p124
      %s207 = smul.u32 32, %s17
      %p208 = scmp.lt.s32.totalorder %s207, 63
      %s209 = scalar_select %p208, %s207, 63
      %s210 = smul.addr %s209, 8
      %s211 = scalar_lea.vmem %s4, %s210
      %p212 = pneg %p148
      %p213 = pneg %p145
      %s214 = smul.u32 32, %s17
      %p215 = scmp.lt.s32.totalorder %s214, 63
      %s216 = scalar_select %p215, %s214, 63
      %s217 = smul.addr %s216, 8
      %s218 = scalar_lea.vmem %s0, %s217
      %s219 = smul.u32 32, %s17
      %s220 = smul.u32 32, %s17
      %p221 = scmp.lt.s32.totalorder %s220, 63
      %s222 = scalar_select %p221, %s220, 63
      %s223 = smul.addr %s222, 8
      %s224 = scalar_lea.vmem %s4, %s223
      %s225 = smul.u32 32, %s17
      %p227 = scmp.eq.s32.totalorder %s17, 0
      // Predicated region
      $region37: #{bottleneck_forward.4} parent=35 // pred_check
        %p228 = pneg %p227
      $region38: #{bottleneck_forward.4} parent=35 // pred_check_branch
        %230 = sbr.rel (%p228) target = $region40
      $region39: #{bottleneck_forward.4} parent=35 // pred_region
        %vm231 = vcmask 254976
        %232 = vst.msk [vmem:[%s5] sm:$0x3] %vm231, 0.0
      $region40: #{bottleneck_forward.4} parent=35 // pred_fallthru
        _
      %v233 = vld [vmem:[%s218] sm:$0xff]
      %v234 = vld [vmem:[%s218 + $0x8] sm:$0xff]
      %v235 = vld [vmem:[%s218 + $0x10] sm:$0xff]
      %v236 = vld [vmem:[%s218 + $0x18] sm:$0xff]
      %v237 = vld [vmem:[%s218 + $0x20] sm:$0xff]
      %v238 = vld [vmem:[%s218 + $0x28] sm:$0xff]
      %v239 = vld [vmem:[%s218 + $0x30] sm:$0xff]
      %v240 = vld [vmem:[%s218 + $0x38] sm:$0xff]
      %v241 = vld [vmem:[%s218 + $0x40] sm:$0xff]
      %v242 = vld [vmem:[%s218 + $0x48] sm:$0xff]
      %v243 = vld [vmem:[%s218 + $0x50] sm:$0xff]
      %v244 = vld [vmem:[%s218 + $0x58] sm:$0xff]
      %v245 = vld [vmem:[%s218 + $0x60] sm:$0xff]
      %v246 = vld [vmem:[%s218 + $0x68] sm:$0xff]
      %v247 = vld [vmem:[%s218 + $0x70] sm:$0xff]
      %v248 = vld [vmem:[%s218 + $0x78] sm:$0xff]
      %v249 = vld [vmem:[%s218 + $0x80] sm:$0xff]
      %v250 = vld [vmem:[%s218 + $0x88] sm:$0xff]
      %v251 = vld [vmem:[%s218 + $0x90] sm:$0xff]
      %v252 = vld [vmem:[%s218 + $0x98] sm:$0xff]
      %v253 = vld [vmem:[%s218 + $0xa0] sm:$0xff]
      %v254 = vld [vmem:[%s218 + $0xa8] sm:$0xff]
      %v255 = vld [vmem:[%s218 + $0xb0] sm:$0xff]
      %v256 = vld [vmem:[%s218 + $0xb8] sm:$0xff]
      %v257 = vld [vmem:[%s218 + $0xc0] sm:$0xff]
      %v258 = vld [vmem:[%s218 + $0xc8] sm:$0xff]
      %v259 = vld [vmem:[%s218 + $0xd0] sm:$0xff]
      %v260 = vld [vmem:[%s218 + $0xd8] sm:$0xff]
      %v261 = vld [vmem:[%s218 + $0xe0] sm:$0xff]
      %v262 = vld [vmem:[%s218 + $0xe8] sm:$0xff]
      %v263 = vld [vmem:[%s218 + $0xf0] sm:$0xff]
      %v264 = vld [vmem:[%s218 + $0xf8] sm:$0xff]
      %v265 = vld [vmem:[%s1] sm:$0x1]
      %v267 = vlaneseq
      %v268 = vshrl.u32 %v267, 7
      %v269 = vsub.s32 0, %v268
      %v270 = vrot.slane %v265, %v269
      %v272 = vmul.f32 %v233, %v270
      %v273 = vmul.f32 %v234, %v270
      %v274 = vmul.f32 %v235, %v270
      %v275 = vmul.f32 %v236, %v270
      %v276 = vmul.f32 %v237, %v270
      %v277 = vmul.f32 %v238, %v270
      %v278 = vmul.f32 %v239, %v270
      %v279 = vmul.f32 %v240, %v270
      %v280 = vmul.f32 %v241, %v270
      %v281 = vmul.f32 %v242, %v270
      %v282 = vmul.f32 %v243, %v270
      %v283 = vmul.f32 %v244, %v270
      %v284 = vmul.f32 %v245, %v270
      %v285 = vmul.f32 %v246, %v270
      %v286 = vmul.f32 %v247, %v270
      %v287 = vmul.f32 %v248, %v270
      %v288 = vmul.f32 %v249, %v270
      %v289 = vmul.f32 %v250, %v270
      %v290 = vmul.f32 %v251, %v270
      %v291 = vmul.f32 %v252, %v270
      %v292 = vmul.f32 %v253, %v270
      %v293 = vmul.f32 %v254, %v270
      %v294 = vmul.f32 %v255, %v270
      %v295 = vmul.f32 %v256, %v270
      %v296 = vmul.f32 %v257, %v270
      %v297 = vmul.f32 %v258, %v270
      %v298 = vmul.f32 %v259, %v270
      %v299 = vmul.f32 %v260, %v270
      %v300 = vmul.f32 %v261, %v270
      %v301 = vmul.f32 %v262, %v270
      %v302 = vmul.f32 %v263, %v270
      %v303 = vmul.f32 %v264, %v270
      %v304 = vld [vmem:[%s2] sm:$0x1]
      %v306 = vlaneseq
      %v307 = vshrl.u32 %v306, 7
      %v308 = vsub.s32 0, %v307
      %v309 = vrot.slane %v304, %v308
      %v311 = vadd.f32 %v272, %v309
      %v312 = vadd.f32 %v273, %v309
      %v313 = vadd.f32 %v274, %v309
      %v314 = vadd.f32 %v275, %v309
      %v315 = vadd.f32 %v276, %v309
      %v316 = vadd.f32 %v277, %v309
      %v317 = vadd.f32 %v278, %v309
      %v318 = vadd.f32 %v279, %v309
      %v319 = vadd.f32 %v280, %v309
      %v320 = vadd.f32 %v281, %v309
      %v321 = vadd.f32 %v282, %v309
      %v322 = vadd.f32 %v283, %v309
      %v323 = vadd.f32 %v284, %v309
      %v324 = vadd.f32 %v285, %v309
      %v325 = vadd.f32 %v286, %v309
      %v326 = vadd.f32 %v287, %v309
      %v327 = vadd.f32 %v288, %v309
      %v328 = vadd.f32 %v289, %v309
      %v329 = vadd.f32 %v290, %v309
      %v330 = vadd.f32 %v291, %v309
      %v331 = vadd.f32 %v292, %v309
      %v332 = vadd.f32 %v293, %v309
      %v333 = vadd.f32 %v294, %v309
      %v334 = vadd.f32 %v295, %v309
      %v335 = vadd.f32 %v296, %v309
      %v336 = vadd.f32 %v297, %v309
      %v337 = vadd.f32 %v298, %v309
      %v338 = vadd.f32 %v299, %v309
      %v339 = vadd.f32 %v300, %v309
      %v340 = vadd.f32 %v301, %v309
      %v341 = vadd.f32 %v302, %v309
      %v342 = vadd.f32 %v303, %v309
      %v343 = vmax.f32 %v311, 0.0
      %v344 = vmax.f32 %v312, 0.0
      %v345 = vmax.f32 %v313, 0.0
      %v346 = vmax.f32 %v314, 0.0
      %v347 = vmax.f32 %v315, 0.0
      %v348 = vmax.f32 %v316, 0.0
      %v349 = vmax.f32 %v317, 0.0
      %v350 = vmax.f32 %v318, 0.0
      %v351 = vmax.f32 %v319, 0.0
      %v352 = vmax.f32 %v320, 0.0
      %v353 = vmax.f32 %v321, 0.0
      %v354 = vmax.f32 %v322, 0.0
      %v355 = vmax.f32 %v323, 0.0
      %v356 = vmax.f32 %v324, 0.0
      %v357 = vmax.f32 %v325, 0.0
      %v358 = vmax.f32 %v326, 0.0
      %v359 = vmax.f32 %v327, 0.0
      %v360 = vmax.f32 %v328, 0.0
      %v361 = vmax.f32 %v329, 0.0
      %v362 = vmax.f32 %v330, 0.0
      %v363 = vmax.f32 %v331, 0.0
      %v364 = vmax.f32 %v332, 0.0
      %v365 = vmax.f32 %v333, 0.0
      %v366 = vmax.f32 %v334, 0.0
      %v367 = vmax.f32 %v335, 0.0
      %v368 = vmax.f32 %v336, 0.0
      %v369 = vmax.f32 %v337, 0.0
      %v370 = vmax.f32 %v338, 0.0
      %v371 = vmax.f32 %v339, 0.0
      %v372 = vmax.f32 %v340, 0.0
      %v373 = vmax.f32 %v341, 0.0
      %v374 = vmax.f32 %v342, 0.0
      %v375 = vpack.c.bf16 %v344, %v343
      %v376 = vpack.c.bf16 %v346, %v345
      %v377 = vpack.c.bf16 %v348, %v347
      %v378 = vpack.c.bf16 %v350, %v349
      %v379 = vpack.c.bf16 %v352, %v351
      %v380 = vpack.c.bf16 %v354, %v353
      %v381 = vpack.c.bf16 %v356, %v355
      %v382 = vpack.c.bf16 %v358, %v357
      %v383 = vpack.c.bf16 %v360, %v359
      %v384 = vpack.c.bf16 %v362, %v361
      %v385 = vpack.c.bf16 %v364, %v363
      %v386 = vpack.c.bf16 %v366, %v365
      %v387 = vpack.c.bf16 %v368, %v367
      %v388 = vpack.c.bf16 %v370, %v369
      %v389 = vpack.c.bf16 %v372, %v371
      %v390 = vpack.c.bf16 %v374, %v373
      %v391 = vld [vmem:[%s3] sm:$0x3]
      %vm392 = vcmask 31744
      %v394 = vsel %vm392, %v375, 0
      %v397 = vsel %vm392, %v376, 0
      %v400 = vsel %vm392, %v377, 0
      %v403 = vsel %vm392, %v378, 0
      %v406 = vsel %vm392, %v379, 0
      %v409 = vsel %vm392, %v380, 0
      %v412 = vsel %vm392, %v381, 0
      %v415 = vsel %vm392, %v382, 0
      %v418 = vsel %vm392, %v383, 0
      %v421 = vsel %vm392, %v384, 0
      %v424 = vsel %vm392, %v385, 0
      %v427 = vsel %vm392, %v386, 0
      %v430 = vsel %vm392, %v387, 0
      %v433 = vsel %vm392, %v388, 0
      %v436 = vsel %vm392, %v389, 0
      %v439 = vsel %vm392, %v390, 0
      %vm441 = vcmask 1041408
      %v443 = vsel %vm441, %v391, 0
      %445 = vmatprep.subr.bf16.mxu0 0
      %446 = vmatpush1.bf16.msra.mxu0 %v443
      %447 = vmatprep.subr.bf16.mxu0 0
      %448 = vmatpush1.bf16.msra.mxu0 0
      %449 = vmatprep.subr.bf16.mxu0 0
      %450 = vmatpush1.bf16.msra.mxu0 0
      %451 = vmatprep.subr.bf16.mxu0 0
      %452 = vmatpush1.bf16.msra.mxu0 0
      %453 = vmatprep.subr.bf16.mxu0 0
      %454 = vmatpush1.bf16.msra.mxu0 0
      %455 = vmatprep.subr.bf16.mxu0 0
      %456 = vmatpush1.bf16.msra.mxu0 0
      %457 = vmatprep.subr.bf16.mxu0 0
      %458 = vmatpush1.bf16.msra.mxu0 0
      %459 = vmatprep.subr.bf16.mxu0 0
      %460 = vmatpush1.bf16.msra.mxu0 0
      %461 = vmatprep.subr.bf16.mxu0 0
      %462 = vmatpush1.bf16.msra.mxu0 0
      %463 = vmatprep.subr.bf16.mxu0 0
      %464 = vmatpush1.bf16.msra.mxu0 0
      %465 = vmatprep.subr.bf16.mxu0 0
      %466 = vmatpush1.bf16.msra.mxu0 0
      %467 = vmatprep.subr.bf16.mxu0 0
      %468 = vmatpush1.bf16.msra.mxu0 0
      %469 = vmatprep.subr.bf16.mxu0 0
      %470 = vmatpush1.bf16.msra.mxu0 0
      %471 = vmatprep.subr.bf16.mxu0 0
      %472 = vmatpush1.bf16.msra.mxu0 0
      %473 = vmatprep.subr.bf16.mxu0 0
      %474 = vmatpush1.bf16.msra.mxu0 0
      %475 = vmatprep.subr.bf16.mxu0 0
      %476 = vmatpush1.bf16.msra.mxu0 0
      %477 = vmatprep.mubr.bf16.mxu0 0
      %478 = vmatmul.mubr.bf16.gmra.mrb[0].mxu0 %v394
      %v479 = vpop.f32.mrb[0].mxu0
      %v480 = vadd.f32 0.0, %v479
      %v481 = vpop.f32.mrb[0].mxu0
      %v482 = vpop.f32.mrb[0].mxu0
      %v483 = vadd.f32 0.0, %v482
      %v484 = vpop.f32.mrb[0].mxu0
      %485 = vmatprep.mubr.bf16.mxu0 0
      %486 = vmatmul.mubr.bf16.gmra.mrb[0].mxu0 %v397
      %v487 = vpop.f32.mrb[0].mxu0
      %v488 = vadd.f32 0.0, %v487
      %v489 = vpop.f32.mrb[0].mxu0
      %v490 = vpop.f32.mrb[0].mxu0
      %v491 = vadd.f32 0.0, %v490
      %v492 = vpop.f32.mrb[0].mxu0
      %493 = vmatprep.mubr.bf16.mxu0 0
      %494 = vmatmul.mubr.bf16.gmra.mrb[0].mxu0 %v400
      %v495 = vpop.f32.mrb[0].mxu0
      %v496 = vadd.f32 0.0, %v495
      %v497 = vpop.f32.mrb[0].mxu0
      %v498 = vpop.f32.mrb[0].mxu0
      %v499 = vadd.f32 0.0, %v498
      %v500 = vpop.f32.mrb[0].mxu0
      %501 = vmatprep.mubr.bf16.mxu0 0
      %502 = vmatmul.mubr.bf16.gmra.mrb[0].mxu0 %v403
      %v503 = vpop.f32.mrb[0].mxu0
      %v504 = vadd.f32 0.0, %v503
      %v505 = vpop.f32.mrb[0].mxu0
      %v506 = vpop.f32.mrb[0].mxu0
      %v507 = vadd.f32 0.0, %v506
      %v508 = vpop.f32.mrb[0].mxu0
      %509 = vmatprep.mubr.bf16.mxu0 0
      %510 = vmatmul.mubr.bf16.gmra.mrb[0].mxu0 %v406
      %v511 = vpop.f32.mrb[0].mxu0
      %v512 = vadd.f32 0.0, %v511
      %v513 = vpop.f32.mrb[0].mxu0
      %v514 = vpop.f32.mrb[0].mxu0
      %v515 = vadd.f32 0.0, %v514
      %v516 = vpop.f32.mrb[0].mxu0
      %517 = vmatprep.mubr.bf16.mxu0 0
      %518 = vmatmul.mubr.bf16.gmra.mrb[0].mxu0 %v409
      %v519 = vpop.f32.mrb[0].mxu0
      %v520 = vadd.f32 0.0, %v519
      %v521 = vpop.f32.mrb[0].mxu0
      %v522 = vpop.f32.mrb[0].mxu0
      %v523 = vadd.f32 0.0, %v522
      %v524 = vpop.f32.mrb[0].mxu0
      %525 = vmatprep.mubr.bf16.mxu0 0
      %526 = vmatmul.mubr.bf16.gmra.mrb[0].mxu0 %v412
      %v527 = vpop.f32.mrb[0].mxu0
      %v528 = vadd.f32 0.0, %v527
      %v529 = vpop.f32.mrb[0].mxu0
      %v530 = vpop.f32.mrb[0].mxu0
      %v531 = vadd.f32 0.0, %v530
      %v532 = vpop.f32.mrb[0].mxu0
      %533 = vmatprep.mubr.bf16.mxu0 0
      %534 = vmatmul.mubr.bf16.gmra.mrb[0].mxu0 %v415
      %v535 = vpop.f32.mrb[0].mxu0
      %v536 = vadd.f32 0.0, %v535
      %v537 = vpop.f32.mrb[0].mxu0
      %v538 = vpop.f32.mrb[0].mxu0
      %v539 = vadd.f32 0.0, %v538
      %v540 = vpop.f32.mrb[0].mxu0
      %541 = vmatprep.mubr.bf16.mxu0 0
      %542 = vmatmul.mubr.bf16.gmra.mrb[0].mxu0 %v418
      %v543 = vpop.f32.mrb[0].mxu0
      %v544 = vadd.f32 0.0, %v543
      %v545 = vpop.f32.mrb[0].mxu0
      %v546 = vpop.f32.mrb[0].mxu0
      %v547 = vadd.f32 0.0, %v546
      %v548 = vpop.f32.mrb[0].mxu0
      %549 = vmatprep.mubr.bf16.mxu0 0
      %550 = vmatmul.mubr.bf16.gmra.mrb[0].mxu0 %v421
      %v551 = vpop.f32.mrb[0].mxu0
      %v552 = vadd.f32 0.0, %v551
      %v553 = vpop.f32.mrb[0].mxu0
      %v554 = vpop.f32.mrb[0].mxu0
      %v555 = vadd.f32 0.0, %v554
      %v556 = vpop.f32.mrb[0].mxu0
      %557 = vmatprep.mubr.bf16.mxu0 0
      %558 = vmatmul.mubr.bf16.gmra.mrb[0].mxu0 %v424
      %v559 = vpop.f32.mrb[0].mxu0
      %v560 = vadd.f32 0.0, %v559
      %v561 = vpop.f32.mrb[0].mxu0
      %v562 = vpop.f32.mrb[0].mxu0
      %v563 = vadd.f32 0.0, %v562
      %v564 = vpop.f32.mrb[0].mxu0
      %565 = vmatprep.mubr.bf16.mxu0 0
      %566 = vmatmul.mubr.bf16.gmra.mrb[0].mxu0 %v427
      %v567 = vpop.f32.mrb[0].mxu0
      %v568 = vadd.f32 0.0, %v567
      %v569 = vpop.f32.mrb[0].mxu0
      %v570 = vpop.f32.mrb[0].mxu0
      %v571 = vadd.f32 0.0, %v570
      %v572 = vpop.f32.mrb[0].mxu0
      %573 = vmatprep.mubr.bf16.mxu0 0
      %574 = vmatmul.mubr.bf16.gmra.mrb[0].mxu0 %v430
      %v575 = vpop.f32.mrb[0].mxu0
      %v576 = vadd.f32 0.0, %v575
      %v577 = vpop.f32.mrb[0].mxu0
      %v578 = vpop.f32.mrb[0].mxu0
      %v579 = vadd.f32 0.0, %v578
      %v580 = vpop.f32.mrb[0].mxu0
      %581 = vmatprep.mubr.bf16.mxu0 0
      %582 = vmatmul.mubr.bf16.gmra.mrb[0].mxu0 %v433
      %v583 = vpop.f32.mrb[0].mxu0
      %v584 = vadd.f32 0.0, %v583
      %v585 = vpop.f32.mrb[0].mxu0
      %v586 = vpop.f32.mrb[0].mxu0
      %v587 = vadd.f32 0.0, %v586
      %v588 = vpop.f32.mrb[0].mxu0
      %589 = vmatprep.mubr.bf16.mxu0 0
      %590 = vmatmul.mubr.bf16.gmra.mrb[0].mxu0 %v436
      %v591 = vpop.f32.mrb[0].mxu0
      %v592 = vadd.f32 0.0, %v591
      %v593 = vpop.f32.mrb[0].mxu0
      %v594 = vpop.f32.mrb[0].mxu0
      %v595 = vadd.f32 0.0, %v594
      %v596 = vpop.f32.mrb[0].mxu0
      %597 = vmatprep.mubr.bf16.mxu0 0
      %598 = vmatmul.mubr.bf16.gmra.mrb[0].mxu0 %v439
      %v599 = vpop.f32.mrb[0].mxu0
      %v600 = vadd.f32 0.0, %v599
      %v601 = vpop.f32.mrb[0].mxu0
      %v602 = vpop.f32.mrb[0].mxu0
      %v603 = vadd.f32 0.0, %v602
      %v604 = vpop.f32.mrb[0].mxu0
      %605 = vdwg.mxu0
      %vm606 = vcmask 261120
      %607 = vst.msk [vmem:[%s224] sm:$0xff] %vm606, %v480
      %608 = vst.msk [vmem:[%s224 + $0x8] sm:$0xff] %vm606, %v483
      %609 = vst.msk [vmem:[%s224 + $0x10] sm:$0xff] %vm606, %v488
      %610 = vst.msk [vmem:[%s224 + $0x18] sm:$0xff] %vm606, %v491
      %611 = vst.msk [vmem:[%s224 + $0x20] sm:$0xff] %vm606, %v496
      %612 = vst.msk [vmem:[%s224 + $0x28] sm:$0xff] %vm606, %v499
      %613 = vst.msk [vmem:[%s224 + $0x30] sm:$0xff] %vm606, %v504
      %614 = vst.msk [vmem:[%s224 + $0x38] sm:$0xff] %vm606, %v507
      %615 = vst.msk [vmem:[%s224 + $0x40] sm:$0xff] %vm606, %v512
      %616 = vst.msk [vmem:[%s224 + $0x48] sm:$0xff] %vm606, %v515
      %617 = vst.msk [vmem:[%s224 + $0x50] sm:$0xff] %vm606, %v520
      %618 = vst.msk [vmem:[%s224 + $0x58] sm:$0xff] %vm606, %v523
      %619 = vst.msk [vmem:[%s224 + $0x60] sm:$0xff] %vm606, %v528
      %620 = vst.msk [vmem:[%s224 + $0x68] sm:$0xff] %vm606, %v531
      %621 = vst.msk [vmem:[%s224 + $0x70] sm:$0xff] %vm606, %v536
      %622 = vst.msk [vmem:[%s224 + $0x78] sm:$0xff] %vm606, %v539
      %623 = vst.msk [vmem:[%s224 + $0x80] sm:$0xff] %vm606, %v544
      %624 = vst.msk [vmem:[%s224 + $0x88] sm:$0xff] %vm606, %v547
      %625 = vst.msk [vmem:[%s224 + $0x90] sm:$0xff] %vm606, %v552
      %626 = vst.msk [vmem:[%s224 + $0x98] sm:$0xff] %vm606, %v555
      %627 = vst.msk [vmem:[%s224 + $0xa0] sm:$0xff] %vm606, %v560
      %628 = vst.msk [vmem:[%s224 + $0xa8] sm:$0xff] %vm606, %v563
      %629 = vst.msk [vmem:[%s224 + $0xb0] sm:$0xff] %vm606, %v568
      %630 = vst.msk [vmem:[%s224 + $0xb8] sm:$0xff] %vm606, %v571
      %631 = vst.msk [vmem:[%s224 + $0xc0] sm:$0xff] %vm606, %v576
      %632 = vst.msk [vmem:[%s224 + $0xc8] sm:$0xff] %vm606, %v579
      %633 = vst.msk [vmem:[%s224 + $0xd0] sm:$0xff] %vm606, %v584
      %634 = vst.msk [vmem:[%s224 + $0xd8] sm:$0xff] %vm606, %v587
      %635 = vst.msk [vmem:[%s224 + $0xe0] sm:$0xff] %vm606, %v592
      %636 = vst.msk [vmem:[%s224 + $0xe8] sm:$0xff] %vm606, %v595
      %637 = vst.msk [vmem:[%s224 + $0xf0] sm:$0xff] %vm606, %v600
      %638 = vst.msk [vmem:[%s224 + $0xf8] sm:$0xff] %vm606, %v603
      %v639 = vld [vmem:[%s5] sm:$0x3]
      %v640 = vsel %vm606, %v480, 0.0
      %v641 = vsel %vm606, %v483, 0.0
      %v642 = vadd.f32 %v640, %v641
      %v643 = vsel %vm606, %v488, 0.0
      %v644 = vadd.f32 %v642, %v643
      %v645 = vsel %vm606, %v491, 0.0
      %v646 = vadd.f32 %v644, %v645
      %v647 = vsel %vm606, %v496, 0.0
      %v648 = vadd.f32 %v646, %v647
      %v649 = vsel %vm606, %v499, 0.0
      %v650 = vadd.f32 %v648, %v649
      %v651 = vsel %vm606, %v504, 0.0
      %v652 = vadd.f32 %v650, %v651
      %v653 = vsel %vm606, %v507, 0.0
      %v654 = vadd.f32 %v652, %v653
      %v655 = vsel %vm606, %v512, 0.0
      %v656 = vadd.f32 %v654, %v655
      %v657 = vsel %vm606, %v515, 0.0
      %v658 = vadd.f32 %v656, %v657
      %v659 = vsel %vm606, %v520, 0.0
      %v660 = vadd.f32 %v658, %v659
      %v661 = vsel %vm606, %v523, 0.0
      %v662 = vadd.f32 %v660, %v661
      %v663 = vsel %vm606, %v528, 0.0
      %v664 = vadd.f32 %v662, %v663
      %v665 = vsel %vm606, %v531, 0.0
      %v666 = vadd.f32 %v664, %v665
      %v667 = vsel %vm606, %v536, 0.0
      %v668 = vadd.f32 %v666, %v667
      %v669 = vsel %vm606, %v539, 0.0
      %v670 = vadd.f32 %v668, %v669
      %v671 = vsel %vm606, %v544, 0.0
      %v672 = vadd.f32 %v670, %v671
      %v673 = vsel %vm606, %v547, 0.0
      %v674 = vadd.f32 %v672, %v673
      %v675 = vsel %vm606, %v552, 0.0
      %v676 = vadd.f32 %v674, %v675
      %v677 = vsel %vm606, %v555, 0.0
      %v678 = vadd.f32 %v676, %v677
      %v679 = vsel %vm606, %v560, 0.0
      %v680 = vadd.f32 %v678, %v679
      %v681 = vsel %vm606, %v563, 0.0
      %v682 = vadd.f32 %v680, %v681
      %v683 = vsel %vm606, %v568, 0.0
      %v684 = vadd.f32 %v682, %v683
      %v685 = vsel %vm606, %v571, 0.0
      %v686 = vadd.f32 %v684, %v685
      %v687 = vsel %vm606, %v576, 0.0
      %v688 = vadd.f32 %v686, %v687
      %v689 = vsel %vm606, %v579, 0.0
      %v690 = vadd.f32 %v688, %v689
      %v691 = vsel %vm606, %v584, 0.0
      %v692 = vadd.f32 %v690, %v691
      %v693 = vsel %vm606, %v587, 0.0
      %v694 = vadd.f32 %v692, %v693
      %v695 = vsel %vm606, %v592, 0.0
      %v696 = vadd.f32 %v694, %v695
      %v697 = vsel %vm606, %v595, 0.0
      %v698 = vadd.f32 %v696, %v697
      %v699 = vsel %vm606, %v600, 0.0
      %v700 = vadd.f32 %v698, %v699
      %v701 = vsel %vm606, %v603, 0.0
      %v702 = vadd.f32 %v700, %v701
      %v703 = vrot.slane %v702, 4
      %v704 = vadd.f32 %v702, %v703
      %v705 = vrot.slane %v704, 2
      %v706 = vadd.f32 %v704, %v705
      %v707 = vrot.slane %v706, 1
      %v708 = vadd.f32 %v706, %v707
      %v709 = vmul.f32 %v480, %v480
      %v710 = vmul.f32 %v483, %v483
      %v711 = vmul.f32 %v488, %v488
      %v712 = vmul.f32 %v491, %v491
      %v713 = vmul.f32 %v496, %v496
      %v714 = vmul.f32 %v499, %v499
      %v715 = vmul.f32 %v504, %v504
      %v716 = vmul.f32 %v507, %v507
      %v717 = vmul.f32 %v512, %v512
      %v718 = vmul.f32 %v515, %v515
      %v719 = vmul.f32 %v520, %v520
      %v720 = vmul.f32 %v523, %v523
      %v721 = vmul.f32 %v528, %v528
      %v722 = vmul.f32 %v531, %v531
      %v723 = vmul.f32 %v536, %v536
      %v724 = vmul.f32 %v539, %v539
      %v725 = vmul.f32 %v544, %v544
      %v726 = vmul.f32 %v547, %v547
      %v727 = vmul.f32 %v552, %v552
      %v728 = vmul.f32 %v555, %v555
      %v729 = vmul.f32 %v560, %v560
      %v730 = vmul.f32 %v563, %v563
      %v731 = vmul.f32 %v568, %v568
      %v732 = vmul.f32 %v571, %v571
      %v733 = vmul.f32 %v576, %v576
      %v734 = vmul.f32 %v579, %v579
      %v735 = vmul.f32 %v584, %v584
      %v736 = vmul.f32 %v587, %v587
      %v737 = vmul.f32 %v592, %v592
      %v738 = vmul.f32 %v595, %v595
      %v739 = vmul.f32 %v600, %v600
      %v740 = vmul.f32 %v603, %v603
      %v741 = vsel %vm606, %v709, 0.0
      %v742 = vsel %vm606, %v710, 0.0
      %v743 = vadd.f32 %v741, %v742
      %v744 = vsel %vm606, %v711, 0.0
      %v745 = vadd.f32 %v743, %v744
      %v746 = vsel %vm606, %v712, 0.0
      %v747 = vadd.f32 %v745, %v746
      %v748 = vsel %vm606, %v713, 0.0
      %v749 = vadd.f32 %v747, %v748
      %v750 = vsel %vm606, %v714, 0.0
      %v751 = vadd.f32 %v749, %v750
      %v752 = vsel %vm606, %v715, 0.0
      %v753 = vadd.f32 %v751, %v752
      %v754 = vsel %vm606, %v716, 0.0
      %v755 = vadd.f32 %v753, %v754
      %v756 = vsel %vm606, %v717, 0.0
      %v757 = vadd.f32 %v755, %v756
      %v758 = vsel %vm606, %v718, 0.0
      %v759 = vadd.f32 %v757, %v758
      %v760 = vsel %vm606, %v719, 0.0
      %v761 = vadd.f32 %v759, %v760
      %v762 = vsel %vm606, %v720, 0.0
      %v763 = vadd.f32 %v761, %v762
      %v764 = vsel %vm606, %v721, 0.0
      %v765 = vadd.f32 %v763, %v764
      %v766 = vsel %vm606, %v722, 0.0
      %v767 = vadd.f32 %v765, %v766
      %v768 = vsel %vm606, %v723, 0.0
      %v769 = vadd.f32 %v767, %v768
      %v770 = vsel %vm606, %v724, 0.0
      %v771 = vadd.f32 %v769, %v770
      %v772 = vsel %vm606, %v725, 0.0
      %v773 = vadd.f32 %v771, %v772
      %v774 = vsel %vm606, %v726, 0.0
      %v775 = vadd.f32 %v773, %v774
      %v776 = vsel %vm606, %v727, 0.0
      %v777 = vadd.f32 %v775, %v776
      %v778 = vsel %vm606, %v728, 0.0
      %v779 = vadd.f32 %v777, %v778
      %v780 = vsel %vm606, %v729, 0.0
      %v781 = vadd.f32 %v779, %v780
      %v782 = vsel %vm606, %v730, 0.0
      %v783 = vadd.f32 %v781, %v782
      %v784 = vsel %vm606, %v731, 0.0
      %v785 = vadd.f32 %v783, %v784
      %v786 = vsel %vm606, %v732, 0.0
      %v787 = vadd.f32 %v785, %v786
      %v788 = vsel %vm606, %v733, 0.0
      %v789 = vadd.f32 %v787, %v788
      %v790 = vsel %vm606, %v734, 0.0
      %v791 = vadd.f32 %v789, %v790
      %v792 = vsel %vm606, %v735, 0.0
      %v793 = vadd.f32 %v791, %v792
      %v794 = vsel %vm606, %v736, 0.0
      %v795 = vadd.f32 %v793, %v794
      %v796 = vsel %vm606, %v737, 0.0
      %v797 = vadd.f32 %v795, %v796
      %v798 = vsel %vm606, %v738, 0.0
      %v799 = vadd.f32 %v797, %v798
      %v800 = vsel %vm606, %v739, 0.0
      %v801 = vadd.f32 %v799, %v800
      %v802 = vsel %vm606, %v740, 0.0
      %v803 = vadd.f32 %v801, %v802
      %v804 = vrot.slane %v803, 4
      %v805 = vadd.f32 %v803, %v804
      %v806 = vrot.slane %v805, 2
      %v807 = vadd.f32 %v805, %v806
      %v808 = vrot.slane %v807, 1
      %v809 = vadd.f32 %v807, %v808
      %vm810 = vcmask 1040384
      %v811 = vsel %vm810, %v708, %v809
      %v812 = vadd.f32 %v639, %v811
      %vm813 = vcmask 254976
      %814 = vst.msk [vmem:[%s5] sm:$0x3] %vm813, %v812
      %s815 = smul.u32 32, %s17
      %p816 = scmp.lt.s32.totalorder %s815, 63
      %s817 = scalar_select %p816, %s815, 63
      %s818 = smul.addr %s817, 8
      %s819 = scalar_lea.vmem %s4, %s818
      // Predicated region
      $region41: #{bottleneck_forward.4} parent=35 // pred_check
        %p820 = pneg %p124
      $region42: #{bottleneck_forward.4} parent=35 // pred_check_branch
        %822 = sbr.rel (%p820) target = $region44
      $region43: #{bottleneck_forward.4} parent=35 // pred_region
        %s823 = smul.u32 32, %s17
      $region44: #{bottleneck_forward.4} parent=35 // pred_fallthru
        _
      // Predicated region
      $region45: #{bottleneck_forward.4} parent=35 // pred_check
        %p824 = pneg %p145
      $region46: #{bottleneck_forward.4} parent=35 // pred_check_branch
        %826 = sbr.rel (%p824) target = $region48
      $region47: #{bottleneck_forward.4} parent=35 // pred_region
        _
      $region48: #{bottleneck_forward.4} parent=35 // pred_fallthru
        _
      // Predicated region
      $region49: #{bottleneck_forward.4} parent=35 // pred_check
        %p827 = pneg %p145
      $region50: #{bottleneck_forward.4} parent=35 // pred_check_branch
        %829 = sbr.rel (%p827) target = $region52
      $region51: #{bottleneck_forward.4} parent=35 // pred_region
        _
      $region52: #{bottleneck_forward.4} parent=35 // pred_fallthru
        _
    $region36: #{bottleneck_forward.4} parent=5 // pred_fallthru
      _
    %p830 = scmp.le.s32.totalorder 2, %s12
    // Predicated region
    $region53: #{bottleneck_forward.4} parent=5 // pred_check
      %p831 = pneg %p830
    $region54: #{bottleneck_forward.4} parent=5 // pred_check_branch
      %833 = sbr.rel (%p831) target = $region56
    $region55: #{bottleneck_forward.4} parent=5 // pred_region
      %s834 = ssub.s32 %s12, 2
      // Predicated region
      $region57: #{bottleneck_forward.4} parent=55 // pred_check
        %p835 = pneg %p130
      $region58: #{bottleneck_forward.4} parent=55 // pred_check_branch
        %837 = sbr.rel (%p835) target = $region60
      $region59: #{bottleneck_forward.4} parent=55 // pred_region
        %s838 = smul.u32 32, %s18
        %p839 = scmp.lt.s32.totalorder %s838, 63
        %s840 = scalar_select %p839, %s838, 63
        %s841 = smul.addr %s840, 8
        %s842 = scalar_lea.vmem %s4, %s841
      $region60: #{bottleneck_forward.4} parent=55 // pred_fallthru
        _
    $region56: #{bottleneck_forward.4} parent=5 // pred_fallthru
      _
  $region6: #{bottleneck_forward.4} parent=0 // loop_footer
    %s16 = sadd.s32 1, %s12
  $region7: #{bottleneck_forward.4} parent=0 // loop_footer_branch
    %11 = sbr.rel target = $region3
  $region8: #{bottleneck_forward.4} parent=0 // loop_exit
    _

// kernel: bottleneck_forward.5
$region0: #{bottleneck_forward.5}
  #allocation0 [shape = 'u32[]', space=smem, size = 0x4, offset = 0x4, fixed_abs, tag = 'smem constant byte address 0x4 - core index']
  #allocation1 [shape = 'u32[144,128]{1,0:T(1,128)}', space=vmem, size = 0x12000, scoped, tag = 'internal scratch']
  #allocation2 [shape = 'f32[18,18,32]{2,1,0:T(8,128)}', space=vmem, size = 0x36000, scoped, tag = 'scratch operand']
  %s0 = inlined_call_operand.vmem [shape: f32[2,16,16,32], index: 0, kind: input, shape index: {}]
  %s1 = inlined_call_operand.vmem [shape: f32[1,32], index: 1, kind: input, shape index: {}]
  %s2 = inlined_call_operand.vmem [shape: f32[1,32], index: 2, kind: input, shape index: {}]
  %s3 = inlined_call_operand.vmem [shape: bf16[288,8], index: 3, kind: input, shape index: {}]
  %s4 = inlined_call_operand.vmem [shape: f32[2,16,16,4], index: 4, kind: input, shape index: {}]
  %s5 = inlined_call_operand.vmem [shape: f32[2,16,16,12], index: 5, kind: output, shape index: {}]
  %s6 = sld [smem:[#allocation0]]
  $region53: #{bottleneck_forward.5} parent=0
    _
  %s8 = ssub.s32 1, %s6
  %s9 = scalar_select 0, %s8, %s6
  loop: start=0, step=1, limit=4
  $region2: #{bottleneck_forward.5} parent=0 // loop_pre_header
    _
  $region3: #{bottleneck_forward.5} parent=0 // loop_header
    %s11 = sphi 0, %s15
    %p12 = scmp.ge.s32.totalorder %s11, 4
    %s21 = sphi 0, %s23
    %s24 = sphi 0, %s21
    %s25 = sphi 0, %s24
    %s41 = sphi 0, %s25
    %s45 = sphi 0, %s45
    %s47 = sphi 0, %s45
    %s48 = sphi 0, %s47
    %s62 = sphi 0, %s48
    %s66 = sphi 0, %s66
    %s68 = sphi 0, %s66
    %s69 = sphi 0, %s68
    %s83 = sphi 0, %s69
    %s87 = sphi 0, %s87
    %s89 = sphi 0, %s87
    %s90 = sphi 0, %s89
    %s104 = sphi 0, %s90
    %s110 = sphi 0, %s112
    %s113 = sphi 0, %s110
    %s114 = sphi 0, %s113
    %s130 = sphi 0, %s114
    %s136 = sphi 0, %s138
    %s139 = sphi 0, %s136
    %s140 = sphi 0, %s139
    %s156 = sphi 0, %s140
  $region4: #{bottleneck_forward.5} parent=0 // loop_header_branch
    %14 = sbr.rel (%p12) target = $region8
  $region5: #{bottleneck_forward.5} parent=0 // loop_body
    %s16 = ssub.s32 %s11, 1
    %s17 = ssub.s32 %s11, 2
    %s18 = sadd.s32 %s11, 1
    %s19 = ssub.s32 %s11, %s18
    %p20 = scmp.eq.s32.totalorder %s19, 0
    %s22 = sadd.s32 %s21, 1
    %s23 = scalar_select %p20, %s21, %s22
    %p26 = pneg %p20
    %p27 = scmp.eq.s32.totalorder %s11, 1
    %p28 = por %p26, %p27
    %p29 = scmp.ne.s32.totalorder %s21, %s24
    %p30 = scmp.eq.s32.totalorder %s11, 0
    %p31 = por %p29, %p30
    %p32 = scmp.ne.s32.totalorder %s21, %s24
    %p33 = scmp.eq.s32.totalorder %s16, 1
    %p34 = por %p32, %p33
    %p35 = scmp.ne.s32.totalorder %s24, %s25
    %p36 = scmp.eq.s32.totalorder %s16, 0
    %p37 = por %p35, %p36
    %p38 = scmp.ne.s32.totalorder %s24, %s25
    %p39 = scmp.eq.s32.totalorder %s17, 1
    %p40 = por %p38, %p39
    %p42 = scmp.ne.s32.totalorder %s25, %s41
    %p43 = scmp.eq.s32.totalorder %s17, 0
    %p44 = por %p42, %p43
    %s46 = sadd.s32 %s45, 1
    %p49 = scmp.eq.s32.totalorder %s11, 1
    %p50 = scmp.ne.s32.totalorder %s45, %s47
    %p51 = scmp.eq.s32.totalorder %s11, 0
    %p52 = por %p50, %p51
    %p53 = scmp.ne.s32.totalorder %s45, %s47
    %p54 = scmp.eq.s32.totalorder %s16, 1
    %p55 = por %p53, %p54
    %p56 = scmp.ne.s32.totalorder %s47, %s48
    %p57 = scmp.eq.s32.totalorder %s16, 0
    %p58 = por %p56, %p57
    %p59 = scmp.ne.s32.totalorder %s47, %s48
    %p60 = scmp.eq.s32.totalorder %s17, 1
    %p61 = por %p59, %p60
    %p63 = scmp.ne.s32.totalorder %s48, %s62
    %p64 = scmp.eq.s32.totalorder %s17, 0
    %p65 = por %p63, %p64
    %s67 = sadd.s32 %s66, 1
    %p70 = scmp.eq.s32.totalorder %s11, 1
    %p71 = scmp.ne.s32.totalorder %s66, %s68
    %p72 = scmp.eq.s32.totalorder %s11, 0
    %p73 = por %p71, %p72
    %p74 = scmp.ne.s32.totalorder %s66, %s68
    %p75 = scmp.eq.s32.totalorder %s16, 1
    %p76 = por %p74, %p75
    %p77 = scmp.ne.s32.totalorder %s68, %s69
    %p78 = scmp.eq.s32.totalorder %s16, 0
    %p79 = por %p77, %p78
    %p80 = scmp.ne.s32.totalorder %s68, %s69
    %p81 = scmp.eq.s32.totalorder %s17, 1
    %p82 = por %p80, %p81
    %p84 = scmp.ne.s32.totalorder %s69, %s83
    %p85 = scmp.eq.s32.totalorder %s17, 0
    %p86 = por %p84, %p85
    %s88 = sadd.s32 %s87, 1
    %p91 = scmp.eq.s32.totalorder %s11, 1
    %p92 = scmp.ne.s32.totalorder %s87, %s89
    %p93 = scmp.eq.s32.totalorder %s11, 0
    %p94 = por %p92, %p93
    %p95 = scmp.ne.s32.totalorder %s87, %s89
    %p96 = scmp.eq.s32.totalorder %s16, 1
    %p97 = por %p95, %p96
    %p98 = scmp.ne.s32.totalorder %s89, %s90
    %p99 = scmp.eq.s32.totalorder %s16, 0
    %p100 = por %p98, %p99
    %p101 = scmp.ne.s32.totalorder %s89, %s90
    %p102 = scmp.eq.s32.totalorder %s17, 1
    %p103 = por %p101, %p102
    %p105 = scmp.ne.s32.totalorder %s90, %s104
    %p106 = scmp.eq.s32.totalorder %s17, 0
    %p107 = por %p105, %p106
    %s108 = ssub.s32 %s11, %s18
    %p109 = scmp.eq.s32.totalorder %s108, 0
    %s111 = sadd.s32 %s110, 1
    %s112 = scalar_select %p109, %s110, %s111
    %p115 = pneg %p109
    %p116 = scmp.eq.s32.totalorder %s11, 1
    %p117 = por %p115, %p116
    %p118 = scmp.ne.s32.totalorder %s110, %s113
    %p119 = scmp.eq.s32.totalorder %s11, 0
    %p120 = por %p118, %p119
    %p121 = scmp.ne.s32.totalorder %s110, %s113
    %p122 = scmp.eq.s32.totalorder %s16, 1
    %p123 = por %p121, %p122
    %p124 = scmp.ne.s32.totalorder %s113, %s114
    %p125 = scmp.eq.s32.totalorder %s16, 0
    %p126 = por %p124, %p125
    %p127 = scmp.ne.s32.totalorder %s113, %s114
    %p128 = scmp.eq.s32.totalorder %s17, 1
    %p129 = por %p127, %p128
    %p131 = scmp.ne.s32.totalorder %s114, %s130
    %p132 = scmp.eq.s32.totalorder %s17, 0
    %p133 = por %p131, %p132
    %s134 = ssub.s32 %s11, %s18
    %p135 = scmp.eq.s32.totalorder %s134, 0
    %s137 = sadd.s32 %s136, 1
    %s138 = scalar_select %p135, %s136, %s137
    %p141 = pneg %p135
    %p142 = scmp.eq.s32.totalorder %s11, 1
    %p143 = por %p141, %p142
    %p144 = scmp.ne.s32.totalorder %s136, %s139
    %p145 = scmp.eq.s32.totalorder %s11, 0
    %p146 = por %p144, %p145
    %p147 = scmp.ne.s32.totalorder %s136, %s139
    %p148 = scmp.eq.s32.totalorder %s16, 1
    %p149 = por %p147, %p148
    %p150 = scmp.ne.s32.totalorder %s139, %s140
    %p151 = scmp.eq.s32.totalorder %s16, 0
    %p152 = por %p150, %p151
    %p153 = scmp.ne.s32.totalorder %s139, %s140
    %p154 = scmp.eq.s32.totalorder %s17, 1
    %p155 = por %p153, %p154
    %p157 = scmp.ne.s32.totalorder %s140, %s156
    %p158 = scmp.eq.s32.totalorder %s17, 0
    %p159 = por %p157, %p158
    %p160 = scmp.le.s32.totalorder 1, %s11
    %p161 = scmp.lt.s32.totalorder %s11, 3
    %p162 = pnand %p160, %p161
    %p163 = pneg %p162
    // Predicated region
    $region9: #{bottleneck_forward.5} parent=5 // pred_check
      _
    $region10: #{bottleneck_forward.5} parent=5 // pred_check_branch
      %165 = sbr.rel (%p162) target = $region12
    $region11: #{bottleneck_forward.5} parent=5 // pred_region
      %s166 = ssub.s32 %s11, 1
      // Predicated region
      $region13: #{bottleneck_forward.5} parent=11 // pred_check
        %p167 = pneg %p58
      $region14: #{bottleneck_forward.5} parent=11 // pred_check_branch
        %169 = sbr.rel (%p167) target = $region16
      $region15: #{bottleneck_forward.5} parent=11 // pred_region
        _
      $region16: #{bottleneck_forward.5} parent=11 // pred_fallthru
        _
      // Predicated region
      $region17: #{bottleneck_forward.5} parent=11 // pred_check
        %p170 = pneg %p79
      $region18: #{bottleneck_forward.5} parent=11 // pred_check_branch
        %172 = sbr.rel (%p170) target = $region20
      $region19: #{bottleneck_forward.5} parent=11 // pred_region
        _
      $region20: #{bottleneck_forward.5} parent=11 // pred_fallthru
        _
      // Predicated region
      $region21: #{bottleneck_forward.5} parent=11 // pred_check
        %p173 = pneg %p100
      $region22: #{bottleneck_forward.5} parent=11 // pred_check_branch
        %175 = sbr.rel (%p173) target = $region24
      $region23: #{bottleneck_forward.5} parent=11 // pred_region
        _
      $region24: #{bottleneck_forward.5} parent=11 // pred_fallthru
        _
    $region12: #{bottleneck_forward.5} parent=5 // pred_fallthru
      _
    %p176 = scmp.lt.s32.totalorder %s11, 2
    // Predicated region
    $region25: #{bottleneck_forward.5} parent=5 // pred_check
      %p177 = pneg %p176
    $region26: #{bottleneck_forward.5} parent=5 // pred_check_branch
      %179 = sbr.rel (%p177) target = $region28
    $region27: #{bottleneck_forward.5} parent=5 // pred_region
      // Predicated region
      $region29: #{bottleneck_forward.5} parent=27 // pred_check
        %p180 = pneg %p31
      $region30: #{bottleneck_forward.5} parent=27 // pred_check_branch
        %182 = sbr.rel (%p180) target = $region32
      $region31: #{bottleneck_forward.5} parent=27 // pred_region
        %p183 = scmp.lt.s32.totalorder %s11, 1
        %s184 = scalar_select %p183, %s11, 1
        %s185 = smul.addr %s184, 32
        %s186 = smul.addr %s185, 8
        %s187 = scalar_lea.vmem %s0, %s186
      $region32: #{bottleneck_forward.5} parent=27 // pred_fallthru
        _
      // Predicated region
      $region33: #{bottleneck_forward.5} parent=27 // pred_check
        %p188 = pneg %p120
      $region34: #{bottleneck_forward.5} parent=27 // pred_check_branch
        %190 = sbr.rel (%p188) target = $region36
      $region35: #{bottleneck_forward.5} parent=27 // pred_region
        %p191 = scmp.lt.s32.totalorder %s11, 1
        %s192 = scalar_select %p191, %s11, 1
        %s193 = smul.addr %s192, 32
        %s194 = smul.addr %s193, 8
        %s195 = scalar_lea.vmem %s4, %s194
      $region36: #{bottleneck_forward.5} parent=27 // pred_fallthru
        _
    $region28: #{bottleneck_forward.5} parent=5 // pred_fallthru
      _
    %p196 = scmp.le.s32.totalorder 1, %s11
    %p197 = scmp.lt.s32.totalorder %s11, 3
    %p198 = pnand %p196, %p197
    %p199 = pneg %p198
    // Predicated region
    $region37: #{bottleneck_forward.5} parent=5 // pred_check
      _
    $region38: #{bottleneck_forward.5} parent=5 // pred_check_branch
      %201 = sbr.rel (%p198) target = $region40
    $region39: #{bottleneck_forward.5} parent=5 // pred_region
      %s202 = ssub.s32 %s11, 1
      %p203 = scmp.lt.s32.totalorder %s16, 1
      %s204 = scalar_select %p203, %s16, 1
      %s205 = smul.addr %s204, 32
      %s206 = smul.addr %s205, 8
      %s207 = scalar_lea.vmem %s0, %s206
      %p208 = pneg %p37
      %p209 = pneg %p34
      %p210 = pneg %p58
      %p211 = pneg %p55
      %p212 = pneg %p79
      %p213 = pneg %p76
      %p214 = pneg %p100
      %p215 = pneg %p97
      %p216 = scmp.lt.s32.totalorder %s16, 1
      %s217 = scalar_select %p216, %s16, 1
      %s218 = smul.addr %s217, 32
      %s219 = smul.addr %s218, 8
      %s220 = scalar_lea.vmem %s4, %s219
      %p221 = pneg %p126
      %p222 = pneg %p123
      %p223 = pneg %p152
      %p224 = pneg %p149
      %p225 = scmp.lt.s32.totalorder %s16, 1
      %s226 = scalar_select %p225, %s16, 1
      %s227 = smul.addr %s226, 32
      %s228 = smul.addr %s227, 8
      %s229 = scalar_lea.vmem %s5, %s228
      %p230 = scmp.lt.s32.totalorder %s16, 1
      %s231 = scalar_select %p230, %s16, 1
      %s232 = smul.addr %s231, 32
      %s233 = smul.addr %s232, 8
      %s234 = scalar_lea.vmem %s0, %s233
      %p235 = scmp.lt.s32.totalorder %s16, 1
      %s236 = scalar_select %p235, %s16, 1
      %s237 = smul.addr %s236, 32
      %s238 = smul.addr %s237, 8
      %s239 = scalar_lea.vmem %s4, %s238
      %p240 = scmp.lt.s32.totalorder %s16, 1
      %s241 = scalar_select %p240, %s16, 1
      %s242 = smul.addr %s241, 32
      %s243 = smul.addr %s242, 8
      %s244 = scalar_lea.vmem %s5, %s243
      %v246 = vld [vmem:[%s234] sm:$0xff]
      %v247 = vld [vmem:[%s234 + $0x8] sm:$0xff]
      %v248 = vld [vmem:[%s234 + $0x10] sm:$0xff]
      %v249 = vld [vmem:[%s234 + $0x18] sm:$0xff]
      %v250 = vld [vmem:[%s234 + $0x20] sm:$0xff]
      %v251 = vld [vmem:[%s234 + $0x28] sm:$0xff]
      %v252 = vld [vmem:[%s234 + $0x30] sm:$0xff]
      %v253 = vld [vmem:[%s234 + $0x38] sm:$0xff]
      %v254 = vld [vmem:[%s234 + $0x40] sm:$0xff]
      %v255 = vld [vmem:[%s234 + $0x48] sm:$0xff]
      %v256 = vld [vmem:[%s234 + $0x50] sm:$0xff]
      %v257 = vld [vmem:[%s234 + $0x58] sm:$0xff]
      %v258 = vld [vmem:[%s234 + $0x60] sm:$0xff]
      %v259 = vld [vmem:[%s234 + $0x68] sm:$0xff]
      %v260 = vld [vmem:[%s234 + $0x70] sm:$0xff]
      %v261 = vld [vmem:[%s234 + $0x78] sm:$0xff]
      %v262 = vld [vmem:[%s234 + $0x80] sm:$0xff]
      %v263 = vld [vmem:[%s234 + $0x88] sm:$0xff]
      %v264 = vld [vmem:[%s234 + $0x90] sm:$0xff]
      %v265 = vld [vmem:[%s234 + $0x98] sm:$0xff]
      %v266 = vld [vmem:[%s234 + $0xa0] sm:$0xff]
      %v267 = vld [vmem:[%s234 + $0xa8] sm:$0xff]
      %v268 = vld [vmem:[%s234 + $0xb0] sm:$0xff]
      %v269 = vld [vmem:[%s234 + $0xb8] sm:$0xff]
      %v270 = vld [vmem:[%s234 + $0xc0] sm:$0xff]
      %v271 = vld [vmem:[%s234 + $0xc8] sm:$0xff]
      %v272 = vld [vmem:[%s234 + $0xd0] sm:$0xff]
      %v273 = vld [vmem:[%s234 + $0xd8] sm:$0xff]
      %v274 = vld [vmem:[%s234 + $0xe0] sm:$0xff]
      %v275 = vld [vmem:[%s234 + $0xe8] sm:$0xff]
      %v276 = vld [vmem:[%s234 + $0xf0] sm:$0xff]
      %v277 = vld [vmem:[%s234 + $0xf8] sm:$0xff]
      %v278 = vld [vmem:[%s1] sm:$0x1]
      %v280 = vlaneseq
      %v281 = vshrl.u32 %v280, 7
      %v282 = vsub.s32 0, %v281
      %v283 = vrot.slane %v278, %v282
      %v285 = vmul.f32 %v246, %v283
      %v286 = vmul.f32 %v247, %v283
      %v287 = vmul.f32 %v248, %v283
      %v288 = vmul.f32 %v249, %v283
      %v289 = vmul.f32 %v250, %v283
      %v290 = vmul.f32 %v251, %v283
      %v291 = vmul.f32 %v252, %v283
      %v292 = vmul.f32 %v253, %v283
      %v293 = vmul.f32 %v254, %v283
      %v294 = vmul.f32 %v255, %v283
      %v295 = vmul.f32 %v256, %v283
      %v296 = vmul.f32 %v257, %v283
      %v297 = vmul.f32 %v258, %v283
      %v298 = vmul.f32 %v259, %v283
      %v299 = vmul.f32 %v260, %v283
      %v300 = vmul.f32 %v261, %v283
      %v301 = vmul.f32 %v262, %v283
      %v302 = vmul.f32 %v263, %v283
      %v303 = vmul.f32 %v264, %v283
      %v304 = vmul.f32 %v265, %v283
      %v305 = vmul.f32 %v266, %v283
      %v306 = vmul.f32 %v267, %v283
      %v307 = vmul.f32 %v268, %v283
      %v308 = vmul.f32 %v269, %v283
      %v309 = vmul.f32 %v270, %v283
      %v310 = vmul.f32 %v271, %v283
      %v311 = vmul.f32 %v272, %v283
      %v312 = vmul.f32 %v273, %v283
      %v313 = vmul.f32 %v274, %v283
      %v314 = vmul.f32 %v275, %v283
      %v315 = vmul.f32 %v276, %v283
      %v316 = vmul.f32 %v277, %v283
      %v317 = vld [vmem:[%s2] sm:$0x1]
      %v319 = vlaneseq
      %v320 = vshrl.u32 %v319, 7
      %v321 = vsub.s32 0, %v320
      %v322 = vrot.slane %v317, %v321
      %v324 = vadd.f32 %v285, %v322
      %v325 = vadd.f32 %v286, %v322
      %v326 = vadd.f32 %v287, %v322
      %v327 = vadd.f32 %v288, %v322
      %v328 = vadd.f32 %v289, %v322
      %v329 = vadd.f32 %v290, %v322
      %v330 = vadd.f32 %v291, %v322
      %v331 = vadd.f32 %v292, %v322
      %v332 = vadd.f32 %v293, %v322
      %v333 = vadd.f32 %v294, %v322
      %v334 = vadd.f32 %v295, %v322
      %v335 = vadd.f32 %v296, %v322
      %v336 = vadd.f32 %v297, %v322
      %v337 = vadd.f32 %v298, %v322
      %v338 = vadd.f32 %v299, %v322
      %v339 = vadd.f32 %v300, %v322
      %v340 = vadd.f32 %v301, %v322
      %v341 = vadd.f32 %v302, %v322
      %v342 = vadd.f32 %v303, %v322
      %v343 = vadd.f32 %v304, %v322
      %v344 = vadd.f32 %v305, %v322
      %v345 = vadd.f32 %v306, %v322
      %v346 = vadd.f32 %v307, %v322
      %v347 = vadd.f32 %v308, %v322
      %v348 = vadd.f32 %v309, %v322
      %v349 = vadd.f32 %v310, %v322
      %v350 = vadd.f32 %v311, %v322
      %v351 = vadd.f32 %v312, %v322
      %v352 = vadd.f32 %v313, %v322
      %v353 = vadd.f32 %v314, %v322
      %v354 = vadd.f32 %v315, %v322
      %v355 = vadd.f32 %v316, %v322
      %v356 = vmax.f32 %v324, 0.0
      %v357 = vmax.f32 %v325, 0.0
      %v358 = vmax.f32 %v326, 0.0
      %v359 = vmax.f32 %v327, 0.0
      %v360 = vmax.f32 %v328, 0.0
      %v361 = vmax.f32 %v329, 0.0
      %v362 = vmax.f32 %v330, 0.0
      %v363 = vmax.f32 %v331, 0.0
      %v364 = vmax.f32 %v332, 0.0
      %v365 = vmax.f32 %v333, 0.0
      %v366 = vmax.f32 %v334, 0.0
      %v367 = vmax.f32 %v335, 0.0
      %v368 = vmax.f32 %v336, 0.0
      %v369 = vmax.f32 %v337, 0.0
      %v370 = vmax.f32 %v338, 0.0
      %v371 = vmax.f32 %v339, 0.0
      %v372 = vmax.f32 %v340, 0.0
      %v373 = vmax.f32 %v341, 0.0
      %v374 = vmax.f32 %v342, 0.0
      %v375 = vmax.f32 %v343, 0.0
      %v376 = vmax.f32 %v344, 0.0
      %v377 = vmax.f32 %v345, 0.0
      %v378 = vmax.f32 %v346, 0.0
      %v379 = vmax.f32 %v347, 0.0
      %v380 = vmax.f32 %v348, 0.0
      %v381 = vmax.f32 %v349, 0.0
      %v382 = vmax.f32 %v350, 0.0
      %v383 = vmax.f32 %v351, 0.0
      %v384 = vmax.f32 %v352, 0.0
      %v385 = vmax.f32 %v353, 0.0
      %v386 = vmax.f32 %v354, 0.0
      %v387 = vmax.f32 %v355, 0.0
      %vm388 = vcmask 261120
      %389 = vst.msk [vmem:[#allocation2] sm:$0xff] %vm388, 0.0
      %390 = vst.msk [vmem:[#allocation2 + $0x8] sm:$0xff] %vm388, 0.0
      %vm391 = vcmask 254976
      %392 = vst.msk [vmem:[#allocation2 + $0x10] sm:$0x3] %vm391, 0.0
      %393 = vst.msk [vmem:[#allocation2 + $0x18] sm:$0xff] %vm388, 0.0
      %394 = vst.msk [vmem:[#allocation2 + $0x20] sm:$0xff] %vm388, 0.0
      %395 = vst.msk [vmem:[#allocation2 + $0x28] sm:$0x3] %vm391, 0.0
      %396 = vst.msk [vmem:[#allocation2 + $0x30] sm:$0xff] %vm388, 0.0
      %397 = vst.msk [vmem:[#allocation2 + $0x38] sm:$0xff] %vm388, 0.0
      %398 = vst.msk [vmem:[#allocation2 + $0x40] sm:$0x3] %vm391, 0.0
      %399 = vst.msk [vmem:[#allocation2 + $0x48] sm:$0xff] %vm388, 0.0
      %400 = vst.msk [vmem:[#allocation2 + $0x50] sm:$0xff] %vm388, 0.0
      %401 = vst.msk [vmem:[#allocation2 + $0x58] sm:$0x3] %vm391, 0.0
      %402 = vst.msk [vmem:[#allocation2 + $0x60] sm:$0xff] %vm388, 0.0
      %403 = vst.msk [vmem:[#allocation2 + $0x68] sm:$0xff] %vm388, 0.0
      %404 = vst.msk [vmem:[#allocation2 + $0x70] sm:$0x3] %vm391, 0.0
      %405 = vst.msk [vmem:[#allocation2 + $0x78] sm:$0xff] %vm388, 0.0
      %406 = vst.msk [vmem:[#allocation2 + $0x80] sm:$0xff] %vm388, 0.0
      %407 = vst.msk [vmem:[#allocation2 + $0x88] sm:$0x3] %vm391, 0.0
      %408 = vst.msk [vmem:[#allocation2 + $0x90] sm:$0xff] %vm388, 0.0
      %409 = vst.msk [vmem:[#allocation2 + $0x98] sm:$0xff] %vm388, 0.0
      %410 = vst.msk [vmem:[#allocation2 + $0xa0] sm:$0x3] %vm391, 0.0
      %411 = vst.msk [vmem:[#allocation2 + $0xa8] sm:$0xff] %vm388, 0.0
      %412 = vst.msk [vmem:[#allocation2 + $0xb0] sm:$0xff] %vm388, 0.0
      %413 = vst.msk [vmem:[#allocation2 + $0xb8] sm:$0x3] %vm391, 0.0
      %414 = vst.msk [vmem:[#allocation2 + $0xc0] sm:$0xff] %vm388, 0.0
      %415 = vst.msk [vmem:[#allocation2 + $0xc8] sm:$0xff] %vm388, 0.0
      %416 = vst.msk [vmem:[#allocation2 + $0xd0] sm:$0x3] %vm391, 0.0
      %417 = vst.msk [vmem:[#allocation2 + $0xd8] sm:$0xff] %vm388, 0.0
      %418 = vst.msk [vmem:[#allocation2 + $0xe0] sm:$0xff] %vm388, 0.0
      %419 = vst.msk [vmem:[#allocation2 + $0xe8] sm:$0x3] %vm391, 0.0
      %420 = vst.msk [vmem:[#allocation2 + $0xf0] sm:$0xff] %vm388, 0.0
      %421 = vst.msk [vmem:[#allocation2 + $0xf8] sm:$0xff] %vm388, 0.0
      %422 = vst.msk [vmem:[#allocation2 + $0x100] sm:$0x3] %vm391, 0.0
      %423 = vst.msk [vmem:[#allocation2 + $0x108] sm:$0xff] %vm388, 0.0
      %424 = vst.msk [vmem:[#allocation2 + $0x110] sm:$0xff] %vm388, 0.0
      %425 = vst.msk [vmem:[#allocation2 + $0x118] sm:$0x3] %vm391, 0.0
      %426 = vst.msk [vmem:[#allocation2 + $0x120] sm:$0xff] %vm388, 0.0
      %427 = vst.msk [vmem:[#allocation2 + $0x128] sm:$0xff] %vm388, 0.0
      %428 = vst.msk [vmem:[#allocation2 + $0x130] sm:$0x3] %vm391, 0.0
      %429 = vst.msk [vmem:[#allocation2 + $0x138] sm:$0xff] %vm388, 0.0
      %430 = vst.msk [vmem:[#allocation2 + $0x140] sm:$0xff] %vm388, 0.0
      %431 = vst.msk [vmem:[#allocation2 + $0x148] sm:$0x3] %vm391, 0.0
      %432 = vst.msk [vmem:[#allocation2 + $0x150] sm:$0xff] %vm388, 0.0
      %433 = vst.msk [vmem:[#allocation2 + $0x158] sm:$0xff] %vm388, 0.0
      %434 = vst.msk [vmem:[#allocation2 + $0x160] sm:$0x3] %vm391, 0.0
      %435 = vst.msk [vmem:[#allocation2 + $0x168] sm:$0xff] %vm388, 0.0
      %436 = vst.msk [vmem:[#allocation2 + $0x170] sm:$0xff] %vm388, 0.0
      %437 = vst.msk [vmem:[#allocation2 + $0x178] sm:$0x3] %vm391, 0.0
      %438 = vst.msk [vmem:[#allocation2 + $0x180] sm:$0xff] %vm388, 0.0
      %439 = vst.msk [vmem:[#allocation2 + $0x188] sm:$0xff] %vm388, 0.0
      %440 = vst.msk [vmem:[#allocation2 + $0x190] sm:$0x3] %vm391, 0.0
      %441 = vst.msk [vmem:[#allocation2 + $0x198] sm:$0xff] %vm388, 0.0
      %442 = vst.msk [vmem:[#allocation2 + $0x1a0] sm:$0xff] %vm388, 0.0
      %443 = vst.msk [vmem:[#allocation2 + $0x1a8] sm:$0x3] %vm391, 0.0
      %s444 = scalar_lea.vmem [#allocation2], 24
      %445 = vst.msk [vmem:[%s444 + $0x1] sm:$0xff] %vm388, %v356
      %446 = vst.msk [vmem:[%s444 + $0x9] sm:$0xff] %vm388, %v357
      %447 = vst.msk [vmem:[%s444 + $0x19] sm:$0xff] %vm388, %v358
      %448 = vst.msk [vmem:[%s444 + $0x21] sm:$0xff] %vm388, %v359
      %449 = vst.msk [vmem:[%s444 + $0x31] sm:$0xff] %vm388, %v360
      %450 = vst.msk [vmem:[%s444 + $0x39] sm:$0xff] %vm388, %v361
      %451 = vst.msk [vmem:[%s444 + $0x49] sm:$0xff] %vm388, %v362
      %452 = vst.msk [vmem:[%s444 + $0x51] sm:$0xff] %vm388, %v363
      %453 = vst.msk [vmem:[%s444 + $0x61] sm:$0xff] %vm388, %v364
      %454 = vst.msk [vmem:[%s444 + $0x69] sm:$0xff] %vm388, %v365
      %455 = vst.msk [vmem:[%s444 + $0x79] sm:$0xff] %vm388, %v366
      %456 = vst.msk [vmem:[%s444 + $0x81] sm:$0xff] %vm388, %v367
      %457 = vst.msk [vmem:[%s444 + $0x91] sm:$0xff] %vm388, %v368
      %458 = vst.msk [vmem:[%s444 + $0x99] sm:$0xff] %vm388, %v369
      %459 = vst.msk [vmem:[%s444 + $0xa9] sm:$0xff] %vm388, %v370
      %460 = vst.msk [vmem:[%s444 + $0xb1] sm:$0xff] %vm388, %v371
      %461 = vst.msk [vmem:[%s444 + $0xc1] sm:$0xff] %vm388, %v372
      %462 = vst.msk [vmem:[%s444 + $0xc9] sm:$0xff] %vm388, %v373
      %463 = vst.msk [vmem:[%s444 + $0xd9] sm:$0xff] %vm388, %v374
      %464 = vst.msk [vmem:[%s444 + $0xe1] sm:$0xff] %vm388, %v375
      %465 = vst.msk [vmem:[%s444 + $0xf1] sm:$0xff] %vm388, %v376
      %466 = vst.msk [vmem:[%s444 + $0xf9] sm:$0xff] %vm388, %v377
      %467 = vst.msk [vmem:[%s444 + $0x109] sm:$0xff] %vm388, %v378
      %468 = vst.msk [vmem:[%s444 + $0x111] sm:$0xff] %vm388, %v379
      %469 = vst.msk [vmem:[%s444 + $0x121] sm:$0xff] %vm388, %v380
      %470 = vst.msk [vmem:[%s444 + $0x129] sm:$0xff] %vm388, %v381
      %471 = vst.msk [vmem:[%s444 + $0x139] sm:$0xff] %vm388, %v382
      %472 = vst.msk [vmem:[%s444 + $0x141] sm:$0xff] %vm388, %v383
      %473 = vst.msk [vmem:[%s444 + $0x151] sm:$0xff] %vm388, %v384
      %474 = vst.msk [vmem:[%s444 + $0x159] sm:$0xff] %vm388, %v385
      %475 = vst.msk [vmem:[%s444 + $0x169] sm:$0xff] %vm388, %v386
      %476 = vst.msk [vmem:[%s444 + $0x171] sm:$0xff] %vm388, %v387
      %v477 = vld [vmem:[#allocation2] sm:$0xff]
      %v478 = vld [vmem:[#allocation2 + $0x8] sm:$0xff]
      %v479 = vld [vmem:[#allocation2 + $0x18] sm:$0xff]
      %v480 = vld [vmem:[#allocation2 + $0x20] sm:$0xff]
      %v481 = vld [vmem:[#allocation2 + $0x30] sm:$0xff]
      %v482 = vld [vmem:[#allocation2 + $0x38] sm:$0xff]
      %v483 = vld [vmem:[#allocation2 + $0x48] sm:$0xff]
      %v484 = vld [vmem:[#allocation2 + $0x50] sm:$0xff]
      %v485 = vld [vmem:[#allocation2 + $0x60] sm:$0xff]
      %v486 = vld [vmem:[#allocation2 + $0x68] sm:$0xff]
      %v487 = vld [vmem:[#allocation2 + $0x78] sm:$0xff]
      %v488 = vld [vmem:[#allocation2 + $0x80] sm:$0xff]
      %v489 = vld [vmem:[#allocation2 + $0x90] sm:$0xff]
      %v490 = vld [vmem:[#allocation2 + $0x98] sm:$0xff]
      %v491 = vld [vmem:[#allocation2 + $0xa8] sm:$0xff]
      %v492 = vld [vmem:[#allocation2 + $0xb0] sm:$0xff]
      %v493 = vld [vmem:[#allocation2 + $0xc0] sm:$0xff]
      %v494 = vld [vmem:[#allocation2 + $0xc8] sm:$0xff]
      %v495 = vld [vmem:[#allocation2 + $0xd8] sm:$0xff]
      %v496 = vld [vmem:[#allocation2 + $0xe0] sm:$0xff]
      %v497 = vld [vmem:[#allocation2 + $0xf0] sm:$0xff]
      %v498 = vld [vmem:[#allocation2 + $0xf8] sm:$0xff]
      %v499 = vld [vmem:[#allocation2 + $0x108] sm:$0xff]
      %v500 = vld [vmem:[#allocation2 + $0x110] sm:$0xff]
      %v501 = vld [vmem:[#allocation2 + $0x120] sm:$0xff]
      %v502 = vld [vmem:[#allocation2 + $0x128] sm:$0xff]
      %v503 = vld [vmem:[#allocation2 + $0x138] sm:$0xff]
      %v504 = vld [vmem:[#allocation2 + $0x140] sm:$0xff]
      %v505 = vld [vmem:[#allocation2 + $0x150] sm:$0xff]
      %v506 = vld [vmem:[#allocation2 + $0x158] sm:$0xff]
      %v507 = vld [vmem:[#allocation2 + $0x168] sm:$0xff]
      %v508 = vld [vmem:[#allocation2 + $0x170] sm:$0xff]
      %v509 = vld [vmem:[#allocation2 + $0x1] sm:$0xff]
      %v510 = vld [vmem:[#allocation2 + $0x9] sm:$0xff]
      %v511 = vld [vmem:[#allocation2 + $0x19] sm:$0xff]
      %v512 = vld [vmem:[#allocation2 + $0x21] sm:$0xff]
      %v513 = vld [vmem:[#allocation2 + $0x31] sm:$0xff]
      %v514 = vld [vmem:[#allocation2 + $0x39] sm:$0xff]
      %v515 = vld [vmem:[#allocation2 + $0x49] sm:$0xff]
      %v516 = vld [vmem:[#allocation2 + $0x51] sm:$0xff]
      %v517 = vld [vmem:[#allocation2 + $0x61] sm:$0xff]
      %v518 = vld [vmem:[#allocation2 + $0x69] sm:$0xff]
      %v519 = vld [vmem:[#allocation2 + $0x79] sm:$0xff]
      %v520 = vld [vmem:[#allocation2 + $0x81] sm:$0xff]
      %v521 = vld [vmem:[#allocation2 + $0x91] sm:$0xff]
      %v522 = vld [vmem:[#allocation2 + $0x99] sm:$0xff]
      %v523 = vld [vmem:[#allocation2 + $0xa9] sm:$0xff]
      %v524 = vld [vmem:[#allocation2 + $0xb1] sm:$0xff]
      %v525 = vld [vmem:[#allocation2 + $0xc1] sm:$0xff]
      %v526 = vld [vmem:[#allocation2 + $0xc9] sm:$0xff]
      %v527 = vld [vmem:[#allocation2 + $0xd9] sm:$0xff]
      %v528 = vld [vmem:[#allocation2 + $0xe1] sm:$0xff]
      %v529 = vld [vmem:[#allocation2 + $0xf1] sm:$0xff]
      %v530 = vld [vmem:[#allocation2 + $0xf9] sm:$0xff]
      %v531 = vld [vmem:[#allocation2 + $0x109] sm:$0xff]
      %v532 = vld [vmem:[#allocation2 + $0x111] sm:$0xff]
      %v533 = vld [vmem:[#allocation2 + $0x121] sm:$0xff]
      %v534 = vld [vmem:[#allocation2 + $0x129] sm:$0xff]
      %v535 = vld [vmem:[#allocation2 + $0x139] sm:$0xff]
      %v536 = vld [vmem:[#allocation2 + $0x141] sm:$0xff]
      %v537 = vld [vmem:[#allocation2 + $0x151] sm:$0xff]
      %v538 = vld [vmem:[#allocation2 + $0x159] sm:$0xff]
      %v539 = vld [vmem:[#allocation2 + $0x169] sm:$0xff]
      %v540 = vld [vmem:[#allocation2 + $0x171] sm:$0xff]
      %v541 = vld [vmem:[#allocation2 + $0x2] sm:$0xff]
      %v542 = vld [vmem:[#allocation2 + $0xa] sm:$0xff]
      %v543 = vld [vmem:[#allocation2 + $0x1a] sm:$0xff]
      %v544 = vld [vmem:[#allocation2 + $0x22] sm:$0xff]
      %v545 = vld [vmem:[#allocation2 + $0x32] sm:$0xff]
      %v546 = vld [vmem:[#allocation2 + $0x3a] sm:$0xff]
      %v547 = vld [vmem:[#allocation2 + $0x4a] sm:$0xff]
      %v548 = vld [vmem:[#allocation2 + $0x52] sm:$0xff]
      %v549 = vld [vmem:[#allocation2 + $0x62] sm:$0xff]
      %v550 = vld [vmem:[#allocation2 + $0x6a] sm:$0xff]
      %v551 = vld [vmem:[#allocation2 + $0x7a] sm:$0xff]
      %v552 = vld [vmem:[#allocation2 + $0x82] sm:$0xff]
      %v553 = vld [vmem:[#allocation2 + $0x92] sm:$0xff]
      %v554 = vld [vmem:[#allocation2 + $0x9a] sm:$0xff]
      %v555 = vld [vmem:[#allocation2 + $0xaa] sm:$0xff]
      %v556 = vld [vmem:[#allocation2 + $0xb2] sm:$0xff]
      %v557 = vld [vmem:[#allocation2 + $0xc2] sm:$0xff]
      %v558 = vld [vmem:[#allocation2 + $0xca] sm:$0xff]
      %v559 = vld [vmem:[#allocation2 + $0xda] sm:$0xff]
      %v560 = vld [vmem:[#allocation2 + $0xe2] sm:$0xff]
      %v561 = vld [vmem:[#allocation2 + $0xf2] sm:$0xff]
      %v562 = vld [vmem:[#allocation2 + $0xfa] sm:$0xff]
      %v563 = vld [vmem:[#allocation2 + $0x10a] sm:$0xff]
      %v564 = vld [vmem:[#allocation2 + $0x112] sm:$0xff]
      %v565 = vld [vmem:[#allocation2 + $0x122] sm:$0xff]
      %v566 = vld [vmem:[#allocation2 + $0x12a] sm:$0xff]
      %v567 = vld [vmem:[#allocation2 + $0x13a] sm:$0xff]
      %v568 = vld [vmem:[#allocation2 + $0x142] sm:$0xff]
      %v569 = vld [vmem:[#allocation2 + $0x152] sm:$0xff]
      %v570 = vld [vmem:[#allocation2 + $0x15a] sm:$0xff]
      %v571 = vld [vmem:[#allocation2 + $0x16a] sm:$0xff]
      %v572 = vld [vmem:[#allocation2 + $0x172] sm:$0xff]
      %v573 = vld [vmem:[%s444] sm:$0xff]
      %v574 = vld [vmem:[%s444 + $0x8] sm:$0xff]
      %v575 = vld [vmem:[%s444 + $0x18] sm:$0xff]
      %v576 = vld [vmem:[%s444 + $0x20] sm:$0xff]
      %v577 = vld [vmem:[%s444 + $0x30] sm:$0xff]
      %v578 = vld [vmem:[%s444 + $0x38] sm:$0xff]
      %v579 = vld [vmem:[%s444 + $0x48] sm:$0xff]
      %v580 = vld [vmem:[%s444 + $0x50] sm:$0xff]
      %v581 = vld [vmem:[%s444 + $0x60] sm:$0xff]
      %v582 = vld [vmem:[%s444 + $0x68] sm:$0xff]
      %v583 = vld [vmem:[%s444 + $0x78] sm:$0xff]
      %v584 = vld [vmem:[%s444 + $0x80] sm:$0xff]
      %v585 = vld [vmem:[%s444 + $0x90] sm:$0xff]
      %v586 = vld [vmem:[%s444 + $0x98] sm:$0xff]
      %v587 = vld [vmem:[%s444 + $0xa8] sm:$0xff]
      %v588 = vld [vmem:[%s444 + $0xb0] sm:$0xff]
      %v589 = vld [vmem:[%s444 + $0xc0] sm:$0xff]
      %v590 = vld [vmem:[%s444 + $0xc8] sm:$0xff]
      %v591 = vld [vmem:[%s444 + $0xd8] sm:$0xff]
      %v592 = vld [vmem:[%s444 + $0xe0] sm:$0xff]
      %v593 = vld [vmem:[%s444 + $0xf0] sm:$0xff]
      %v594 = vld [vmem:[%s444 + $0xf8] sm:$0xff]
      %v595 = vld [vmem:[%s444 + $0x108] sm:$0xff]
      %v596 = vld [vmem:[%s444 + $0x110] sm:$0xff]
      %v597 = vld [vmem:[%s444 + $0x120] sm:$0xff]
      %v598 = vld [vmem:[%s444 + $0x128] sm:$0xff]
      %v599 = vld [vmem:[%s444 + $0x138] sm:$0xff]
      %v600 = vld [vmem:[%s444 + $0x140] sm:$0xff]
      %v601 = vld [vmem:[%s444 + $0x150] sm:$0xff]
      %v602 = vld [vmem:[%s444 + $0x158] sm:$0xff]
      %v603 = vld [vmem:[%s444 + $0x168] sm:$0xff]
      %v604 = vld [vmem:[%s444 + $0x170] sm:$0xff]
      %v605 = vld [vmem:[%s444 + $0x1] sm:$0xff]
      %v606 = vld [vmem:[%s444 + $0x9] sm:$0xff]
      %v607 = vld [vmem:[%s444 + $0x19] sm:$0xff]
      %v608 = vld [vmem:[%s444 + $0x21] sm:$0xff]
      %v609 = vld [vmem:[%s444 + $0x31] sm:$0xff]
      %v610 = vld [vmem:[%s444 + $0x39] sm:$0xff]
      %v611 = vld [vmem:[%s444 + $0x49] sm:$0xff]
      %v612 = vld [vmem:[%s444 + $0x51] sm:$0xff]
      %v613 = vld [vmem:[%s444 + $0x61] sm:$0xff]
      %v614 = vld [vmem:[%s444 + $0x69] sm:$0xff]
      %v615 = vld [vmem:[%s444 + $0x79] sm:$0xff]
      %v616 = vld [vmem:[%s444 + $0x81] sm:$0xff]
      %v617 = vld [vmem:[%s444 + $0x91] sm:$0xff]
      %v618 = vld [vmem:[%s444 + $0x99] sm:$0xff]
      %v619 = vld [vmem:[%s444 + $0xa9] sm:$0xff]
      %v620 = vld [vmem:[%s444 + $0xb1] sm:$0xff]
      %v621 = vld [vmem:[%s444 + $0xc1] sm:$0xff]
      %v622 = vld [vmem:[%s444 + $0xc9] sm:$0xff]
      %v623 = vld [vmem:[%s444 + $0xd9] sm:$0xff]
      %v624 = vld [vmem:[%s444 + $0xe1] sm:$0xff]
      %v625 = vld [vmem:[%s444 + $0xf1] sm:$0xff]
      %v626 = vld [vmem:[%s444 + $0xf9] sm:$0xff]
      %v627 = vld [vmem:[%s444 + $0x109] sm:$0xff]
      %v628 = vld [vmem:[%s444 + $0x111] sm:$0xff]
      %v629 = vld [vmem:[%s444 + $0x121] sm:$0xff]
      %v630 = vld [vmem:[%s444 + $0x129] sm:$0xff]
      %v631 = vld [vmem:[%s444 + $0x139] sm:$0xff]
      %v632 = vld [vmem:[%s444 + $0x141] sm:$0xff]
      %v633 = vld [vmem:[%s444 + $0x151] sm:$0xff]
      %v634 = vld [vmem:[%s444 + $0x159] sm:$0xff]
      %v635 = vld [vmem:[%s444 + $0x169] sm:$0xff]
      %v636 = vld [vmem:[%s444 + $0x171] sm:$0xff]
      %v637 = vld [vmem:[%s444 + $0x2] sm:$0xff]
      %v638 = vld [vmem:[%s444 + $0xa] sm:$0xff]
      %v639 = vld [vmem:[%s444 + $0x1a] sm:$0xff]
      %v640 = vld [vmem:[%s444 + $0x22] sm:$0xff]
      %v641 = vld [vmem:[%s444 + $0x32] sm:$0xff]
      %v642 = vld [vmem:[%s444 + $0x3a] sm:$0xff]
      %v643 = vld [vmem:[%s444 + $0x4a] sm:$0xff]
      %v644 = vld [vmem:[%s444 + $0x52] sm:$0xff]
      %v645 = vld [vmem:[%s444 + $0x62] sm:$0xff]
      %v646 = vld [vmem:[%s444 + $0x6a] sm:$0xff]
      %v647 = vld [vmem:[%s444 + $0x7a] sm:$0xff]
      %v648 = vld [vmem:[%s444 + $0x82] sm:$0xff]
      %v649 = vld [vmem:[%s444 + $0x92] sm:$0xff]
      %v650 = vld [vmem:[%s444 + $0x9a] sm:$0xff]
      %v651 = vld [vmem:[%s444 + $0xaa] sm:$0xff]
      %v652 = vld [vmem:[%s444 + $0xb2] sm:$0xff]
      %v653 = vld [vmem:[%s444 + $0xc2] sm:$0xff]
      %v654 = vld [vmem:[%s444 + $0xca] sm:$0xff]
      %v655 = vld [vmem:[%s444 + $0xda] sm:$0xff]
      %v656 = vld [vmem:[%s444 + $0xe2] sm:$0xff]
      %v657 = vld [vmem:[%s444 + $0xf2] sm:$0xff]
      %v658 = vld [vmem:[%s444 + $0xfa] sm:$0xff]
      %v659 = vld [vmem:[%s444 + $0x10a] sm:$0xff]
      %v660 = vld [vmem:[%s444 + $0x112] sm:$0xff]
      %v661 = vld [vmem:[%s444 + $0x122] sm:$0xff]
      %v662 = vld [vmem:[%s444 + $0x12a] sm:$0xff]
      %v663 = vld [vmem:[%s444 + $0x13a] sm:$0xff]
      %v664 = vld [vmem:[%s444 + $0x142] sm:$0xff]
      %v665 = vld [vmem:[%s444 + $0x152] sm:$0xff]
      %v666 = vld [vmem:[%s444 + $0x15a] sm:$0xff]
      %v667 = vld [vmem:[%s444 + $0x16a] sm:$0xff]
      %v668 = vld [vmem:[%s444 + $0x172] sm:$0xff]
      %s669 = scalar_lea.vmem [#allocation2], 48
      %v670 = vld [vmem:[%s669] sm:$0xff]
      %v671 = vld [vmem:[%s669 + $0x8] sm:$0xff]
      %v672 = vld [vmem:[%s669 + $0x18] sm:$0xff]
      %v673 = vld [vmem:[%s669 + $0x20] sm:$0xff]
      %v674 = vld [vmem:[%s669 + $0x30] sm:$0xff]
      %v675 = vld [vmem:[%s669 + $0x38] sm:$0xff]
      %v676 = vld [vmem:[%s669 + $0x48] sm:$0xff]
      %v677 = vld [vmem:[%s669 + $0x50] sm:$0xff]
      %v678 = vld [vmem:[%s669 + $0x60] sm:$0xff]
      %v679 = vld [vmem:[%s669 + $0x68] sm:$0xff]
      %v680 = vld [vmem:[%s669 + $0x78] sm:$0xff]
      %v681 = vld [vmem:[%s669 + $0x80] sm:$0xff]
      %v682 = vld [vmem:[%s669 + $0x90] sm:$0xff]
      %v683 = vld [vmem:[%s669 + $0x98] sm:$0xff]
      %v684 = vld [vmem:[%s669 + $0xa8] sm:$0xff]
      %v685 = vld [vmem:[%s669 + $0xb0] sm:$0xff]
      %v686 = vld [vmem:[%s669 + $0xc0] sm:$0xff]
      %v687 = vld [vmem:[%s669 + $0xc8] sm:$0xff]
      %v688 = vld [vmem:[%s669 + $0xd8] sm:$0xff]
      %v689 = vld [vmem:[%s669 + $0xe0] sm:$0xff]
      %v690 = vld [vmem:[%s669 + $0xf0] sm:$0xff]
      %v691 = vld [vmem:[%s669 + $0xf8] sm:$0xff]
      %v692 = vld [vmem:[%s669 + $0x108] sm:$0xff]
      %v693 = vld [vmem:[%s669 + $0x110] sm:$0xff]
      %v694 = vld [vmem:[%s669 + $0x120] sm:$0xff]
      %v695 = vld [vmem:[%s669 + $0x128] sm:$0xff]
      %v696 = vld [vmem:[%s669 + $0x138] sm:$0xff]
      %v697 = vld [vmem:[%s669 + $0x140] sm:$0xff]
      %v698 = vld [vmem:[%s669 + $0x150] sm:$0xff]
      %v699 = vld [vmem:[%s669 + $0x158] sm:$0xff]
      %v700 = vld [vmem:[%s669 + $0x168] sm:$0xff]
      %v701 = vld [vmem:[%s669 + $0x170] sm:$0xff]
      %v702 = vld [vmem:[%s669 + $0x1] sm:$0xff]
      %v703 = vld [vmem:[%s669 + $0x9] sm:$0xff]
      %v704 = vld [vmem:[%s669 + $0x19] sm:$0xff]
      %v705 = vld [vmem:[%s669 + $0x21] sm:$0xff]
      %v706 = vld [vmem:[%s669 + $0x31] sm:$0xff]
      %v707 = vld [vmem:[%s669 + $0x39] sm:$0xff]
      %v708 = vld [vmem:[%s669 + $0x49] sm:$0xff]
      %v709 = vld [vmem:[%s669 + $0x51] sm:$0xff]
      %v710 = vld [vmem:[%s669 + $0x61] sm:$0xff]
      %v711 = vld [vmem:[%s669 + $0x69] sm:$0xff]
      %v712 = vld [vmem:[%s669 + $0x79] sm:$0xff]
      %v713 = vld [vmem:[%s669 + $0x81] sm:$0xff]
      %v714 = vld [vmem:[%s669 + $0x91] sm:$0xff]
      %v715 = vld [vmem:[%s669 + $0x99] sm:$0xff]
      %v716 = vld [vmem:[%s669 + $0xa9] sm:$0xff]
      %v717 = vld [vmem:[%s669 + $0xb1] sm:$0xff]
      %v718 = vld [vmem:[%s669 + $0xc1] sm:$0xff]
      %v719 = vld [vmem:[%s669 + $0xc9] sm:$0xff]
      %v720 = vld [vmem:[%s669 + $0xd9] sm:$0xff]
      %v721 = vld [vmem:[%s669 + $0xe1] sm:$0xff]
      %v722 = vld [vmem:[%s669 + $0xf1] sm:$0xff]
      %v723 = vld [vmem:[%s669 + $0xf9] sm:$0xff]
      %v724 = vld [vmem:[%s669 + $0x109] sm:$0xff]
      %v725 = vld [vmem:[%s669 + $0x111] sm:$0xff]
      %v726 = vld [vmem:[%s669 + $0x121] sm:$0xff]
      %v727 = vld [vmem:[%s669 + $0x129] sm:$0xff]
      %v728 = vld [vmem:[%s669 + $0x139] sm:$0xff]
      %v729 = vld [vmem:[%s669 + $0x141] sm:$0xff]
      %v730 = vld [vmem:[%s669 + $0x151] sm:$0xff]
      %v731 = vld [vmem:[%s669 + $0x159] sm:$0xff]
      %v732 = vld [vmem:[%s669 + $0x169] sm:$0xff]
      %v733 = vld [vmem:[%s669 + $0x171] sm:$0xff]
      %v734 = vld [vmem:[%s669 + $0x2] sm:$0xff]
      %v735 = vld [vmem:[%s669 + $0xa] sm:$0xff]
      %v736 = vld [vmem:[%s669 + $0x1a] sm:$0xff]
      %v737 = vld [vmem:[%s669 + $0x22] sm:$0xff]
      %v738 = vld [vmem:[%s669 + $0x32] sm:$0xff]
      %v739 = vld [vmem:[%s669 + $0x3a] sm:$0xff]
      %v740 = vld [vmem:[%s669 + $0x4a] sm:$0xff]
      %v741 = vld [vmem:[%s669 + $0x52] sm:$0xff]
      %v742 = vld [vmem:[%s669 + $0x62] sm:$0xff]
      %v743 = vld [vmem:[%s669 + $0x6a] sm:$0xff]
      %v744 = vld [vmem:[%s669 + $0x7a] sm:$0xff]
      %v745 = vld [vmem:[%s669 + $0x82] sm:$0xff]
      %v746 = vld [vmem:[%s669 + $0x92] sm:$0xff]
      %v747 = vld [vmem:[%s669 + $0x9a] sm:$0xff]
      %v748 = vld [vmem:[%s669 + $0xaa] sm:$0xff]
      %v749 = vld [vmem:[%s669 + $0xb2] sm:$0xff]
      %v750 = vld [vmem:[%s669 + $0xc2] sm:$0xff]
      %v751 = vld [vmem:[%s669 + $0xca] sm:$0xff]
      %v752 = vld [vmem:[%s669 + $0xda] sm:$0xff]
      %v753 = vld [vmem:[%s669 + $0xe2] sm:$0xff]
      %v754 = vld [vmem:[%s669 + $0xf2] sm:$0xff]
      %v755 = vld [vmem:[%s669 + $0xfa] sm:$0xff]
      %v756 = vld [vmem:[%s669 + $0x10a] sm:$0xff]
      %v757 = vld [vmem:[%s669 + $0x112] sm:$0xff]
      %v758 = vld [vmem:[%s669 + $0x122] sm:$0xff]
      %v759 = vld [vmem:[%s669 + $0x12a] sm:$0xff]
      %v760 = vld [vmem:[%s669 + $0x13a] sm:$0xff]
      %v761 = vld [vmem:[%s669 + $0x142] sm:$0xff]
      %v762 = vld [vmem:[%s669 + $0x152] sm:$0xff]
      %v763 = vld [vmem:[%s669 + $0x15a] sm:$0xff]
      %v764 = vld [vmem:[%s669 + $0x16a] sm:$0xff]
      %v765 = vld [vmem:[%s669 + $0x172] sm:$0xff]
      %798 = vrot.lane.b32.xlu0 %v509, 32
      %v799 = vpop.permute.xlu0 %798
      %800 = vrot.lane.b32.xlu0 %v510, 32
      %v801 = vpop.permute.xlu0 %800
      %802 = vrot.lane.b32.xlu0 %v511, 32
      %v803 = vpop.permute.xlu0 %802
      %804 = vrot.lane.b32.xlu0 %v512, 32
      %v805 = vpop.permute.xlu0 %804
      %806 = vrot.lane.b32.xlu0 %v513, 32
      %v807 = vpop.permute.xlu0 %806
      %808 = vrot.lane.b32.xlu0 %v514, 32
      %v809 = vpop.permute.xlu0 %808
      %810 = vrot.lane.b32.xlu0 %v515, 32
      %v811 = vpop.permute.xlu0 %810
      %812 = vrot.lane.b32.xlu0 %v516, 32
      %v813 = vpop.permute.xlu0 %812
      %814 = vrot.lane.b32.xlu0 %v517, 32
      %v815 = vpop.permute.xlu0 %814
      %816 = vrot.lane.b32.xlu0 %v518, 32
      %v817 = vpop.permute.xlu0 %816
      %818 = vrot.lane.b32.xlu0 %v519, 32
      %v819 = vpop.permute.xlu0 %818
      %820 = vrot.lane.b32.xlu0 %v520, 32
      %v821 = vpop.permute.xlu0 %820
      %822 = vrot.lane.b32.xlu0 %v521, 32
      %v823 = vpop.permute.xlu0 %822
      %824 = vrot.lane.b32.xlu0 %v522, 32
      %v825 = vpop.permute.xlu0 %824
      %826 = vrot.lane.b32.xlu0 %v523, 32
      %v827 = vpop.permute.xlu0 %826
      %828 = vrot.lane.b32.xlu0 %v524, 32
      %v829 = vpop.permute.xlu0 %828
      %830 = vrot.lane.b32.xlu0 %v525, 32
      %v831 = vpop.permute.xlu0 %830
      %832 = vrot.lane.b32.xlu0 %v526, 32
      %v833 = vpop.permute.xlu0 %832
      %834 = vrot.lane.b32.xlu0 %v527, 32
      %v835 = vpop.permute.xlu0 %834
      %836 = vrot.lane.b32.xlu0 %v528, 32
      %v837 = vpop.permute.xlu0 %836
      %838 = vrot.lane.b32.xlu0 %v529, 32
      %v839 = vpop.permute.xlu0 %838
      %840 = vrot.lane.b32.xlu0 %v530, 32
      %v841 = vpop.permute.xlu0 %840
      %842 = vrot.lane.b32.xlu0 %v531, 32
      %v843 = vpop.permute.xlu0 %842
      %844 = vrot.lane.b32.xlu0 %v532, 32
      %v845 = vpop.permute.xlu0 %844
      %846 = vrot.lane.b32.xlu0 %v533, 32
      %v847 = vpop.permute.xlu0 %846
      %848 = vrot.lane.b32.xlu0 %v534, 32
      %v849 = vpop.permute.xlu0 %848
      %850 = vrot.lane.b32.xlu0 %v535, 32
      %v851 = vpop.permute.xlu0 %850
      %852 = vrot.lane.b32.xlu0 %v536, 32
      %v853 = vpop.permute.xlu0 %852
      %854 = vrot.lane.b32.xlu0 %v537, 32
      %v855 = vpop.permute.xlu0 %854
      %856 = vrot.lane.b32.xlu0 %v538, 32
      %v857 = vpop.permute.xlu0 %856
      %858 = vrot.lane.b32.xlu0 %v539, 32
      %v859 = vpop.permute.xlu0 %858
      %860 = vrot.lane.b32.xlu0 %v540, 32
      %v861 = vpop.permute.xlu0 %860
      %926 = vrot.lane.b32.xlu0 %v541, 64
      %v927 = vpop.permute.xlu0 %926
      %928 = vrot.lane.b32.xlu0 %v542, 64
      %v929 = vpop.permute.xlu0 %928
      %930 = vrot.lane.b32.xlu0 %v543, 64
      %v931 = vpop.permute.xlu0 %930
      %932 = vrot.lane.b32.xlu0 %v544, 64
      %v933 = vpop.permute.xlu0 %932
      %934 = vrot.lane.b32.xlu0 %v545, 64
      %v935 = vpop.permute.xlu0 %934
      %936 = vrot.lane.b32.xlu0 %v546, 64
      %v937 = vpop.permute.xlu0 %936
      %938 = vrot.lane.b32.xlu0 %v547, 64
      %v939 = vpop.permute.xlu0 %938
      %940 = vrot.lane.b32.xlu0 %v548, 64
      %v941 = vpop.permute.xlu0 %940
      %942 = vrot.lane.b32.xlu0 %v549, 64
      %v943 = vpop.permute.xlu0 %942
      %944 = vrot.lane.b32.xlu0 %v550, 64
      %v945 = vpop.permute.xlu0 %944
      %946 = vrot.lane.b32.xlu0 %v551, 64
      %v947 = vpop.permute.xlu0 %946
      %948 = vrot.lane.b32.xlu0 %v552, 64
      %v949 = vpop.permute.xlu0 %948
      %950 = vrot.lane.b32.xlu0 %v553, 64
      %v951 = vpop.permute.xlu0 %950
      %952 = vrot.lane.b32.xlu0 %v554, 64
      %v953 = vpop.permute.xlu0 %952
      %954 = vrot.lane.b32.xlu0 %v555, 64
      %v955 = vpop.permute.xlu0 %954
      %956 = vrot.lane.b32.xlu0 %v556, 64
      %v957 = vpop.permute.xlu0 %956
      %958 = vrot.lane.b32.xlu0 %v557, 64
      %v959 = vpop.permute.xlu0 %958
      %960 = vrot.lane.b32.xlu0 %v558, 64
      %v961 = vpop.permute.xlu0 %960
      %962 = vrot.lane.b32.xlu0 %v559, 64
      %v963 = vpop.permute.xlu0 %962
      %964 = vrot.lane.b32.xlu0 %v560, 64
      %v965 = vpop.permute.xlu0 %964
      %966 = vrot.lane.b32.xlu0 %v561, 64
      %v967 = vpop.permute.xlu0 %966
      %968 = vrot.lane.b32.xlu0 %v562, 64
      %v969 = vpop.permute.xlu0 %968
      %970 = vrot.lane.b32.xlu0 %v563, 64
      %v971 = vpop.permute.xlu0 %970
      %972 = vrot.lane.b32.xlu0 %v564, 64
      %v973 = vpop.permute.xlu0 %972
      %974 = vrot.lane.b32.xlu0 %v565, 64
      %v975 = vpop.permute.xlu0 %974
      %976 = vrot.lane.b32.xlu0 %v566, 64
      %v977 = vpop.permute.xlu0 %976
      %978 = vrot.lane.b32.xlu0 %v567, 64
      %v979 = vpop.permute.xlu0 %978
      %980 = vrot.lane.b32.xlu0 %v568, 64
      %v981 = vpop.permute.xlu0 %980
      %982 = vrot.lane.b32.xlu0 %v569, 64
      %v983 = vpop.permute.xlu0 %982
      %984 = vrot.lane.b32.xlu0 %v570, 64
      %v985 = vpop.permute.xlu0 %984
      %986 = vrot.lane.b32.xlu0 %v571, 64
      %v987 = vpop.permute.xlu0 %986
      %988 = vrot.lane.b32.xlu0 %v572, 64
      %v989 = vpop.permute.xlu0 %988
      %1054 = vrot.lane.b32.xlu0 %v573, 96
      %v1055 = vpop.permute.xlu0 %1054
      %1056 = vrot.lane.b32.xlu0 %v574, 96
      %v1057 = vpop.permute.xlu0 %1056
      %1058 = vrot.lane.b32.xlu0 %v575, 96
      %v1059 = vpop.permute.xlu0 %1058
      %1060 = vrot.lane.b32.xlu0 %v576, 96
      %v1061 = vpop.permute.xlu0 %1060
      %1062 = vrot.lane.b32.xlu0 %v577, 96
      %v1063 = vpop.permute.xlu0 %1062
      %1064 = vrot.lane.b32.xlu0 %v578, 96
      %v1065 = vpop.permute.xlu0 %1064
      %1066 = vrot.lane.b32.xlu0 %v579, 96
      %v1067 = vpop.permute.xlu0 %1066
      %1068 = vrot.lane.b32.xlu0 %v580, 96
      %v1069 = vpop.permute.xlu0 %1068
      %1070 = vrot.lane.b32.xlu0 %v581, 96
      %v1071 = vpop.permute.xlu0 %1070
      %1072 = vrot.lane.b32.xlu0 %v582, 96
      %v1073 = vpop.permute.xlu0 %1072
      %1074 = vrot.lane.b32.xlu0 %v583, 96
      %v1075 = vpop.permute.xlu0 %1074
      %1076 = vrot.lane.b32.xlu0 %v584, 96
      %v1077 = vpop.permute.xlu0 %1076
      %1078 = vrot.lane.b32.xlu0 %v585, 96
      %v1079 = vpop.permute.xlu0 %1078
      %1080 = vrot.lane.b32.xlu0 %v586, 96
      %v1081 = vpop.permute.xlu0 %1080
      %1082 = vrot.lane.b32.xlu0 %v587, 96
      %v1083 = vpop.permute.xlu0 %1082
      %1084 = vrot.lane.b32.xlu0 %v588, 96
      %v1085 = vpop.permute.xlu0 %1084
      %1086 = vrot.lane.b32.xlu0 %v589, 96
      %v1087 = vpop.permute.xlu0 %1086
      %1088 = vrot.lane.b32.xlu0 %v590, 96
      %v1089 = vpop.permute.xlu0 %1088
      %1090 = vrot.lane.b32.xlu0 %v591, 96
      %v1091 = vpop.permute.xlu0 %1090
      %1092 = vrot.lane.b32.xlu0 %v592, 96
      %v1093 = vpop.permute.xlu0 %1092
      %1094 = vrot.lane.b32.xlu0 %v593, 96
      %v1095 = vpop.permute.xlu0 %1094
      %1096 = vrot.lane.b32.xlu0 %v594, 96
      %v1097 = vpop.permute.xlu0 %1096
      %1098 = vrot.lane.b32.xlu0 %v595, 96
      %v1099 = vpop.permute.xlu0 %1098
      %1100 = vrot.lane.b32.xlu0 %v596, 96
      %v1101 = vpop.permute.xlu0 %1100
      %1102 = vrot.lane.b32.xlu0 %v597, 96
      %v1103 = vpop.permute.xlu0 %1102
      %1104 = vrot.lane.b32.xlu0 %v598, 96
      %v1105 = vpop.permute.xlu0 %1104
      %1106 = vrot.lane.b32.xlu0 %v599, 96
      %v1107 = vpop.permute.xlu0 %1106
      %1108 = vrot.lane.b32.xlu0 %v600, 96
      %v1109 = vpop.permute.xlu0 %1108
      %1110 = vrot.lane.b32.xlu0 %v601, 96
      %v1111 = vpop.permute.xlu0 %1110
      %1112 = vrot.lane.b32.xlu0 %v602, 96
      %v1113 = vpop.permute.xlu0 %1112
      %1114 = vrot.lane.b32.xlu0 %v603, 96
      %v1115 = vpop.permute.xlu0 %1114
      %1116 = vrot.lane.b32.xlu0 %v604, 96
      %v1117 = vpop.permute.xlu0 %1116
      %1182 = vrot.lane.b32.xlu0 %v637, 32
      %v1183 = vpop.permute.xlu0 %1182
      %1184 = vrot.lane.b32.xlu0 %v638, 32
      %v1185 = vpop.permute.xlu0 %1184
      %1186 = vrot.lane.b32.xlu0 %v639, 32
      %v1187 = vpop.permute.xlu0 %1186
      %1188 = vrot.lane.b32.xlu0 %v640, 32
      %v1189 = vpop.permute.xlu0 %1188
      %1190 = vrot.lane.b32.xlu0 %v641, 32
      %v1191 = vpop.permute.xlu0 %1190
      %1192 = vrot.lane.b32.xlu0 %v642, 32
      %v1193 = vpop.permute.xlu0 %1192
      %1194 = vrot.lane.b32.xlu0 %v643, 32
      %v1195 = vpop.permute.xlu0 %1194
      %1196 = vrot.lane.b32.xlu0 %v644, 32
      %v1197 = vpop.permute.xlu0 %1196
      %1198 = vrot.lane.b32.xlu0 %v645, 32
      %v1199 = vpop.permute.xlu0 %1198
      %1200 = vrot.lane.b32.xlu0 %v646, 32
      %v1201 = vpop.permute.xlu0 %1200
      %1202 = vrot.lane.b32.xlu0 %v647, 32
      %v1203 = vpop.permute.xlu0 %1202
      %1204 = vrot.lane.b32.xlu0 %v648, 32
      %v1205 = vpop.permute.xlu0 %1204
      %1206 = vrot.lane.b32.xlu0 %v649, 32
      %v1207 = vpop.permute.xlu0 %1206
      %1208 = vrot.lane.b32.xlu0 %v650, 32
      %v1209 = vpop.permute.xlu0 %1208
      %1210 = vrot.lane.b32.xlu0 %v651, 32
      %v1211 = vpop.permute.xlu0 %1210
      %1212 = vrot.lane.b32.xlu0 %v652, 32
      %v1213 = vpop.permute.xlu0 %1212
      %1214 = vrot.lane.b32.xlu0 %v653, 32
      %v1215 = vpop.permute.xlu0 %1214
      %1216 = vrot.lane.b32.xlu0 %v654, 32
      %v1217 = vpop.permute.xlu0 %1216
      %1218 = vrot.lane.b32.xlu0 %v655, 32
      %v1219 = vpop.permute.xlu0 %1218
      %1220 = vrot.lane.b32.xlu0 %v656, 32
      %v1221 = vpop.permute.xlu0 %1220
      %1222 = vrot.lane.b32.xlu0 %v657, 32
      %v1223 = vpop.permute.xlu0 %1222
      %1224 = vrot.lane.b32.xlu0 %v658, 32
      %v1225 = vpop.permute.xlu0 %1224
      %1226 = vrot.lane.b32.xlu0 %v659, 32
      %v1227 = vpop.permute.xlu0 %1226
      %1228 = vrot.lane.b32.xlu0 %v660, 32
      %v1229 = vpop.permute.xlu0 %1228
      %1230 = vrot.lane.b32.xlu0 %v661, 32
      %v1231 = vpop.permute.xlu0 %1230
      %1232 = vrot.lane.b32.xlu0 %v662, 32
      %v1233 = vpop.permute.xlu0 %1232
      %1234 = vrot.lane.b32.xlu0 %v663, 32
      %v1235 = vpop.permute.xlu0 %1234
      %1236 = vrot.lane.b32.xlu0 %v664, 32
      %v1237 = vpop.permute.xlu0 %1236
      %1238 = vrot.lane.b32.xlu0 %v665, 32
      %v1239 = vpop.permute.xlu0 %1238
      %1240 = vrot.lane.b32.xlu0 %v666, 32
      %v1241 = vpop.permute.xlu0 %1240
      %1242 = vrot.lane.b32.xlu0 %v667, 32
      %v1243 = vpop.permute.xlu0 %1242
      %1244 = vrot.lane.b32.xlu0 %v668, 32
      %v1245 = vpop.permute.xlu0 %1244
      %1310 = vrot.lane.b32.xlu0 %v670, 64
      %v1311 = vpop.permute.xlu0 %1310
      %1312 = vrot.lane.b32.xlu0 %v671, 64
      %v1313 = vpop.permute.xlu0 %1312
      %1314 = vrot.lane.b32.xlu0 %v672, 64
      %v1315 = vpop.permute.xlu0 %1314
      %1316 = vrot.lane.b32.xlu0 %v673, 64
      %v1317 = vpop.permute.xlu0 %1316
      %1318 = vrot.lane.b32.xlu0 %v674, 64
      %v1319 = vpop.permute.xlu0 %1318
      %1320 = vrot.lane.b32.xlu0 %v675, 64
      %v1321 = vpop.permute.xlu0 %1320
      %1322 = vrot.lane.b32.xlu0 %v676, 64
      %v1323 = vpop.permute.xlu0 %1322
      %1324 = vrot.lane.b32.xlu0 %v677, 64
      %v1325 = vpop.permute.xlu0 %1324
      %1326 = vrot.lane.b32.xlu0 %v678, 64
      %v1327 = vpop.permute.xlu0 %1326
      %1328 = vrot.lane.b32.xlu0 %v679, 64
      %v1329 = vpop.permute.xlu0 %1328
      %1330 = vrot.lane.b32.xlu0 %v680, 64
      %v1331 = vpop.permute.xlu0 %1330
      %1332 = vrot.lane.b32.xlu0 %v681, 64
      %v1333 = vpop.permute.xlu0 %1332
      %1334 = vrot.lane.b32.xlu0 %v682, 64
      %v1335 = vpop.permute.xlu0 %1334
      %1336 = vrot.lane.b32.xlu0 %v683, 64
      %v1337 = vpop.permute.xlu0 %1336
      %1338 = vrot.lane.b32.xlu0 %v684, 64
      %v1339 = vpop.permute.xlu0 %1338
      %1340 = vrot.lane.b32.xlu0 %v685, 64
      %v1341 = vpop.permute.xlu0 %1340
      %1342 = vrot.lane.b32.xlu0 %v686, 64
      %v1343 = vpop.permute.xlu0 %1342
      %1344 = vrot.lane.b32.xlu0 %v687, 64
      %v1345 = vpop.permute.xlu0 %1344
      %1346 = vrot.lane.b32.xlu0 %v688, 64
      %v1347 = vpop.permute.xlu0 %1346
      %1348 = vrot.lane.b32.xlu0 %v689, 64
      %v1349 = vpop.permute.xlu0 %1348
      %1350 = vrot.lane.b32.xlu0 %v690, 64
      %v1351 = vpop.permute.xlu0 %1350
      %1352 = vrot.lane.b32.xlu0 %v691, 64
      %v1353 = vpop.permute.xlu0 %1352
      %1354 = vrot.lane.b32.xlu0 %v692, 64
      %v1355 = vpop.permute.xlu0 %1354
      %1356 = vrot.lane.b32.xlu0 %v693, 64
      %v1357 = vpop.permute.xlu0 %1356
      %1358 = vrot.lane.b32.xlu0 %v694, 64
      %v1359 = vpop.permute.xlu0 %1358
      %1360 = vrot.lane.b32.xlu0 %v695, 64
      %v1361 = vpop.permute.xlu0 %1360
      %1362 = vrot.lane.b32.xlu0 %v696, 64
      %v1363 = vpop.permute.xlu0 %1362
      %1364 = vrot.lane.b32.xlu0 %v697, 64
      %v1365 = vpop.permute.xlu0 %1364
      %1366 = vrot.lane.b32.xlu0 %v698, 64
      %v1367 = vpop.permute.xlu0 %1366
      %1368 = vrot.lane.b32.xlu0 %v699, 64
      %v1369 = vpop.permute.xlu0 %1368
      %1370 = vrot.lane.b32.xlu0 %v700, 64
      %v1371 = vpop.permute.xlu0 %1370
      %1372 = vrot.lane.b32.xlu0 %v701, 64
      %v1373 = vpop.permute.xlu0 %1372
      %1438 = vrot.lane.b32.xlu0 %v702, 96
      %v1439 = vpop.permute.xlu0 %1438
      %1440 = vrot.lane.b32.xlu0 %v703, 96
      %v1441 = vpop.permute.xlu0 %1440
      %1442 = vrot.lane.b32.xlu0 %v704, 96
      %v1443 = vpop.permute.xlu0 %1442
      %1444 = vrot.lane.b32.xlu0 %v705, 96
      %v1445 = vpop.permute.xlu0 %1444
      %1446 = vrot.lane.b32.xlu0 %v706, 96
      %v1447 = vpop.permute.xlu0 %1446
      %1448 = vrot.lane.b32.xlu0 %v707, 96
      %v1449 = vpop.permute.xlu0 %1448
      %1450 = vrot.lane.b32.xlu0 %v708, 96
      %v1451 = vpop.permute.xlu0 %1450
      %1452 = vrot.lane.b32.xlu0 %v709, 96
      %v1453 = vpop.permute.xlu0 %1452
      %1454 = vrot.lane.b32.xlu0 %v710, 96
      %v1455 = vpop.permute.xlu0 %1454
      %1456 = vrot.lane.b32.xlu0 %v711, 96
      %v1457 = vpop.permute.xlu0 %1456
      %1458 = vrot.lane.b32.xlu0 %v712, 96
      %v1459 = vpop.permute.xlu0 %1458
      %1460 = vrot.lane.b32.xlu0 %v713, 96
      %v1461 = vpop.permute.xlu0 %1460
      %1462 = vrot.lane.b32.xlu0 %v714, 96
      %v1463 = vpop.permute.xlu0 %1462
      %1464 = vrot.lane.b32.xlu0 %v715, 96
      %v1465 = vpop.permute.xlu0 %1464
      %1466 = vrot.lane.b32.xlu0 %v716, 96
      %v1467 = vpop.permute.xlu0 %1466
      %1468 = vrot.lane.b32.xlu0 %v717, 96
      %v1469 = vpop.permute.xlu0 %1468
      %1470 = vrot.lane.b32.xlu0 %v718, 96
      %v1471 = vpop.permute.xlu0 %1470
      %1472 = vrot.lane.b32.xlu0 %v719, 96
      %v1473 = vpop.permute.xlu0 %1472
      %1474 = vrot.lane.b32.xlu0 %v720, 96
      %v1475 = vpop.permute.xlu0 %1474
      %1476 = vrot.lane.b32.xlu0 %v721, 96
      %v1477 = vpop.permute.xlu0 %1476
      %1478 = vrot.lane.b32.xlu0 %v722, 96
      %v1479 = vpop.permute.xlu0 %1478
      %1480 = vrot.lane.b32.xlu0 %v723, 96
      %v1481 = vpop.permute.xlu0 %1480
      %1482 = vrot.lane.b32.xlu0 %v724, 96
      %v1483 = vpop.permute.xlu0 %1482
      %1484 = vrot.lane.b32.xlu0 %v725, 96
      %v1485 = vpop.permute.xlu0 %1484
      %1486 = vrot.lane.b32.xlu0 %v726, 96
      %v1487 = vpop.permute.xlu0 %1486
      %1488 = vrot.lane.b32.xlu0 %v727, 96
      %v1489 = vpop.permute.xlu0 %1488
      %1490 = vrot.lane.b32.xlu0 %v728, 96
      %v1491 = vpop.permute.xlu0 %1490
      %1492 = vrot.lane.b32.xlu0 %v729, 96
      %v1493 = vpop.permute.xlu0 %1492
      %1494 = vrot.lane.b32.xlu0 %v730, 96
      %v1495 = vpop.permute.xlu0 %1494
      %1496 = vrot.lane.b32.xlu0 %v731, 96
      %v1497 = vpop.permute.xlu0 %1496
      %1498 = vrot.lane.b32.xlu0 %v732, 96
      %v1499 = vpop.permute.xlu0 %1498
      %1500 = vrot.lane.b32.xlu0 %v733, 96
      %v1501 = vpop.permute.xlu0 %1500
      %v1534 = vsel %vm388, %v477, %v799
      %v1535 = vsel %vm388, %v478, %v801
      %v1536 = vsel %vm388, %v479, %v803
      %v1537 = vsel %vm388, %v480, %v805
      %v1538 = vsel %vm388, %v481, %v807
      %v1539 = vsel %vm388, %v482, %v809
      %v1540 = vsel %vm388, %v483, %v811
      %v1541 = vsel %vm388, %v484, %v813
      %v1542 = vsel %vm388, %v485, %v815
      %v1543 = vsel %vm388, %v486, %v817
      %v1544 = vsel %vm388, %v487, %v819
      %v1545 = vsel %vm388, %v488, %v821
      %v1546 = vsel %vm388, %v489, %v823
      %v1547 = vsel %vm388, %v490, %v825
      %v1548 = vsel %vm388, %v491, %v827
      %v1549 = vsel %vm388, %v492, %v829
      %v1550 = vsel %vm388, %v493, %v831
      %v1551 = vsel %vm388, %v494, %v833
      %v1552 = vsel %vm388, %v495, %v835
      %v1553 = vsel %vm388, %v496, %v837
      %v1554 = vsel %vm388, %v497, %v839
      %v1555 = vsel %vm388, %v498, %v841
      %v1556 = vsel %vm388, %v499, %v843
      %v1557 = vsel %vm388, %v500, %v845
      %v1558 = vsel %vm388, %v501, %v847
      %v1559 = vsel %vm388, %v502, %v849
      %v1560 = vsel %vm388, %v503, %v851
      %v1561 = vsel %vm388, %v504, %v853
      %v1562 = vsel %vm388, %v505, %v855
      %v1563 = vsel %vm388, %v506, %v857
      %v1564 = vsel %vm388, %v507, %v859
      %v1565 = vsel %vm388, %v508, %v861
      %vm1566 = vcmask 523264
      %v1567 = vsel %vm1566, %v1534, %v927
      %v1568 = vsel %vm1566, %v1535, %v929
      %v1569 = vsel %vm1566, %v1536, %v931
      %v1570 = vsel %vm1566, %v1537, %v933
      %v1571 = vsel %vm1566, %v1538, %v935
      %v1572 = vsel %vm1566, %v1539, %v937
      %v1573 = vsel %vm1566, %v1540, %v939
      %v1574 = vsel %vm1566, %v1541, %v941
      %v1575 = vsel %vm1566, %v1542, %v943
      %v1576 = vsel %vm1566, %v1543, %v945
      %v1577 = vsel %vm1566, %v1544, %v947
      %v1578 = vsel %vm1566, %v1545, %v949
      %v1579 = vsel %vm1566, %v1546, %v951
      %v1580 = vsel %vm1566, %v1547, %v953
      %v1581 = vsel %vm1566, %v1548, %v955
      %v1582 = vsel %vm1566, %v1549, %v957
      %v1583 = vsel %vm1566, %v1550, %v959
      %v1584 = vsel %vm1566, %v1551, %v961
      %v1585 = vsel %vm1566, %v1552, %v963
      %v1586 = vsel %vm1566, %v1553, %v965
      %v1587 = vsel %vm1566, %v1554, %v967
      %v1588 = vsel %vm1566, %v1555, %v969
      %v1589 = vsel %vm1566, %v1556, %v971
      %v1590 = vsel %vm1566, %v1557, %v973
      %v1591 = vsel %vm1566, %v1558, %v975
      %v1592 = vsel %vm1566, %v1559, %v977
      %v1593 = vsel %vm1566, %v1560, %v979
      %v1594 = vsel %vm1566, %v1561, %v981
      %v1595 = vsel %vm1566, %v1562, %v983
      %v1596 = vsel %vm1566, %v1563, %v985
      %v1597 = vsel %vm1566, %v1564, %v987
      %v1598 = vsel %vm1566, %v1565, %v989
      %vm1599 = vcmask 785408
      %v1600 = vsel %vm1599, %v1567, %v1055
      %v1601 = vsel %vm1599, %v1568, %v1057
      %v1602 = vsel %vm1599, %v1569, %v1059
      %v1603 = vsel %vm1599, %v1570, %v1061
      %v1604 = vsel %vm1599, %v1571, %v1063
      %v1605 = vsel %vm1599, %v1572, %v1065
      %v1606 = vsel %vm1599, %v1573, %v1067
      %v1607 = vsel %vm1599, %v1574, %v1069
      %v1608 = vsel %vm1599, %v1575, %v1071
      %v1609 = vsel %vm1599, %v1576, %v1073
      %v1610 = vsel %vm1599, %v1577, %v1075
      %v1611 = vsel %vm1599, %v1578, %v1077
      %v1612 = vsel %vm1599, %v1579, %v1079
      %v1613 = vsel %vm1599, %v1580, %v1081
      %v1614 = vsel %vm1599, %v1581, %v1083
      %v1615 = vsel %vm1599, %v1582, %v1085
      %v1616 = vsel %vm1599, %v1583, %v1087
      %v1617 = vsel %vm1599, %v1584, %v1089
      %v1618 = vsel %vm1599, %v1585, %v1091
      %v1619 = vsel %vm1599, %v1586, %v1093
      %v1620 = vsel %vm1599, %v1587, %v1095
      %v1621 = vsel %vm1599, %v1588, %v1097
      %v1622 = vsel %vm1599, %v1589, %v1099
      %v1623 = vsel %vm1599, %v1590, %v1101
      %v1624 = vsel %vm1599, %v1591, %v1103
      %v1625 = vsel %vm1599, %v1592, %v1105
      %v1626 = vsel %vm1599, %v1593, %v1107
      %v1627 = vsel %vm1599, %v1594, %v1109
      %v1628 = vsel %vm1599, %v1595, %v1111
      %v1629 = vsel %vm1599, %v1596, %v1113
      %v1630 = vsel %vm1599, %v1597, %v1115
      %v1631 = vsel %vm1599, %v1598, %v1117
      %v1632 = vsel %vm388, %v605, %v1183
      %v1633 = vsel %vm388, %v606, %v1185
      %v1634 = vsel %vm388, %v607, %v1187
      %v1635 = vsel %vm388, %v608, %v1189
      %v1636 = vsel %vm388, %v609, %v1191
      %v1637 = vsel %vm388, %v610, %v1193
      %v1638 = vsel %vm388, %v611, %v1195
      %v1639 = vsel %vm388, %v612, %v1197
      %v1640 = vsel %vm388, %v613, %v1199
      %v1641 = vsel %vm388, %v614, %v1201
      %v1642 = vsel %vm388, %v615, %v1203
      %v1643 = vsel %vm388, %v616, %v1205
      %v1644 = vsel %vm388, %v617, %v1207
      %v1645 = vsel %vm388, %v618, %v1209
      %v1646 = vsel %vm388, %v619, %v1211
      %v1647 = vsel %vm388, %v620, %v1213
      %v1648 = vsel %vm388, %v621, %v1215
      %v1649 = vsel %vm388, %v622, %v1217
      %v1650 = vsel %vm388, %v623, %v1219
      %v1651 = vsel %vm388, %v624, %v1221
      %v1652 = vsel %vm388, %v625, %v1223
      %v1653 = vsel %vm388, %v626, %v1225
      %v1654 = vsel %vm388, %v627, %v1227
      %v1655 = vsel %vm388, %v628, %v1229
      %v1656 = vsel %vm388, %v629, %v1231
      %v1657 = vsel %vm388, %v630, %v1233
      %v1658 = vsel %vm388, %v631, %v1235
      %v1659 = vsel %vm388, %v632, %v1237
      %v1660 = vsel %vm388, %v633, %v1239
      %v1661 = vsel %vm388, %v634, %v1241
      %v1662 = vsel %vm388, %v635, %v1243
      %v1663 = vsel %vm388, %v636, %v1245
      %v1664 = vsel %vm1566, %v1632, %v1311
      %v1665 = vsel %vm1566, %v1633, %v1313
      %v1666 = vsel %vm1566, %v1634, %v1315
      %v1667 = vsel %vm1566, %v1635, %v1317
      %v1668 = vsel %vm1566, %v1636, %v1319
      %v1669 = vsel %vm1566, %v1637, %v1321
      %v1670 = vsel %vm1566, %v1638, %v1323
      %v1671 = vsel %vm1566, %v1639, %v1325
      %v1672 = vsel %vm1566, %v1640, %v1327
      %v1673 = vsel %vm1566, %v1641, %v1329
      %v1674 = vsel %vm1566, %v1642, %v1331
      %v1675 = vsel %vm1566, %v1643, %v1333
      %v1676 = vsel %vm1566, %v1644, %v1335
      %v1677 = vsel %vm1566, %v1645, %v1337
      %v1678 = vsel %vm1566, %v1646, %v1339
      %v1679 = vsel %vm1566, %v1647, %v1341
      %v1680 = vsel %vm1566, %v1648, %v1343
      %v1681 = vsel %vm1566, %v1649, %v1345
      %v1682 = vsel %vm1566, %v1650, %v1347
      %v1683 = vsel %vm1566, %v1651, %v1349
      %v1684 = vsel %vm1566, %v1652, %v1351
      %v1685 = vsel %vm1566, %v1653, %v1353
      %v1686 = vsel %vm1566, %v1654, %v1355
      %v1687 = vsel %vm1566, %v1655, %v1357
      %v1688 = vsel %vm1566, %v1656, %v1359
      %v1689 = vsel %vm1566, %v1657, %v1361
      %v1690 = vsel %vm1566, %v1658, %v1363
      %v1691 = vsel %vm1566, %v1659, %v1365
      %v1692 = vsel %vm1566, %v1660, %v1367
      %v1693 = vsel %vm1566, %v1661, %v1369
      %v1694 = vsel %vm1566, %v1662, %v1371
      %v1695 = vsel %vm1566, %v1663, %v1373
      %v1696 = vsel %vm1599, %v1664, %v1439
      %v1697 = vsel %vm1599, %v1665, %v1441
      %v1698 = vsel %vm1599, %v1666, %v1443
      %v1699 = vsel %vm1599, %v1667, %v1445
      %v1700 = vsel %vm1599, %v1668, %v1447
      %v1701 = vsel %vm1599, %v1669, %v1449
      %v1702 = vsel %vm1599, %v1670, %v1451
      %v1703 = vsel %vm1599, %v1671, %v1453
      %v1704 = vsel %vm1599, %v1672, %v1455
      %v1705 = vsel %vm1599, %v1673, %v1457
      %v1706 = vsel %vm1599, %v1674, %v1459
      %v1707 = vsel %vm1599, %v1675, %v1461
      %v1708 = vsel %vm1599, %v1676, %v1463
      %v1709 = vsel %vm1599, %v1677, %v1465
      %v1710 = vsel %vm1599, %v1678, %v1467
      %v1711 = vsel %vm1599, %v1679, %v1469
      %v1712 = vsel %vm1599, %v1680, %v1471
      %v1713 = vsel %vm1599, %v1681, %v1473
      %v1714 = vsel %vm1599, %v1682, %v1475
      %v1715 = vsel %vm1599, %v1683, %v1477
      %v1716 = vsel %vm1599, %v1684, %v1479
      %v1717 = vsel %vm1599, %v1685, %v1481
      %v1718 = vsel %vm1599, %v1686, %v1483
      %v1719 = vsel %vm1599, %v1687, %v1485
      %v1720 = vsel %vm1599, %v1688, %v1487
      %v1721 = vsel %vm1599, %v1689, %v1489
      %v1722 = vsel %vm1599, %v1690, %v1491
      %v1723 = vsel %vm1599, %v1691, %v1493
      %v1724 = vsel %vm1599, %v1692, %v1495
      %v1725 = vsel %vm1599, %v1693, %v1497
      %v1726 = vsel %vm1599, %v1694, %v1499
      %v1727 = vsel %vm1599, %v1695, %v1501
      %v1728 = vpack.c.bf16 %v1601, %v1600
      %v1729 = vpack.c.bf16 %v1697, %v1696
      %v1730 = vpack.c.bf16 %v735, %v734
      %v1731 = vpack.c.bf16 %v1603, %v1602
      %v1732 = vpack.c.bf16 %v1699, %v1698
      %v1733 = vpack.c.bf16 %v737, %v736
      %v1734 = vpack.c.bf16 %v1605, %v1604
      %v1735 = vpack.c.bf16 %v1701, %v1700
      %v1736 = vpack.c.bf16 %v739, %v738
      %v1737 = vpack.c.bf16 %v1607, %v1606
      %v1738 = vpack.c.bf16 %v1703, %v1702
      %v1739 = vpack.c.bf16 %v741, %v740
      %v1740 = vpack.c.bf16 %v1609, %v1608
      %v1741 = vpack.c.bf16 %v1705, %v1704
      %v1742 = vpack.c.bf16 %v743, %v742
      %v1743 = vpack.c.bf16 %v1611, %v1610
      %v1744 = vpack.c.bf16 %v1707, %v1706
      %v1745 = vpack.c.bf16 %v745, %v744
      %v1746 = vpack.c.bf16 %v1613, %v1612
      %v1747 = vpack.c.bf16 %v1709, %v1708
      %v1748 = vpack.c.bf16 %v747, %v746
      %v1749 = vpack.c.bf16 %v1615, %v1614
      %v1750 = vpack.c.bf16 %v1711, %v1710
      %v1751 = vpack.c.bf16 %v749, %v748
      %v1752 = vpack.c.bf16 %v1617, %v1616
      %v1753 = vpack.c.bf16 %v1713, %v1712
      %v1754 = vpack.c.bf16 %v751, %v750
      %v1755 = vpack.c.bf16 %v1619, %v1618
      %v1756 = vpack.c.bf16 %v1715, %v1714
      %v1757 = vpack.c.bf16 %v753, %v752
      %v1758 = vpack.c.bf16 %v1621, %v1620
      %v1759 = vpack.c.bf16 %v1717, %v1716
      %v1760 = vpack.c.bf16 %v755, %v754
      %v1761 = vpack.c.bf16 %v1623, %v1622
      %v1762 = vpack.c.bf16 %v1719, %v1718
      %v1763 = vpack.c.bf16 %v757, %v756
      %v1764 = vpack.c.bf16 %v1625, %v1624
      %v1765 = vpack.c.bf16 %v1721, %v1720
      %v1766 = vpack.c.bf16 %v759, %v758
      %v1767 = vpack.c.bf16 %v1627, %v1626
      %v1768 = vpack.c.bf16 %v1723, %v1722
      %v1769 = vpack.c.bf16 %v761, %v760
      %v1770 = vpack.c.bf16 %v1629, %v1628
      %v1771 = vpack.c.bf16 %v1725, %v1724
      %v1772 = vpack.c.bf16 %v763, %v762
      %v1773 = vpack.c.bf16 %v1631, %v1630
      %v1774 = vpack.c.bf16 %v1727, %v1726
      %v1775 = vpack.c.bf16 %v765, %v764
      %v1776 = vld [vmem:[%s3] sm:$0xf]
      %v1777 = vld [vmem:[%s3 + $0x4] sm:$0xf]
      %v1778 = vld [vmem:[%s3 + $0x8] sm:$0xf]
      %v1779 = vld [vmem:[%s3 + $0xc] sm:$0xf]
      %v1780 = vld [vmem:[%s3 + $0x10] sm:$0xf]
      %v1781 = vld [vmem:[%s3 + $0x14] sm:$0xf]
      %v1782 = vld [vmem:[%s3 + $0x18] sm:$0xf]
      %v1783 = vld [vmem:[%s3 + $0x1c] sm:$0xf]
      %v1784 = vld [vmem:[%s3 + $0x20] sm:$0xf]
      %v1785 = vld [vmem:[%s3 + $0x24] sm:$0xf]
      %v1786 = vld [vmem:[%s3 + $0x28] sm:$0xf]
      %v1787 = vld [vmem:[%s3 + $0x2c] sm:$0xf]
      %v1788 = vld [vmem:[%s3 + $0x30] sm:$0xf]
      %v1789 = vld [vmem:[%s3 + $0x34] sm:$0xf]
      %v1790 = vld [vmem:[%s3 + $0x38] sm:$0xf]
      %v1791 = vld [vmem:[%s3 + $0x3c] sm:$0xf]
      %v1792 = vld [vmem:[%s3 + $0x40] sm:$0xf]
      %v1793 = vld [vmem:[%s3 + $0x44] sm:$0xf]
      %v1794 = vld [vmem:[%s3 + $0x48] sm:$0xf]
      %v1795 = vld [vmem:[%s3 + $0x4c] sm:$0xf]
      %v1796 = vld [vmem:[%s3 + $0x50] sm:$0xf]
      %v1797 = vld [vmem:[%s3 + $0x54] sm:$0xf]
      %v1798 = vld [vmem:[%s3 + $0x58] sm:$0xf]
      %v1799 = vld [vmem:[%s3 + $0x5c] sm:$0xf]
      %v1800 = vld [vmem:[%s3 + $0x60] sm:$0xf]
      %v1801 = vld [vmem:[%s3 + $0x64] sm:$0xf]
      %v1802 = vld [vmem:[%s3 + $0x68] sm:$0xf]
      %v1803 = vld [vmem:[%s3 + $0x6c] sm:$0xf]
      %v1804 = vld [vmem:[%s3 + $0x70] sm:$0xf]
      %v1805 = vld [vmem:[%s3 + $0x74] sm:$0xf]
      %v1806 = vld [vmem:[%s3 + $0x78] sm:$0xf]
      %v1807 = vld [vmem:[%s3 + $0x7c] sm:$0xf]
      %v1808 = vld [vmem:[%s3 + $0x80] sm:$0xf]
      %v1809 = vld [vmem:[%s3 + $0x84] sm:$0xf]
      %v1810 = vld [vmem:[%s3 + $0x88] sm:$0xf]
      %v1811 = vld [vmem:[%s3 + $0x8c] sm:$0xf]
      %v1848 = vunpack.c.l.b16 %v1776
      %v1849 = vunpack.c.l.b16 %v1777
      %v1850 = vunpack.c.l.b16 %v1778
      %v1851 = vunpack.c.l.b16 %v1779
      %v1852 = vunpack.c.l.b16 %v1780
      %v1853 = vunpack.c.l.b16 %v1781
      %v1854 = vunpack.c.l.b16 %v1782
      %v1855 = vunpack.c.l.b16 %v1783
      %v1856 = vunpack.c.l.b16 %v1784
      %v1857 = vunpack.c.l.b16 %v1785
      %v1858 = vunpack.c.l.b16 %v1786
      %v1859 = vunpack.c.l.b16 %v1787
      %v1860 = vunpack.c.l.b16 %v1788
      %v1861 = vunpack.c.l.b16 %v1789
      %v1862 = vunpack.c.l.b16 %v1790
      %v1863 = vunpack.c.l.b16 %v1791
      %v1864 = vunpack.c.l.b16 %v1792
      %v1865 = vunpack.c.l.b16 %v1793
      %v1866 = vunpack.c.l.b16 %v1794
      %v1867 = vunpack.c.l.b16 %v1795
      %v1868 = vunpack.c.l.b16 %v1796
      %v1869 = vunpack.c.l.b16 %v1797
      %v1870 = vunpack.c.l.b16 %v1798
      %v1871 = vunpack.c.l.b16 %v1799
      %v1872 = vunpack.c.l.b16 %v1800
      %v1873 = vunpack.c.l.b16 %v1801
      %v1874 = vunpack.c.l.b16 %v1802
      %v1875 = vunpack.c.l.b16 %v1803
      %v1876 = vunpack.c.l.b16 %v1804
      %v1877 = vunpack.c.l.b16 %v1805
      %v1878 = vunpack.c.l.b16 %v1806
      %v1879 = vunpack.c.l.b16 %v1807
      %v1880 = vunpack.c.l.b16 %v1808
      %v1881 = vunpack.c.l.b16 %v1809
      %v1882 = vunpack.c.l.b16 %v1810
      %v1883 = vunpack.c.l.b16 %v1811
      %v1884 = vpack.c.b16 %v1849, %v1848
      %v1885 = vpack.c.b16 %v1851, %v1850
      %v1886 = vpack.c.b16 %v1853, %v1852
      %v1887 = vpack.c.b16 %v1855, %v1854
      %v1888 = vpack.c.b16 %v1857, %v1856
      %v1889 = vpack.c.b16 %v1859, %v1858
      %v1890 = vpack.c.b16 %v1861, %v1860
      %v1891 = vpack.c.b16 %v1863, %v1862
      %v1892 = vpack.c.b16 %v1865, %v1864
      %v1893 = vpack.c.b16 %v1867, %v1866
      %v1894 = vpack.c.b16 %v1869, %v1868
      %v1895 = vpack.c.b16 %v1871, %v1870
      %v1896 = vpack.c.b16 %v1873, %v1872
      %v1897 = vpack.c.b16 %v1875, %v1874
      %v1898 = vpack.c.b16 %v1877, %v1876
      %v1899 = vpack.c.b16 %v1879, %v1878
      %v1900 = vpack.c.b16 %v1881, %v1880
      %v1901 = vpack.c.b16 %v1883, %v1882
      %v1921 = vsel %vm388, %v1730, 0
      %v1924 = vsel %vm388, %v1733, 0
      %v1927 = vsel %vm388, %v1736, 0
      %v1930 = vsel %vm388, %v1739, 0
      %v1933 = vsel %vm388, %v1742, 0
      %v1936 = vsel %vm388, %v1745, 0
      %v1939 = vsel %vm388, %v1748, 0
      %v1942 = vsel %vm388, %v1751, 0
      %v1945 = vsel %vm388, %v1754, 0
      %v1948 = vsel %vm388, %v1757, 0
      %v1951 = vsel %vm388, %v1760, 0
      %v1954 = vsel %vm388, %v1763, 0
      %v1957 = vsel %vm388, %v1766, 0
      %v1960 = vsel %vm388, %v1769, 0
      %v1963 = vsel %vm388, %v1772, 0
      %v1966 = vsel %vm388, %v1775, 0
      %1968 = vmatprep.subr.bf16.mxu0 0
      %1969 = vmatpush1.bf16.msra.mxu0 %v1884
      %1970 = vmatprep.subr.bf16.mxu0 0
      %1971 = vmatpush1.bf16.msra.mxu0 %v1885
      %1972 = vmatprep.subr.bf16.mxu0 0
      %1973 = vmatpush1.bf16.msra.mxu0 %v1886
      %1974 = vmatprep.subr.bf16.mxu0 0
      %1975 = vmatpush1.bf16.msra.mxu0 %v1887
      %1976 = vmatprep.subr.bf16.mxu0 0
      %1977 = vmatpush1.bf16.msra.mxu0 %v1888
      %1978 = vmatprep.subr.bf16.mxu0 0
      %1979 = vmatpush1.bf16.msra.mxu0 %v1889
      %1980 = vmatprep.subr.bf16.mxu0 0
      %1981 = vmatpush1.bf16.msra.mxu0 %v1890
      %1982 = vmatprep.subr.bf16.mxu0 0
      %1983 = vmatpush1.bf16.msra.mxu0 %v1891
      %1984 = vmatprep.subr.bf16.mxu0 0
      %1985 = vmatpush1.bf16.msra.mxu0 %v1892
      %1986 = vmatprep.subr.bf16.mxu0 0
      %1987 = vmatpush1.bf16.msra.mxu0 %v1893
      %1988 = vmatprep.subr.bf16.mxu0 0
      %1989 = vmatpush1.bf16.msra.mxu0 %v1894
      %1990 = vmatprep.subr.bf16.mxu0 0
      %1991 = vmatpush1.bf16.msra.mxu0 %v1895
      %1992 = vmatprep.subr.bf16.mxu0 0
      %1993 = vmatpush1.bf16.msra.mxu0 %v1896
      %1994 = vmatprep.subr.bf16.mxu0 0
      %1995 = vmatpush1.bf16.msra.mxu0 %v1897
      %1996 = vmatprep.subr.bf16.mxu0 0
      %1997 = vmatpush1.bf16.msra.mxu0 %v1898
      %1998 = vmatprep.subr.bf16.mxu0 0
      %1999 = vmatpush1.bf16.msra.mxu0 %v1899
      %2000 = vmatprep.mubr.bf16.mxu0 %v1729
      %2001 = vmatmul.mubr.bf16.gmra.mrb[0].mxu0 %v1728
      %v2002 = vpop.f32.mrb[0].mxu0
      %v2003 = vadd.f32 0.0, %v2002
      %v2004 = vpop.f32.mrb[0].mxu0
      %v2005 = vpop.f32.mrb[0].mxu0
      %v2006 = vadd.f32 0.0, %v2005
      %v2007 = vpop.f32.mrb[0].mxu0
      %2008 = vmatprep.mubr.bf16.mxu0 %v1732
      %2009 = vmatmul.mubr.bf16.gmra.mrb[0].mxu0 %v1731
      %v2010 = vpop.f32.mrb[0].mxu0
      %v2011 = vadd.f32 0.0, %v2010
      %v2012 = vpop.f32.mrb[0].mxu0
      %v2013 = vpop.f32.mrb[0].mxu0
      %v2014 = vadd.f32 0.0, %v2013
      %v2015 = vpop.f32.mrb[0].mxu0
      %2016 = vmatprep.mubr.bf16.mxu0 %v1735
      %2017 = vmatmul.mubr.bf16.gmra.mrb[0].mxu0 %v1734
      %v2018 = vpop.f32.mrb[0].mxu0
      %v2019 = vadd.f32 0.0, %v2018
      %v2020 = vpop.f32.mrb[0].mxu0
      %v2021 = vpop.f32.mrb[0].mxu0
      %v2022 = vadd.f32 0.0, %v2021
      %v2023 = vpop.f32.mrb[0].mxu0
      %2024 = vmatprep.mubr.bf16.mxu0 %v1738
      %2025 = vmatmul.mubr.bf16.gmra.mrb[0].mxu0 %v1737
      %v2026 = vpop.f32.mrb[0].mxu0
      %v2027 = vadd.f32 0.0, %v2026
      %v2028 = vpop.f32.mrb[0].mxu0
      %v2029 = vpop.f32.mrb[0].mxu0
      %v2030 = vadd.f32 0.0, %v2029
      %v2031 = vpop.f32.mrb[0].mxu0
      %2032 = vmatprep.mubr.bf16.mxu0 %v1741
      %2033 = vmatmul.mubr.bf16.gmra.mrb[0].mxu0 %v1740
      %v2034 = vpop.f32.mrb[0].mxu0
      %v2035 = vadd.f32 0.0, %v2034
      %v2036 = vpop.f32.mrb[0].mxu0
      %v2037 = vpop.f32.mrb[0].mxu0
      %v2038 = vadd.f32 0.0, %v2037
      %v2039 = vpop.f32.mrb[0].mxu0
      %2040 = vmatprep.mubr.bf16.mxu0 %v1744
      %2041 = vmatmul.mubr.bf16.gmra.mrb[0].mxu0 %v1743
      %v2042 = vpop.f32.mrb[0].mxu0
      %v2043 = vadd.f32 0.0, %v2042
      %v2044 = vpop.f32.mrb[0].mxu0
      %v2045 = vpop.f32.mrb[0].mxu0
      %v2046 = vadd.f32 0.0, %v2045
      %v2047 = vpop.f32.mrb[0].mxu0
      %2048 = vmatprep.mubr.bf16.mxu0 %v1747
      %2049 = vmatmul.mubr.bf16.gmra.mrb[0].mxu0 %v1746
      %v2050 = vpop.f32.mrb[0].mxu0
      %v2051 = vadd.f32 0.0, %v2050
      %v2052 = vpop.f32.mrb[0].mxu0
      %v2053 = vpop.f32.mrb[0].mxu0
      %v2054 = vadd.f32 0.0, %v2053
      %v2055 = vpop.f32.mrb[0].mxu0
      %2056 = vmatprep.mubr.bf16.mxu0 %v1750
      %2057 = vmatmul.mubr.bf16.gmra.mrb[0].mxu0 %v1749
      %v2058 = vpop.f32.mrb[0].mxu0
      %v2059 = vadd.f32 0.0, %v2058
      %v2060 = vpop.f32.mrb[0].mxu0
      %v2061 = vpop.f32.mrb[0].mxu0
      %v2062 = vadd.f32 0.0, %v2061
      %v2063 = vpop.f32.mrb[0].mxu0
      %2064 = vmatprep.mubr.bf16.mxu0 %v1753
      %2065 = vmatmul.mubr.bf16.gmra.mrb[0].mxu0 %v1752
      %v2066 = vpop.f32.mrb[0].mxu0
      %v2067 = vadd.f32 0.0, %v2066
      %v2068 = vpop.f32.mrb[0].mxu0
      %v2069 = vpop.f32.mrb[0].mxu0
      %v2070 = vadd.f32 0.0, %v2069
      %v2071 = vpop.f32.mrb[0].mxu0
      %2072 = vmatprep.mubr.bf16.mxu0 %v1756
      %2073 = vmatmul.mubr.bf16.gmra.mrb[0].mxu0 %v1755
      %v2074 = vpop.f32.mrb[0].mxu0
      %v2075 = vadd.f32 0.0, %v2074
      %v2076 = vpop.f32.mrb[0].mxu0
      %v2077 = vpop.f32.mrb[0].mxu0
      %v2078 = vadd.f32 0.0, %v2077
      %v2079 = vpop.f32.mrb[0].mxu0
      %2080 = vmatprep.mubr.bf16.mxu0 %v1759
      %2081 = vmatmul.mubr.bf16.gmra.mrb[0].mxu0 %v1758
      %v2082 = vpop.f32.mrb[0].mxu0
      %v2083 = vadd.f32 0.0, %v2082
      %v2084 = vpop.f32.mrb[0].mxu0
      %v2085 = vpop.f32.mrb[0].mxu0
      %v2086 = vadd.f32 0.0, %v2085
      %v2087 = vpop.f32.mrb[0].mxu0
      %2088 = vmatprep.mubr.bf16.mxu0 %v1762
      %2089 = vmatmul.mubr.bf16.gmra.mrb[0].mxu0 %v1761
      %v2090 = vpop.f32.mrb[0].mxu0
      %v2091 = vadd.f32 0.0, %v2090
      %v2092 = vpop.f32.mrb[0].mxu0
      %v2093 = vpop.f32.mrb[0].mxu0
      %v2094 = vadd.f32 0.0, %v2093
      %v2095 = vpop.f32.mrb[0].mxu0
      %2096 = vmatprep.mubr.bf16.mxu0 %v1765
      %2097 = vmatmul.mubr.bf16.gmra.mrb[0].mxu0 %v1764
      %v2098 = vpop.f32.mrb[0].mxu0
      %v2099 = vadd.f32 0.0, %v2098
      %v2100 = vpop.f32.mrb[0].mxu0
      %v2101 = vpop.f32.mrb[0].mxu0
      %v2102 = vadd.f32 0.0, %v2101
      %v2103 = vpop.f32.mrb[0].mxu0
      %2104 = vmatprep.mubr.bf16.mxu0 %v1768
      %2105 = vmatmul.mubr.bf16.gmra.mrb[0].mxu0 %v1767
      %v2106 = vpop.f32.mrb[0].mxu0
      %v2107 = vadd.f32 0.0, %v2106
      %v2108 = vpop.f32.mrb[0].mxu0
      %v2109 = vpop.f32.mrb[0].mxu0
      %v2110 = vadd.f32 0.0, %v2109
      %v2111 = vpop.f32.mrb[0].mxu0
      %2112 = vmatprep.mubr.bf16.mxu0 %v1771
      %2113 = vmatmul.mubr.bf16.gmra.mrb[0].mxu0 %v1770
      %v2114 = vpop.f32.mrb[0].mxu0
      %v2115 = vadd.f32 0.0, %v2114
      %v2116 = vpop.f32.mrb[0].mxu0
      %v2117 = vpop.f32.mrb[0].mxu0
      %v2118 = vadd.f32 0.0, %v2117
      %v2119 = vpop.f32.mrb[0].mxu0
      %2120 = vmatprep.mubr.bf16.mxu0 %v1774
      %2121 = vmatmul.mubr.bf16.gmra.mrb[0].mxu0 %v1773
      %v2122 = vpop.f32.mrb[0].mxu0
      %v2123 = vadd.f32 0.0, %v2122
      %v2124 = vpop.f32.mrb[0].mxu0
      %v2125 = vpop.f32.mrb[0].mxu0
      %v2126 = vadd.f32 0.0, %v2125
      %v2127 = vpop.f32.mrb[0].mxu0
      %2128 = vdwg.mxu0
      %2129 = vmatprep.subr.bf16.mxu0 0
      %2130 = vmatpush1.bf16.msra.mxu0 %v1900
      %2131 = vmatprep.subr.bf16.mxu0 0
      %2132 = vmatpush1.bf16.msra.mxu0 %v1901
      %2133 = vmatprep.subr.bf16.mxu0 0
      %2134 = vmatpush1.bf16.msra.mxu0 0
      %2135 = vmatprep.subr.bf16.mxu0 0
      %2136 = vmatpush1.bf16.msra.mxu0 0
      %2137 = vmatprep.subr.bf16.mxu0 0
      %2138 = vmatpush1.bf16.msra.mxu0 0
      %2139 = vmatprep.subr.bf16.mxu0 0
      %2140 = vmatpush1.bf16.msra.mxu0 0
      %2141 = vmatprep.subr.bf16.mxu0 0
      %2142 = vmatpush1.bf16.msra.mxu0 0
      %2143 = vmatprep.subr.bf16.mxu0 0
      %2144 = vmatpush1.bf16.msra.mxu0 0
      %2145 = vmatprep.subr.bf16.mxu0 0
      %2146 = vmatpush1.bf16.msra.mxu0 0
      %2147 = vmatprep.subr.bf16.mxu0 0
      %2148 = vmatpush1.bf16.msra.mxu0 0
      %2149 = vmatprep.subr.bf16.mxu0 0
      %2150 = vmatpush1.bf16.msra.mxu0 0
      %2151 = vmatprep.subr.bf16.mxu0 0
      %2152 = vmatpush1.bf16.msra.mxu0 0
      %2153 = vmatprep.subr.bf16.mxu0 0
      %2154 = vmatpush1.bf16.msra.mxu0 0
      %2155 = vmatprep.subr.bf16.mxu0 0
      %2156 = vmatpush1.bf16.msra.mxu0 0
      %2157 = vmatprep.subr.bf16.mxu0 0
      %2158 = vmatpush1.bf16.msra.mxu0 0
      %2159 = vmatprep.subr.bf16.mxu0 0
      %2160 = vmatpush1.bf16.msra.mxu0 0
      %2161 = vmatprep.mubr.bf16.mxu0 0
      %2162 = vmatmul.mubr.bf16.gmra.mrb[0].mxu0 %v1921
      %v2163 = vpop.f32.mrb[0].mxu0
      %v2164 = vadd.f32 %v2003, %v2163
      %v2165 = vpop.f32.mrb[0].mxu0
      %v2166 = vpop.f32.mrb[0].mxu0
      %v2167 = vadd.f32 %v2006, %v2166
      %v2168 = vpop.f32.mrb[0].mxu0
      %2169 = vmatprep.mubr.bf16.mxu0 0
      %2170 = vmatmul.mubr.bf16.gmra.mrb[0].mxu0 %v1924
      %v2171 = vpop.f32.mrb[0].mxu0
      %v2172 = vadd.f32 %v2011, %v2171
      %v2173 = vpop.f32.mrb[0].mxu0
      %v2174 = vpop.f32.mrb[0].mxu0
      %v2175 = vadd.f32 %v2014, %v2174
      %v2176 = vpop.f32.mrb[0].mxu0
      %2177 = vmatprep.mubr.bf16.mxu0 0
      %2178 = vmatmul.mubr.bf16.gmra.mrb[0].mxu0 %v1927
      %v2179 = vpop.f32.mrb[0].mxu0
      %v2180 = vadd.f32 %v2019, %v2179
      %v2181 = vpop.f32.mrb[0].mxu0
      %v2182 = vpop.f32.mrb[0].mxu0
      %v2183 = vadd.f32 %v2022, %v2182
      %v2184 = vpop.f32.mrb[0].mxu0
      %2185 = vmatprep.mubr.bf16.mxu0 0
      %2186 = vmatmul.mubr.bf16.gmra.mrb[0].mxu0 %v1930
      %v2187 = vpop.f32.mrb[0].mxu0
      %v2188 = vadd.f32 %v2027, %v2187
      %v2189 = vpop.f32.mrb[0].mxu0
      %v2190 = vpop.f32.mrb[0].mxu0
      %v2191 = vadd.f32 %v2030, %v2190
      %v2192 = vpop.f32.mrb[0].mxu0
      %2193 = vmatprep.mubr.bf16.mxu0 0
      %2194 = vmatmul.mubr.bf16.gmra.mrb[0].mxu0 %v1933
      %v2195 = vpop.f32.mrb[0].mxu0
      %v2196 = vadd.f32 %v2035, %v2195
      %v2197 = vpop.f32.mrb[0].mxu0
      %v2198 = vpop.f32.mrb[0].mxu0
      %v2199 = vadd.f32 %v2038, %v2198
      %v2200 = vpop.f32.mrb[0].mxu0
      %2201 = vmatprep.mubr.bf16.mxu0 0
      %2202 = vmatmul.mubr.bf16.gmra.mrb[0].mxu0 %v1936
      %v2203 = vpop.f32.mrb[0].mxu0
      %v2204 = vadd.f32 %v2043, %v2203
      %v2205 = vpop.f32.mrb[0].mxu0
      %v2206 = vpop.f32.mrb[0].mxu0
      %v2207 = vadd.f32 %v2046, %v2206
      %v2208 = vpop.f32.mrb[0].mxu0
      %2209 = vmatprep.mubr.bf16.mxu0 0
      %2210 = vmatmul.mubr.bf16.gmra.mrb[0].mxu0 %v1939
      %v2211 = vpop.f32.mrb[0].mxu0
      %v2212 = vadd.f32 %v2051, %v2211
      %v2213 = vpop.f32.mrb[0].mxu0
      %v2214 = vpop.f32.mrb[0].mxu0
      %v2215 = vadd.f32 %v2054, %v2214
      %v2216 = vpop.f32.mrb[0].mxu0
      %2217 = vmatprep.mubr.bf16.mxu0 0
      %2218 = vmatmul.mubr.bf16.gmra.mrb[0].mxu0 %v1942
      %v2219 = vpop.f32.mrb[0].mxu0
      %v2220 = vadd.f32 %v2059, %v2219
      %v2221 = vpop.f32.mrb[0].mxu0
      %v2222 = vpop.f32.mrb[0].mxu0
      %v2223 = vadd.f32 %v2062, %v2222
      %v2224 = vpop.f32.mrb[0].mxu0
      %2225 = vmatprep.mubr.bf16.mxu0 0
      %2226 = vmatmul.mubr.bf16.gmra.mrb[0].mxu0 %v1945
      %v2227 = vpop.f32.mrb[0].mxu0
      %v2228 = vadd.f32 %v2067, %v2227
      %v2229 = vpop.f32.mrb[0].mxu0
      %v2230 = vpop.f32.mrb[0].mxu0
      %v2231 = vadd.f32 %v2070, %v2230
      %v2232 = vpop.f32.mrb[0].mxu0
      %2233 = vmatprep.mubr.bf16.mxu0 0
      %2234 = vmatmul.mubr.bf16.gmra.mrb[0].mxu0 %v1948
      %v2235 = vpop.f32.mrb[0].mxu0
      %v2236 = vadd.f32 %v2075, %v2235
      %v2237 = vpop.f32.mrb[0].mxu0
      %v2238 = vpop.f32.mrb[0].mxu0
      %v2239 = vadd.f32 %v2078, %v2238
      %v2240 = vpop.f32.mrb[0].mxu0
      %2241 = vmatprep.mubr.bf16.mxu0 0
      %2242 = vmatmul.mubr.bf16.gmra.mrb[0].mxu0 %v1951
      %v2243 = vpop.f32.mrb[0].mxu0
      %v2244 = vadd.f32 %v2083, %v2243
      %v2245 = vpop.f32.mrb[0].mxu0
      %v2246 = vpop.f32.mrb[0].mxu0
      %v2247 = vadd.f32 %v2086, %v2246
      %v2248 = vpop.f32.mrb[0].mxu0
      %2249 = vmatprep.mubr.bf16.mxu0 0
      %2250 = vmatmul.mubr.bf16.gmra.mrb[0].mxu0 %v1954
      %v2251 = vpop.f32.mrb[0].mxu0
      %v2252 = vadd.f32 %v2091, %v2251
      %v2253 = vpop.f32.mrb[0].mxu0
      %v2254 = vpop.f32.mrb[0].mxu0
      %v2255 = vadd.f32 %v2094, %v2254
      %v2256 = vpop.f32.mrb[0].mxu0
      %2257 = vmatprep.mubr.bf16.mxu0 0
      %2258 = vmatmul.mubr.bf16.gmra.mrb[0].mxu0 %v1957
      %v2259 = vpop.f32.mrb[0].mxu0
      %v2260 = vadd.f32 %v2099, %v2259
      %v2261 = vpop.f32.mrb[0].mxu0
      %v2262 = vpop.f32.mrb[0].mxu0
      %v2263 = vadd.f32 %v2102, %v2262
      %v2264 = vpop.f32.mrb[0].mxu0
      %2265 = vmatprep.mubr.bf16.mxu0 0
      %2266 = vmatmul.mubr.bf16.gmra.mrb[0].mxu0 %v1960
      %v2267 = vpop.f32.mrb[0].mxu0
      %v2268 = vadd.f32 %v2107, %v2267
      %v2269 = vpop.f32.mrb[0].mxu0
      %v2270 = vpop.f32.mrb[0].mxu0
      %v2271 = vadd.f32 %v2110, %v2270
      %v2272 = vpop.f32.mrb[0].mxu0
      %2273 = vmatprep.mubr.bf16.mxu0 0
      %2274 = vmatmul.mubr.bf16.gmra.mrb[0].mxu0 %v1963
      %v2275 = vpop.f32.mrb[0].mxu0
      %v2276 = vadd.f32 %v2115, %v2275
      %v2277 = vpop.f32.mrb[0].mxu0
      %v2278 = vpop.f32.mrb[0].mxu0
      %v2279 = vadd.f32 %v2118, %v2278
      %v2280 = vpop.f32.mrb[0].mxu0
      %2281 = vmatprep.mubr.bf16.mxu0 0
      %2282 = vmatmul.mubr.bf16.gmra.mrb[0].mxu0 %v1966
      %v2283 = vpop.f32.mrb[0].mxu0
      %v2284 = vadd.f32 %v2123, %v2283
      %v2285 = vpop.f32.mrb[0].mxu0
      %v2286 = vpop.f32.mrb[0].mxu0
      %v2287 = vadd.f32 %v2126, %v2286
      %v2288 = vpop.f32.mrb[0].mxu0
      %2289 = vdwg.mxu0
      %vm2290 = vcmask 64512
      %2291 = vst.msk [vmem:[%s244] sm:$0xff] %vm2290, %v2164
      %2292 = vst.msk [vmem:[%s244 + $0x8] sm:$0xff] %vm2290, %v2167
      %2293 = vst.msk [vmem:[%s244 + $0x10] sm:$0xff] %vm2290, %v2172
      %2294 = vst.msk [vmem:[%s244 + $0x18] sm:$0xff] %vm2290, %v2175
      %2295 = vst.msk [vmem:[%s244 + $0x20] sm:$0xff] %vm2290, %v2180
      %2296 = vst.msk [vmem:[%s244 + $0x28] sm:$0xff] %vm2290, %v2183
      %2297 = vst.msk [vmem:[%s244 + $0x30] sm:$0xff] %vm2290, %v2188
      %2298 = vst.msk [vmem:[%s244 + $0x38] sm:$0xff] %vm2290, %v2191
      %2299 = vst.msk [vmem:[%s244 + $0x40] sm:$0xff] %vm2290, %v2196
      %2300 = vst.msk [vmem:[%s244 + $0x48] sm:$0xff] %vm2290, %v2199
      %2301 = vst.msk [vmem:[%s244 + $0x50] sm:$0xff] %vm2290, %v2204
      %2302 = vst.msk [vmem:[%s244 + $0x58] sm:$0xff] %vm2290, %v2207
      %2303 = vst.msk [vmem:[%s244 + $0x60] sm:$0xff] %vm2290, %v2212
      %2304 = vst.msk [vmem:[%s244 + $0x68] sm:$0xff] %vm2290, %v2215
      %2305 = vst.msk [vmem:[%s244 + $0x70] sm:$0xff] %vm2290, %v2220
      %2306 = vst.msk [vmem:[%s244 + $0x78] sm:$0xff] %vm2290, %v2223
      %2307 = vst.msk [vmem:[%s244 + $0x80] sm:$0xff] %vm2290, %v2228
      %2308 = vst.msk [vmem:[%s244 + $0x88] sm:$0xff] %vm2290, %v2231
      %2309 = vst.msk [vmem:[%s244 + $0x90] sm:$0xff] %vm2290, %v2236
      %2310 = vst.msk [vmem:[%s244 + $0x98] sm:$0xff] %vm2290, %v2239
      %2311 = vst.msk [vmem:[%s244 + $0xa0] sm:$0xff] %vm2290, %v2244
      %2312 = vst.msk [vmem:[%s244 + $0xa8] sm:$0xff] %vm2290, %v2247
      %2313 = vst.msk [vmem:[%s244 + $0xb0] sm:$0xff] %vm2290, %v2252
      %2314 = vst.msk [vmem:[%s244 + $0xb8] sm:$0xff] %vm2290, %v2255
      %2315 = vst.msk [vmem:[%s244 + $0xc0] sm:$0xff] %vm2290, %v2260
      %2316 = vst.msk [vmem:[%s244 + $0xc8] sm:$0xff] %vm2290, %v2263
      %2317 = vst.msk [vmem:[%s244 + $0xd0] sm:$0xff] %vm2290, %v2268
      %2318 = vst.msk [vmem:[%s244 + $0xd8] sm:$0xff] %vm2290, %v2271
      %2319 = vst.msk [vmem:[%s244 + $0xe0] sm:$0xff] %vm2290, %v2276
      %2320 = vst.msk [vmem:[%s244 + $0xe8] sm:$0xff] %vm2290, %v2279
      %2321 = vst.msk [vmem:[%s244 + $0xf0] sm:$0xff] %vm2290, %v2284
      %2322 = vst.msk [vmem:[%s244 + $0xf8] sm:$0xff] %vm2290, %v2287
      %v2323 = vld [vmem:[%s239] sm:$0xff]
      %v2324 = vld [vmem:[%s239 + $0x8] sm:$0xff]
      %v2325 = vld [vmem:[%s239 + $0x10] sm:$0xff]
      %v2326 = vld [vmem:[%s239 + $0x18] sm:$0xff]
      %v2327 = vld [vmem:[%s239 + $0x20] sm:$0xff]
      %v2328 = vld [vmem:[%s239 + $0x28] sm:$0xff]
      %v2329 = vld [vmem:[%s239 + $0x30] sm:$0xff]
      %v2330 = vld [vmem:[%s239 + $0x38] sm:$0xff]
      %v2331 = vld [vmem:[%s239 + $0x40] sm:$0xff]
      %v2332 = vld [vmem:[%s239 + $0x48] sm:$0xff]
      %v2333 = vld [vmem:[%s239 + $0x50] sm:$0xff]
      %v2334 = vld [vmem:[%s239 + $0x58] sm:$0xff]
      %v2335 = vld [vmem:[%s239 + $0x60] sm:$0xff]
      %v2336 = vld [vmem:[%s239 + $0x68] sm:$0xff]
      %v2337 = vld [vmem:[%s239 + $0x70] sm:$0xff]
      %v2338 = vld [vmem:[%s239 + $0x78] sm:$0xff]
      %v2339 = vld [vmem:[%s239 + $0x80] sm:$0xff]
      %v2340 = vld [vmem:[%s239 + $0x88] sm:$0xff]
      %v2341 = vld [vmem:[%s239 + $0x90] sm:$0xff]
      %v2342 = vld [vmem:[%s239 + $0x98] sm:$0xff]
      %v2343 = vld [vmem:[%s239 + $0xa0] sm:$0xff]
      %v2344 = vld [vmem:[%s239 + $0xa8] sm:$0xff]
      %v2345 = vld [vmem:[%s239 + $0xb0] sm:$0xff]
      %v2346 = vld [vmem:[%s239 + $0xb8] sm:$0xff]
      %v2347 = vld [vmem:[%s239 + $0xc0] sm:$0xff]
      %v2348 = vld [vmem:[%s239 + $0xc8] sm:$0xff]
      %v2349 = vld [vmem:[%s239 + $0xd0] sm:$0xff]
      %v2350 = vld [vmem:[%s239 + $0xd8] sm:$0xff]
      %v2351 = vld [vmem:[%s239 + $0xe0] sm:$0xff]
      %v2352 = vld [vmem:[%s239 + $0xe8] sm:$0xff]
      %v2353 = vld [vmem:[%s239 + $0xf0] sm:$0xff]
      %v2354 = vld [vmem:[%s239 + $0xf8] sm:$0xff]
      %2387 = vrot.lane.b32.xlu0 %v2323, 8
      %v2388 = vpop.permute.xlu0 %2387
      %2389 = vrot.lane.b32.xlu0 %v2324, 8
      %v2390 = vpop.permute.xlu0 %2389
      %2391 = vrot.lane.b32.xlu0 %v2325, 8
      %v2392 = vpop.permute.xlu0 %2391
      %2393 = vrot.lane.b32.xlu0 %v2326, 8
      %v2394 = vpop.permute.xlu0 %2393
      %2395 = vrot.lane.b32.xlu0 %v2327, 8
      %v2396 = vpop.permute.xlu0 %2395
      %2397 = vrot.lane.b32.xlu0 %v2328, 8
      %v2398 = vpop.permute.xlu0 %2397
      %2399 = vrot.lane.b32.xlu0 %v2329, 8
      %v2400 = vpop.permute.xlu0 %2399
      %2401 = vrot.lane.b32.xlu0 %v2330, 8
      %v2402 = vpop.permute.xlu0 %2401
      %2403 = vrot.lane.b32.xlu0 %v2331, 8
      %v2404 = vpop.permute.xlu0 %2403
      %2405 = vrot.lane.b32.xlu0 %v2332, 8
      %v2406 = vpop.permute.xlu0 %2405
      %2407 = vrot.lane.b32.xlu0 %v2333, 8
      %v2408 = vpop.permute.xlu0 %2407
      %2409 = vrot.lane.b32.xlu0 %v2334, 8
      %v2410 = vpop.permute.xlu0 %2409
      %2411 = vrot.lane.b32.xlu0 %v2335, 8
      %v2412 = vpop.permute.xlu0 %2411
      %2413 = vrot.lane.b32.xlu0 %v2336, 8
      %v2414 = vpop.permute.xlu0 %2413
      %2415 = vrot.lane.b32.xlu0 %v2337, 8
      %v2416 = vpop.permute.xlu0 %2415
      %2417 = vrot.lane.b32.xlu0 %v2338, 8
      %v2418 = vpop.permute.xlu0 %2417
      %2419 = vrot.lane.b32.xlu0 %v2339, 8
      %v2420 = vpop.permute.xlu0 %2419
      %2421 = vrot.lane.b32.xlu0 %v2340, 8
      %v2422 = vpop.permute.xlu0 %2421
      %2423 = vrot.lane.b32.xlu0 %v2341, 8
      %v2424 = vpop.permute.xlu0 %2423
      %2425 = vrot.lane.b32.xlu0 %v2342, 8
      %v2426 = vpop.permute.xlu0 %2425
      %2427 = vrot.lane.b32.xlu0 %v2343, 8
      %v2428 = vpop.permute.xlu0 %2427
      %2429 = vrot.lane.b32.xlu0 %v2344, 8
      %v2430 = vpop.permute.xlu0 %2429
      %2431 = vrot.lane.b32.xlu0 %v2345, 8
      %v2432 = vpop.permute.xlu0 %2431
      %2433 = vrot.lane.b32.xlu0 %v2346, 8
      %v2434 = vpop.permute.xlu0 %2433
      %2435 = vrot.lane.b32.xlu0 %v2347, 8
      %v2436 = vpop.permute.xlu0 %2435
      %2437 = vrot.lane.b32.xlu0 %v2348, 8
      %v2438 = vpop.permute.xlu0 %2437
      %2439 = vrot.lane.b32.xlu0 %v2349, 8
      %v2440 = vpop.permute.xlu0 %2439
      %2441 = vrot.lane.b32.xlu0 %v2350, 8
      %v2442 = vpop.permute.xlu0 %2441
      %2443 = vrot.lane.b32.xlu0 %v2351, 8
      %v2444 = vpop.permute.xlu0 %2443
      %2445 = vrot.lane.b32.xlu0 %v2352, 8
      %v2446 = vpop.permute.xlu0 %2445
      %2447 = vrot.lane.b32.xlu0 %v2353, 8
      %v2448 = vpop.permute.xlu0 %2447
      %2449 = vrot.lane.b32.xlu0 %v2354, 8
      %v2450 = vpop.permute.xlu0 %2449
      %vm2483 = vcmask 97344
      %2484 = vst.msk [vmem:[%s244] sm:$0xff] %vm2483, %v2388
      %2485 = vst.msk [vmem:[%s244 + $0x8] sm:$0xff] %vm2483, %v2390
      %2486 = vst.msk [vmem:[%s244 + $0x10] sm:$0xff] %vm2483, %v2392
      %2487 = vst.msk [vmem:[%s244 + $0x18] sm:$0xff] %vm2483, %v2394
      %2488 = vst.msk [vmem:[%s244 + $0x20] sm:$0xff] %vm2483, %v2396
      %2489 = vst.msk [vmem:[%s244 + $0x28] sm:$0xff] %vm2483, %v2398
      %2490 = vst.msk [vmem:[%s244 + $0x30] sm:$0xff] %vm2483, %v2400
      %2491 = vst.msk [vmem:[%s244 + $0x38] sm:$0xff] %vm2483, %v2402
      %2492 = vst.msk [vmem:[%s244 + $0x40] sm:$0xff] %vm2483, %v2404
      %2493 = vst.msk [vmem:[%s244 + $0x48] sm:$0xff] %vm2483, %v2406
      %2494 = vst.msk [vmem:[%s244 + $0x50] sm:$0xff] %vm2483, %v2408
      %2495 = vst.msk [vmem:[%s244 + $0x58] sm:$0xff] %vm2483, %v2410
      %2496 = vst.msk [vmem:[%s244 + $0x60] sm:$0xff] %vm2483, %v2412
      %2497 = vst.msk [vmem:[%s244 + $0x68] sm:$0xff] %vm2483, %v2414
      %2498 = vst.msk [vmem:[%s244 + $0x70] sm:$0xff] %vm2483, %v2416
      %2499 = vst.msk [vmem:[%s244 + $0x78] sm:$0xff] %vm2483, %v2418
      %2500 = vst.msk [vmem:[%s244 + $0x80] sm:$0xff] %vm2483, %v2420
      %2501 = vst.msk [vmem:[%s244 + $0x88] sm:$0xff] %vm2483, %v2422
      %2502 = vst.msk [vmem:[%s244 + $0x90] sm:$0xff] %vm2483, %v2424
      %2503 = vst.msk [vmem:[%s244 + $0x98] sm:$0xff] %vm2483, %v2426
      %2504 = vst.msk [vmem:[%s244 + $0xa0] sm:$0xff] %vm2483, %v2428
      %2505 = vst.msk [vmem:[%s244 + $0xa8] sm:$0xff] %vm2483, %v2430
      %2506 = vst.msk [vmem:[%s244 + $0xb0] sm:$0xff] %vm2483, %v2432
      %2507 = vst.msk [vmem:[%s244 + $0xb8] sm:$0xff] %vm2483, %v2434
      %2508 = vst.msk [vmem:[%s244 + $0xc0] sm:$0xff] %vm2483, %v2436
      %2509 = vst.msk [vmem:[%s244 + $0xc8] sm:$0xff] %vm2483, %v2438
      %2510 = vst.msk [vmem:[%s244 + $0xd0] sm:$0xff] %vm2483, %v2440
      %2511 = vst.msk [vmem:[%s244 + $0xd8] sm:$0xff] %vm2483, %v2442
      %2512 = vst.msk [vmem:[%s244 + $0xe0] sm:$0xff] %vm2483, %v2444
      %2513 = vst.msk [vmem:[%s244 + $0xe8] sm:$0xff] %vm2483, %v2446
      %2514 = vst.msk [vmem:[%s244 + $0xf0] sm:$0xff] %vm2483, %v2448
      %2515 = vst.msk [vmem:[%s244 + $0xf8] sm:$0xff] %vm2483, %v2450
      %p2516 = scmp.lt.s32.totalorder %s16, 1
      %s2517 = scalar_select %p2516, %s16, 1
      %s2518 = smul.addr %s2517, 32
      %s2519 = smul.addr %s2518, 8
      %s2520 = scalar_lea.vmem %s5, %s2519
      // Predicated region
      $region41: #{bottleneck_forward.5} parent=39 // pred_check
        %p2521 = pneg %p149
      $region42: #{bottleneck_forward.5} parent=39 // pred_check_branch
        %2523 = sbr.rel (%p2521) target = $region44
      $region43: #{bottleneck_forward.5} parent=39 // pred_region
        _
      $region44: #{bottleneck_forward.5} parent=39 // pred_fallthru
        _
    $region40: #{bottleneck_forward.5} parent=5 // pred_fallthru
      _
    %p2524 = scmp.le.s32.totalorder 2, %s11
    // Predicated region
    $region45: #{bottleneck_forward.5} parent=5 // pred_check
      %p2525 = pneg %p2524
    $region46: #{bottleneck_forward.5} parent=5 // pred_check_branch
      %2527 = sbr.rel (%p2525) target = $region48
    $region47: #{bottleneck_forward.5} parent=5 // pred_region
      %s2528 = ssub.s32 %s11, 2
      // Predicated region
      $region49: #{bottleneck_forward.5} parent=47 // pred_check
        %p2529 = pneg %p155
      $region50: #{bottleneck_forward.5} parent=47 // pred_check_branch
        %2531 = sbr.rel (%p2529) target = $region52
      $region51: #{bottleneck_forward.5} parent=47 // pred_region
        %p2532 = scmp.lt.s32.totalorder %s17, 1
        %s2533 = scalar_select %p2532, %s17, 1
        %s2534 = smul.addr %s2533, 32
        %s2535 = smul.addr %s2534, 8
        %s2536 = scalar_lea.vmem %s5, %s2535
      $region52: #{bottleneck_forward.5} parent=47 // pred_fallthru
        _
    $region48: #{bottleneck_forward.5} parent=5 // pred_fallthru
      _
  $region6: #{bottleneck_forward.5} parent=0 // loop_footer
    %s15 = sadd.s32 1, %s11
  $region7: #{bottleneck_forward.5} parent=0 // loop_footer_branch
    %10 = sbr.rel target = $region3
  $region8: #{bottleneck_forward.5} parent=0 // loop_exit
    _

</llo_original>
